<compile_context>
chip_gen: v7x
topology: tpu7x:2x2x1
jax: 0.10.0
libtpu: 0.0.40
codegen_flags: <defaults>
</compile_context>

<pallas_src>
import jax
import jax.numpy as jnp
from jax.experimental import pallas as pl
from jax.experimental.pallas import tpu as pltpu

# Layer dims of the PyTorch module.
DIMS = [1024, 512, 256, 128, 64, 32, 5]
LANE = 128          # every layer in/out width is padded up to >= 128 lanes
DEFAULT_TB = 512    # requested batch tile (rows per grid step)


def _round_up(n, m):
    return ((n + m - 1) // m) * m


def _padded_dims():
    return [max(d, LANE) for d in DIMS]


def mlp_kernel(x_ref,
               w1_ref, b1_ref,
               w2_ref, b2_ref,
               w3_ref, b3_ref,
               w4_ref, b4_ref,
               w5_ref, b5_ref,
               w6_ref, b6_ref,
               o_ref):
    h = x_ref[...]  # (TB, 1024) bf16 — already cast in the wrapper

    # Hidden layers: Linear -> ReLU (Dropout identity in eval mode).
    # bf16 operands on the MXU, f32 accumulation, f32 bias-add/ReLU epilogue
    # (safe on v5e's f32-only VPU), then a single bf16 cast for the next dot.
    for w_ref, b_ref in ((w1_ref, b1_ref), (w2_ref, b2_ref), (w3_ref, b3_ref),
                         (w4_ref, b4_ref), (w5_ref, b5_ref)):
        acc = jnp.dot(h, w_ref[...], preferred_element_type=jnp.float32)
        h = jnp.maximum(acc + b_ref[...], 0.0).astype(jnp.bfloat16)

    # Final Linear(32, 5), zero-padded to a lane-dense 128-wide output slab.
    out = jnp.dot(h, w6_ref[...], preferred_element_type=jnp.float32) + b6_ref[...]
    o_ref[...] = out.astype(o_ref.dtype)  # bf16 store (halves output writeback)


def init_params(key):
    """Deterministic init matching the nn.Linear shapes (stored transposed as
    [in, out] for x @ W). Kept in f32 — the 'model' parameters."""
    params = []
    for i in range(len(DIMS) - 1):
        fan_in, fan_out = DIMS[i], DIMS[i + 1]
        key, kw, kb = jax.random.split(key, 3)
        bound = 1.0 / jnp.sqrt(fan_in)
        w = jax.random.uniform(kw, (fan_in, fan_out), jnp.float32, -bound, bound)
        b = jax.random.uniform(kb, (fan_out,), jnp.float32, -bound, bound)
        params.append((w, b))
    return params


def prepare_params(params):
    """One-time param massaging, hoisted out of the forward hot path.

    - Weights -> bf16, zero-padded so every in/out width is >= 128 lanes
      (128x64 -> 128x128, 64x32 -> 128x128, 32x5 -> 128x128).
    - Biases  -> f32 rows of shape (1, out_pad), zero-padded to match.
    Zero padding propagates through ReLU(0 + 0) = 0, so results are unchanged.
    """
    pdims = _padded_dims()
    prepped = []
    for li, (w, b) in enumerate(params):
        k, n = w.shape
        k_pad, n_pad = pdims[li], pdims[li + 1]
        w_p = jnp.pad(w.astype(jnp.bfloat16), ((0, k_pad - k), (0, n_pad - n)))
        b_p = jnp.pad(b.astype(jnp.float32).reshape(1, -1),
                      ((0, 0), (0, n_pad - n)))
        prepped.append((w_p, b_p))
    return prepped


def _choose_tb(batch, tb_req=DEFAULT_TB):
    """Batch tile: as large as requested (amortize per-step overhead), always a
    multiple of 8, but small enough that the grid has >= 2 steps so both of
    v7x's TensorCores get work (no-op on single-TC v5e/v6e)."""
    tb = min(tb_req, _round_up(batch, 8))
    if batch > 16:
        tb = min(tb, _round_up((batch + 1) // 2, 8))
    return max(8, _round_up(tb, 8))


def mlp_forward(x, prepped_params, tb=DEFAULT_TB):
    """x: [B, 1024] float. prepped_params: output of prepare_params(). -> [B, 5] f32."""
    B = x.shape[0]
    tb = _choose_tb(B, tb)
    B_pad = _round_up(B, tb)

    x = x.astype(jnp.bfloat16)            # halve the dominant HBM stream
    if B_pad != B:
        x = jnp.pad(x, ((0, B_pad - B), (0, 0)))
    grid = (B_pad // tb,)

    pdims = _padded_dims()
    flat_inputs = [x]
    in_specs = [pl.BlockSpec((tb, DIMS[0]), lambda i: (i, 0))]
    for w, b in prepped_params:
        flat_inputs.append(w)
        flat_inputs.append(b)
        # Constant index_map -> weights/biases DMA'd once, VMEM-resident.
        in_specs.append(pl.BlockSpec(w.shape, lambda i: (0, 0)))
        in_specs.append(pl.BlockSpec(b.shape, lambda i: (0, 0)))

    out = pl.pallas_call(
        mlp_kernel,
        out_shape=jax.ShapeDtypeStruct((B_pad, pdims[-1]), jnp.bfloat16),
        grid=grid,
        in_specs=in_specs,
        out_specs=pl.BlockSpec((tb, pdims[-1]), lambda i: (i, 0)),
        compiler_params=pltpu.CompilerParams(
            dimension_semantics=("parallel",)),
    )(*flat_inputs)

    # Drop pad rows / pad lanes; return f32 like the PyTorch module.
    return out[:B, :DIMS[-1]].astype(jnp.float32)


def mlp_reference(x, params):
    """Pure-JAX reference with matching precision (bf16 operands, f32 acc)."""
    h = x
    n = len(params)
    for i, (w, b) in enumerate(params):
        h = jnp.dot(h.astype(jnp.bfloat16), w.astype(jnp.bfloat16),
                    preferred_element_type=jnp.float32) + b
        if i < n - 1:
            h = jnp.maximum(h, 0.0)
    return h


if __name__ == "__main__":
    key = jax.random.PRNGKey(0)
    key, kx = jax.random.split(key)

    B = 256  # -> two 128-row grid steps: exercises pipelining, resident weights,
             #    and v7x 2-core sharding of the "parallel" grid axis.
    x = jax.random.normal(kx, (B, DIMS[0]), jnp.float32)
    params = init_params(key)
    prepped = prepare_params(params)   # one-time: bf16 + lane padding

    out = jax.block_until_ready(mlp_forward(x, prepped))

    ref = mlp_reference(x, params)
    assert out.shape == (B, DIMS[-1]), out.shape
    max_err = float(jnp.max(jnp.abs(out - ref)))
    assert jnp.allclose(out, ref, atol=2e-2, rtol=2e-2), max_err

    print("KERNEL_OK")
</pallas_src>

<mosaic_0001>
module attributes {stable_mosaic.version = 11 : i64} {
  func.func @mlp_kernel(%arg0: i32, %arg1: memref<128x1024xbf16, #tpu.memory_space<vmem>>, %arg2: memref<1024x512xbf16, #tpu.memory_space<vmem>>, %arg3: memref<1x512xf32, #tpu.memory_space<vmem>>, %arg4: memref<512x256xbf16, #tpu.memory_space<vmem>>, %arg5: memref<1x256xf32, #tpu.memory_space<vmem>>, %arg6: memref<256x128xbf16, #tpu.memory_space<vmem>>, %arg7: memref<1x128xf32, #tpu.memory_space<vmem>>, %arg8: memref<128x128xbf16, #tpu.memory_space<vmem>>, %arg9: memref<1x128xf32, #tpu.memory_space<vmem>>, %arg10: memref<128x128xbf16, #tpu.memory_space<vmem>>, %arg11: memref<1x128xf32, #tpu.memory_space<vmem>>, %arg12: memref<128x128xbf16, #tpu.memory_space<vmem>>, %arg13: memref<1x128xf32, #tpu.memory_space<vmem>>, %arg14: memref<128x128xbf16, #tpu.memory_space<vmem>>) attributes {dimension_semantics = [#tpu.dimension_semantics<parallel>], iteration_bounds = array<i64: 2>, scalar_prefetch = 0 : i64, scratch_operands = 0 : i64, tpu.core_type = #tpu.core_type<tc>, window_params = [{transform_indices = @transform_0, window_bounds = array<i64: 128, 1024>}, {pipeline_mode = #tpu.pipeline_mode<synchronous>, transform_indices = @transform_1, window_bounds = array<i64: 1024, 512>}, {pipeline_mode = #tpu.pipeline_mode<synchronous>, transform_indices = @transform_2, window_bounds = array<i64: 1, 512>}, {pipeline_mode = #tpu.pipeline_mode<synchronous>, transform_indices = @transform_3, window_bounds = array<i64: 512, 256>}, {pipeline_mode = #tpu.pipeline_mode<synchronous>, transform_indices = @transform_4, window_bounds = array<i64: 1, 256>}, {pipeline_mode = #tpu.pipeline_mode<synchronous>, transform_indices = @transform_5, window_bounds = array<i64: 256, 128>}, {pipeline_mode = #tpu.pipeline_mode<synchronous>, transform_indices = @transform_6, window_bounds = array<i64: 1, 128>}, {pipeline_mode = #tpu.pipeline_mode<synchronous>, transform_indices = @transform_7, window_bounds = array<i64: 128, 128>}, {pipeline_mode = #tpu.pipeline_mode<synchronous>, transform_indices = @transform_8, window_bounds = array<i64: 1, 128>}, {pipeline_mode = #tpu.pipeline_mode<synchronous>, transform_indices = @transform_9, window_bounds = array<i64: 128, 128>}, {pipeline_mode = #tpu.pipeline_mode<synchronous>, transform_indices = @transform_10, window_bounds = array<i64: 1, 128>}, {pipeline_mode = #tpu.pipeline_mode<synchronous>, transform_indices = @transform_11, window_bounds = array<i64: 128, 128>}, {pipeline_mode = #tpu.pipeline_mode<synchronous>, transform_indices = @transform_12, window_bounds = array<i64: 1, 128>}, {transform_indices = @transform_13, window_bounds = array<i64: 128, 128>}]} {
    %c0 = arith.constant 0 : index
    %c0_0 = arith.constant 0 : index
    %0 = vector.load %arg1[%c0, %c0_0] : memref<128x1024xbf16, #tpu.memory_space<vmem>>, vector<128x1024xbf16>
    %c0_1 = arith.constant 0 : index
    %c0_2 = arith.constant 0 : index
    %1 = vector.load %arg2[%c0_1, %c0_2] : memref<1024x512xbf16, #tpu.memory_space<vmem>>, vector<1024x512xbf16>
    %cst = arith.constant dense<0.000000e+00> : vector<128x512xf32>
    %2 = tpu.matmul %0, %1, %cst {dimension_numbers = #tpu.dot_dimension_numbers<[1], [0], [0], [1], [0, 0, 1, 1], [], []>} : vector<128x1024xbf16>, vector<1024x512xbf16>, vector<128x512xf32> -> vector<128x512xf32>
    %c0_3 = arith.constant 0 : index
    %c0_4 = arith.constant 0 : index
    %3 = vector.load %arg3[%c0_3, %c0_4] : memref<1x512xf32, #tpu.memory_space<vmem>>, vector<1x512xf32>
    %4 = vector.broadcast %3 : vector<1x512xf32> to vector<128x512xf32>
    %5 = arith.addf %2, %4 : vector<128x512xf32>
    %cst_5 = arith.constant 0.000000e+00 : f32
    %6 = vector.broadcast %cst_5 : f32 to vector<128x512xf32>
    %7 = arith.maximumf %5, %6 : vector<128x512xf32>
    %8 = arith.truncf %7 : vector<128x512xf32> to vector<128x512xbf16>
    %c0_6 = arith.constant 0 : index
    %c0_7 = arith.constant 0 : index
    %9 = vector.load %arg4[%c0_6, %c0_7] : memref<512x256xbf16, #tpu.memory_space<vmem>>, vector<512x256xbf16>
    %cst_8 = arith.constant dense<0.000000e+00> : vector<128x256xf32>
    %10 = tpu.matmul %8, %9, %cst_8 {dimension_numbers = #tpu.dot_dimension_numbers<[1], [0], [0], [1], [0, 0, 1, 1], [], []>} : vector<128x512xbf16>, vector<512x256xbf16>, vector<128x256xf32> -> vector<128x256xf32>
    %c0_9 = arith.constant 0 : index
    %c0_10 = arith.constant 0 : index
    %11 = vector.load %arg5[%c0_9, %c0_10] : memref<1x256xf32, #tpu.memory_space<vmem>>, vector<1x256xf32>
    %12 = vector.broadcast %11 : vector<1x256xf32> to vector<128x256xf32>
    %13 = arith.addf %10, %12 : vector<128x256xf32>
    %cst_11 = arith.constant 0.000000e+00 : f32
    %14 = vector.broadcast %cst_11 : f32 to vector<128x256xf32>
    %15 = arith.maximumf %13, %14 : vector<128x256xf32>
    %16 = arith.truncf %15 : vector<128x256xf32> to vector<128x256xbf16>
    %c0_12 = arith.constant 0 : index
    %c0_13 = arith.constant 0 : index
    %17 = vector.load %arg6[%c0_12, %c0_13] : memref<256x128xbf16, #tpu.memory_space<vmem>>, vector<256x128xbf16>
    %cst_14 = arith.constant dense<0.000000e+00> : vector<128x128xf32>
    %18 = tpu.matmul %16, %17, %cst_14 {dimension_numbers = #tpu.dot_dimension_numbers<[1], [0], [0], [1], [0, 0, 1, 1], [], []>} : vector<128x256xbf16>, vector<256x128xbf16>, vector<128x128xf32> -> vector<128x128xf32>
    %c0_15 = arith.constant 0 : index
    %c0_16 = arith.constant 0 : index
    %19 = vector.load %arg7[%c0_15, %c0_16] : memref<1x128xf32, #tpu.memory_space<vmem>>, vector<1x128xf32>
    %20 = vector.broadcast %19 : vector<1x128xf32> to vector<128x128xf32>
    %21 = arith.addf %18, %20 : vector<128x128xf32>
    %cst_17 = arith.constant 0.000000e+00 : f32
    %22 = vector.broadcast %cst_17 : f32 to vector<128x128xf32>
    %23 = arith.maximumf %21, %22 : vector<128x128xf32>
    %24 = arith.truncf %23 : vector<128x128xf32> to vector<128x128xbf16>
    %c0_18 = arith.constant 0 : index
    %c0_19 = arith.constant 0 : index
    %25 = vector.load %arg8[%c0_18, %c0_19] : memref<128x128xbf16, #tpu.memory_space<vmem>>, vector<128x128xbf16>
    %cst_20 = arith.constant dense<0.000000e+00> : vector<128x128xf32>
    %26 = tpu.matmul %24, %25, %cst_20 {dimension_numbers = #tpu.dot_dimension_numbers<[1], [0], [0], [1], [0, 0, 1, 1], [], []>} : vector<128x128xbf16>, vector<128x128xbf16>, vector<128x128xf32> -> vector<128x128xf32>
    %c0_21 = arith.constant 0 : index
    %c0_22 = arith.constant 0 : index
    %27 = vector.load %arg9[%c0_21, %c0_22] : memref<1x128xf32, #tpu.memory_space<vmem>>, vector<1x128xf32>
    %28 = vector.broadcast %27 : vector<1x128xf32> to vector<128x128xf32>
    %29 = arith.addf %26, %28 : vector<128x128xf32>
    %cst_23 = arith.constant 0.000000e+00 : f32
    %30 = vector.broadcast %cst_23 : f32 to vector<128x128xf32>
    %31 = arith.maximumf %29, %30 : vector<128x128xf32>
    %32 = arith.truncf %31 : vector<128x128xf32> to vector<128x128xbf16>
    %c0_24 = arith.constant 0 : index
    %c0_25 = arith.constant 0 : index
    %33 = vector.load %arg10[%c0_24, %c0_25] : memref<128x128xbf16, #tpu.memory_space<vmem>>, vector<128x128xbf16>
    %cst_26 = arith.constant dense<0.000000e+00> : vector<128x128xf32>
    %34 = tpu.matmul %32, %33, %cst_26 {dimension_numbers = #tpu.dot_dimension_numbers<[1], [0], [0], [1], [0, 0, 1, 1], [], []>} : vector<128x128xbf16>, vector<128x128xbf16>, vector<128x128xf32> -> vector<128x128xf32>
    %c0_27 = arith.constant 0 : index
    %c0_28 = arith.constant 0 : index
    %35 = vector.load %arg11[%c0_27, %c0_28] : memref<1x128xf32, #tpu.memory_space<vmem>>, vector<1x128xf32>
    %36 = vector.broadcast %35 : vector<1x128xf32> to vector<128x128xf32>
    %37 = arith.addf %34, %36 : vector<128x128xf32>
    %cst_29 = arith.constant 0.000000e+00 : f32
    %38 = vector.broadcast %cst_29 : f32 to vector<128x128xf32>
    %39 = arith.maximumf %37, %38 : vector<128x128xf32>
    %40 = arith.truncf %39 : vector<128x128xf32> to vector<128x128xbf16>
    %c0_30 = arith.constant 0 : index
    %c0_31 = arith.constant 0 : index
    %41 = vector.load %arg12[%c0_30, %c0_31] : memref<128x128xbf16, #tpu.memory_space<vmem>>, vector<128x128xbf16>
    %cst_32 = arith.constant dense<0.000000e+00> : vector<128x128xf32>
    %42 = tpu.matmul %40, %41, %cst_32 {dimension_numbers = #tpu.dot_dimension_numbers<[1], [0], [0], [1], [0, 0, 1, 1], [], []>} : vector<128x128xbf16>, vector<128x128xbf16>, vector<128x128xf32> -> vector<128x128xf32>
    %c0_33 = arith.constant 0 : index
    %c0_34 = arith.constant 0 : index
    %43 = vector.load %arg13[%c0_33, %c0_34] : memref<1x128xf32, #tpu.memory_space<vmem>>, vector<1x128xf32>
    %44 = vector.broadcast %43 : vector<1x128xf32> to vector<128x128xf32>
    %45 = arith.addf %42, %44 : vector<128x128xf32>
    %46 = arith.truncf %45 : vector<128x128xf32> to vector<128x128xbf16>
    %c0_35 = arith.constant 0 : index
    %c0_36 = arith.constant 0 : index
    %47 = vector.load %arg14[%c0_35, %c0_36] : memref<128x128xbf16, #tpu.memory_space<vmem>>, vector<128x128xbf16>
    tpu.vector_store %arg14[%c0_35, %c0_36], %46 {strides = array<i32>} : memref<128x128xbf16, #tpu.memory_space<vmem>>, vector<128x128xbf16>,
    return
  }
  func.func @transform_0(%arg0: i32) -> (i32, i32) {
    %c0_i32 = arith.constant 0 : i32
    %c0_i32_0 = arith.constant 0 : i32
    return %arg0, %c0_i32 : i32, i32
  }
  func.func @transform_1(%arg0: i32) -> (i32, i32) {
    %c0_i32 = arith.constant 0 : i32
    %c0_i32_0 = arith.constant 0 : i32
    %c0_i32_1 = arith.constant 0 : i32
    return %c0_i32, %c0_i32_0 : i32, i32
  }
  func.func @transform_2(%arg0: i32) -> (i32, i32) {
    %c0_i32 = arith.constant 0 : i32
    %c0_i32_0 = arith.constant 0 : i32
    %c0_i32_1 = arith.constant 0 : i32
    return %c0_i32, %c0_i32_0 : i32, i32
  }
  func.func @transform_3(%arg0: i32) -> (i32, i32) {
    %c0_i32 = arith.constant 0 : i32
    %c0_i32_0 = arith.constant 0 : i32
    %c0_i32_1 = arith.constant 0 : i32
    return %c0_i32, %c0_i32_0 : i32, i32
  }
  func.func @transform_4(%arg0: i32) -> (i32, i32) {
    %c0_i32 = arith.constant 0 : i32
    %c0_i32_0 = arith.constant 0 : i32
    %c0_i32_1 = arith.constant 0 : i32
    return %c0_i32, %c0_i32_0 : i32, i32
  }
  func.func @transform_5(%arg0: i32) -> (i32, i32) {
    %c0_i32 = arith.constant 0 : i32
    %c0_i32_0 = arith.constant 0 : i32
    %c0_i32_1 = arith.constant 0 : i32
    return %c0_i32, %c0_i32_0 : i32, i32
  }
  func.func @transform_6(%arg0: i32) -> (i32, i32) {
    %c0_i32 = arith.constant 0 : i32
    %c0_i32_0 = arith.constant 0 : i32
    %c0_i32_1 = arith.constant 0 : i32
    return %c0_i32, %c0_i32_0 : i32, i32
  }
  func.func @transform_7(%arg0: i32) -> (i32, i32) {
    %c0_i32 = arith.constant 0 : i32
    %c0_i32_0 = arith.constant 0 : i32
    %c0_i32_1 = arith.constant 0 : i32
    return %c0_i32, %c0_i32_0 : i32, i32
  }
  func.func @transform_8(%arg0: i32) -> (i32, i32) {
    %c0_i32 = arith.constant 0 : i32
    %c0_i32_0 = arith.constant 0 : i32
    %c0_i32_1 = arith.constant 0 : i32
    return %c0_i32, %c0_i32_0 : i32, i32
  }
  func.func @transform_9(%arg0: i32) -> (i32, i32) {
    %c0_i32 = arith.constant 0 : i32
    %c0_i32_0 = arith.constant 0 : i32
    %c0_i32_1 = arith.constant 0 : i32
    return %c0_i32, %c0_i32_0 : i32, i32
  }
  func.func @transform_10(%arg0: i32) -> (i32, i32) {
    %c0_i32 = arith.constant 0 : i32
    %c0_i32_0 = arith.constant 0 : i32
    %c0_i32_1 = arith.constant 0 : i32
    return %c0_i32, %c0_i32_0 : i32, i32
  }
  func.func @transform_11(%arg0: i32) -> (i32, i32) {
    %c0_i32 = arith.constant 0 : i32
    %c0_i32_0 = arith.constant 0 : i32
    %c0_i32_1 = arith.constant 0 : i32
    return %c0_i32, %c0_i32_0 : i32, i32
  }
  func.func @transform_12(%arg0: i32) -> (i32, i32) {
    %c0_i32 = arith.constant 0 : i32
    %c0_i32_0 = arith.constant 0 : i32
    %c0_i32_1 = arith.constant 0 : i32
    return %c0_i32, %c0_i32_0 : i32, i32
  }
  func.func @transform_13(%arg0: i32) -> (i32, i32) {
    %c0_i32 = arith.constant 0 : i32
    %c0_i32_0 = arith.constant 0 : i32
    return %arg0, %c0_i32 : i32, i32
  }
}

</mosaic_0001>

<llo_original>
// kernel: tpu_custom_call.1
$region0: #{tpu_custom_call.1}
  #allocation0 [shape = 'u32[]', space=smem, size = 0x4, offset = 0x4, fixed_abs, tag = 'smem constant byte address 0x4 - core index']
  #allocation1 [shape = 'u32[144,128]{1,0:T(1,128)}', space=vmem, size = 0x12000, scoped, tag = 'internal scratch']
  %s0 = inlined_call_operand.hbm [shape: bf16[256,1024], index: 0, kind: input, shape index: {}]
  %s1 = inlined_call_operand.hbm [shape: bf16[1024,512], index: 1, kind: input, shape index: {}]
  %s2 = inlined_call_operand.vmem [shape: f32[1,512], index: 2, kind: input, shape index: {}]
  %s3 = inlined_call_operand.hbm [shape: bf16[512,256], index: 3, kind: input, shape index: {}]
  %s4 = inlined_call_operand.vmem [shape: f32[1,256], index: 4, kind: input, shape index: {}]
  %s5 = inlined_call_operand.hbm [shape: bf16[256,128], index: 5, kind: input, shape index: {}]
  %s6 = inlined_call_operand.vmem [shape: f32[1,128], index: 6, kind: input, shape index: {}]
  %s7 = inlined_call_operand.hbm [shape: bf16[128,128], index: 7, kind: input, shape index: {}]
  %s8 = inlined_call_operand.vmem [shape: f32[1,128], index: 8, kind: input, shape index: {}]
  %s9 = inlined_call_operand.hbm [shape: bf16[128,128], index: 9, kind: input, shape index: {}]
  %s10 = inlined_call_operand.vmem [shape: f32[1,128], index: 10, kind: input, shape index: {}]
  %s11 = inlined_call_operand.hbm [shape: bf16[128,128], index: 11, kind: input, shape index: {}]
  %s12 = inlined_call_operand.vmem [shape: f32[1,128], index: 12, kind: input, shape index: {}]
  %s13 = inlined_call_operand.hbm [shape: bf16[256,128], index: 13, kind: output, shape index: {}]
  %s14 = sld [smem:[#allocation0]]
  $region113: #{tpu_custom_call.1} parent=0
    _
  %s16 = ssub.s32 1, %s14
  %s17 = scalar_select 0, %s16, %s14
  $region1: #{tpu_custom_call.1} parent=0
    #allocation2 [shape = 'u8[524288]{0}', space=vmem, size = 0x80000, scoped, tag = 'input window, operand 0']
    #allocation3 [shape = 's32[2]{0}', space=sflag, size = 0x8, scoped, tag = 'scoped memory for tpu_custom_call.1']
    #allocation4 [shape = 's32[2]{0}', space=sflag, size = 0x8, scoped, tag = 'scoped memory for tpu_custom_call.1']
    #allocation5 [shape = 'u8[1048576]{0}', space=vmem, size = 0x100000, scoped, tag = 'input window, operand 1, single buffered']
    #allocation6 [shape = 's32[1]{0}', space=sflag, size = 0x4, scoped, tag = 'scoped memory for tpu_custom_call.1']
    #allocation7 [shape = 'u8[262144]{0}', space=vmem, size = 0x40000, scoped, tag = 'input window, operand 3, single buffered']
    #allocation8 [shape = 'u8[65536]{0}', space=vmem, size = 0x10000, scoped, tag = 'input window, operand 5, single buffered']
    #allocation9 [shape = 's32[1]{0}', space=sflag, size = 0x4, scoped, tag = 'scoped memory for tpu_custom_call.1']
    #allocation10 [shape = 'u8[32768]{0}', space=vmem, size = 0x8000, scoped, tag = 'input window, operand 7, single buffered']
    #allocation11 [shape = 'u8[32768]{0}', space=vmem, size = 0x8000, scoped, tag = 'input window, operand 9, single buffered']
    #allocation12 [shape = 's32[1]{0}', space=sflag, size = 0x4, scoped, tag = 'scoped memory for tpu_custom_call.1']
    #allocation13 [shape = 'u8[32768]{0}', space=vmem, size = 0x8000, scoped, tag = 'input window, operand 11, single buffered']
    #allocation14 [shape = 'u8[65536]{0}', space=vmem, size = 0x10000, scoped, tag = 'output window, operand 0']
    %18 = vsyncpa [#allocation3], 0
    %s19 = scalar_lea.sflag [#allocation3], 1
    %20 = vsyncpa %s19, 0
    %21 = vsyncpa [#allocation6], 0
    %22 = vsyncpa [#allocation9], 0
    %23 = vsyncpa [#allocation12], 0
    %24 = vsyncpa [#allocation4], 0
    %s25 = scalar_lea.sflag [#allocation4], 1
    %26 = vsyncpa %s25, 0
    loop: start=0, step=1, limit=4
    $region2: #{tpu_custom_call.1} parent=1 // loop_pre_header
      _
    $region3: #{tpu_custom_call.1} parent=1 // loop_header
      %s28 = sphi 0, %s32
      %p29 = scmp.ge.s32.totalorder %s28, 4
      %s38 = sphi 0, %s40
      %s41 = sphi 0, %s38
      %s42 = sphi 0, %s41
      %s58 = sphi 0, %s42
      %s62 = sphi 0, %s62
      %s64 = sphi 0, %s62
      %s65 = sphi 0, %s64
      %s79 = sphi 0, %s65
      %s83 = sphi 0, %s83
      %s85 = sphi 0, %s83
      %s86 = sphi 0, %s85
      %s100 = sphi 0, %s86
      %s104 = sphi 0, %s104
      %s106 = sphi 0, %s104
      %s107 = sphi 0, %s106
      %s121 = sphi 0, %s107
      %s125 = sphi 0, %s125
      %s127 = sphi 0, %s125
      %s128 = sphi 0, %s127
      %s142 = sphi 0, %s128
      %s146 = sphi 0, %s146
      %s148 = sphi 0, %s146
      %s149 = sphi 0, %s148
      %s163 = sphi 0, %s149
      %s167 = sphi 0, %s167
      %s169 = sphi 0, %s167
      %s170 = sphi 0, %s169
      %s184 = sphi 0, %s170
      %s188 = sphi 0, %s188
      %s190 = sphi 0, %s188
      %s191 = sphi 0, %s190
      %s205 = sphi 0, %s191
      %s209 = sphi 0, %s209
      %s211 = sphi 0, %s209
      %s212 = sphi 0, %s211
      %s226 = sphi 0, %s212
      %s230 = sphi 0, %s230
      %s232 = sphi 0, %s230
      %s233 = sphi 0, %s232
      %s247 = sphi 0, %s233
      %s251 = sphi 0, %s251
      %s253 = sphi 0, %s251
      %s254 = sphi 0, %s253
      %s268 = sphi 0, %s254
      %s272 = sphi 0, %s272
      %s274 = sphi 0, %s272
      %s275 = sphi 0, %s274
      %s289 = sphi 0, %s275
      %s293 = sphi 0, %s293
      %s295 = sphi 0, %s293
      %s296 = sphi 0, %s295
      %s310 = sphi 0, %s296
      %s316 = sphi 0, %s318
      %s319 = sphi 0, %s316
      %s320 = sphi 0, %s319
      %s336 = sphi 0, %s320
    $region4: #{tpu_custom_call.1} parent=1 // loop_header_branch
      %31 = sbr.rel (%p29) target = $region8
    $region5: #{tpu_custom_call.1} parent=1 // loop_body
      %s33 = ssub.s32 %s28, 1
      %s34 = ssub.s32 %s28, 2
      %s35 = sadd.s32 %s28, 1
      %s36 = ssub.s32 %s28, %s35
      %p37 = scmp.eq.s32.totalorder %s36, 0
      %s39 = sadd.s32 %s38, 1
      %s40 = scalar_select %p37, %s38, %s39
      %p43 = pneg %p37
      %p44 = scmp.eq.s32.totalorder %s28, 1
      %p45 = por %p43, %p44
      %p46 = scmp.ne.s32.totalorder %s38, %s41
      %p47 = scmp.eq.s32.totalorder %s28, 0
      %p48 = por %p46, %p47
      %p49 = scmp.ne.s32.totalorder %s38, %s41
      %p50 = scmp.eq.s32.totalorder %s33, 1
      %p51 = por %p49, %p50
      %p52 = scmp.ne.s32.totalorder %s41, %s42
      %p53 = scmp.eq.s32.totalorder %s33, 0
      %p54 = por %p52, %p53
      %p55 = scmp.ne.s32.totalorder %s41, %s42
      %p56 = scmp.eq.s32.totalorder %s34, 1
      %p57 = por %p55, %p56
      %p59 = scmp.ne.s32.totalorder %s42, %s58
      %p60 = scmp.eq.s32.totalorder %s34, 0
      %p61 = por %p59, %p60
      %s63 = sadd.s32 %s62, 1
      %p66 = scmp.eq.s32.totalorder %s28, 1
      %p67 = scmp.ne.s32.totalorder %s62, %s64
      %p68 = scmp.eq.s32.totalorder %s28, 0
      %p69 = por %p67, %p68
      %p70 = scmp.ne.s32.totalorder %s62, %s64
      %p71 = scmp.eq.s32.totalorder %s33, 1
      %p72 = por %p70, %p71
      %p73 = scmp.ne.s32.totalorder %s64, %s65
      %p74 = scmp.eq.s32.totalorder %s33, 0
      %p75 = por %p73, %p74
      %p76 = scmp.ne.s32.totalorder %s64, %s65
      %p77 = scmp.eq.s32.totalorder %s34, 1
      %p78 = por %p76, %p77
      %p80 = scmp.ne.s32.totalorder %s65, %s79
      %p81 = scmp.eq.s32.totalorder %s34, 0
      %p82 = por %p80, %p81
      %s84 = sadd.s32 %s83, 1
      %p87 = scmp.eq.s32.totalorder %s28, 1
      %p88 = scmp.ne.s32.totalorder %s83, %s85
      %p89 = scmp.eq.s32.totalorder %s28, 0
      %p90 = por %p88, %p89
      %p91 = scmp.ne.s32.totalorder %s83, %s85
      %p92 = scmp.eq.s32.totalorder %s33, 1
      %p93 = por %p91, %p92
      %p94 = scmp.ne.s32.totalorder %s85, %s86
      %p95 = scmp.eq.s32.totalorder %s33, 0
      %p96 = por %p94, %p95
      %p97 = scmp.ne.s32.totalorder %s85, %s86
      %p98 = scmp.eq.s32.totalorder %s34, 1
      %p99 = por %p97, %p98
      %p101 = scmp.ne.s32.totalorder %s86, %s100
      %p102 = scmp.eq.s32.totalorder %s34, 0
      %p103 = por %p101, %p102
      %s105 = sadd.s32 %s104, 1
      %p108 = scmp.eq.s32.totalorder %s28, 1
      %p109 = scmp.ne.s32.totalorder %s104, %s106
      %p110 = scmp.eq.s32.totalorder %s28, 0
      %p111 = por %p109, %p110
      %p112 = scmp.ne.s32.totalorder %s104, %s106
      %p113 = scmp.eq.s32.totalorder %s33, 1
      %p114 = por %p112, %p113
      %p115 = scmp.ne.s32.totalorder %s106, %s107
      %p116 = scmp.eq.s32.totalorder %s33, 0
      %p117 = por %p115, %p116
      %p118 = scmp.ne.s32.totalorder %s106, %s107
      %p119 = scmp.eq.s32.totalorder %s34, 1
      %p120 = por %p118, %p119
      %p122 = scmp.ne.s32.totalorder %s107, %s121
      %p123 = scmp.eq.s32.totalorder %s34, 0
      %p124 = por %p122, %p123
      %s126 = sadd.s32 %s125, 1
      %p129 = scmp.eq.s32.totalorder %s28, 1
      %p130 = scmp.ne.s32.totalorder %s125, %s127
      %p131 = scmp.eq.s32.totalorder %s28, 0
      %p132 = por %p130, %p131
      %p133 = scmp.ne.s32.totalorder %s125, %s127
      %p134 = scmp.eq.s32.totalorder %s33, 1
      %p135 = por %p133, %p134
      %p136 = scmp.ne.s32.totalorder %s127, %s128
      %p137 = scmp.eq.s32.totalorder %s33, 0
      %p138 = por %p136, %p137
      %p139 = scmp.ne.s32.totalorder %s127, %s128
      %p140 = scmp.eq.s32.totalorder %s34, 1
      %p141 = por %p139, %p140
      %p143 = scmp.ne.s32.totalorder %s128, %s142
      %p144 = scmp.eq.s32.totalorder %s34, 0
      %p145 = por %p143, %p144
      %s147 = sadd.s32 %s146, 1
      %p150 = scmp.eq.s32.totalorder %s28, 1
      %p151 = scmp.ne.s32.totalorder %s146, %s148
      %p152 = scmp.eq.s32.totalorder %s28, 0
      %p153 = por %p151, %p152
      %p154 = scmp.ne.s32.totalorder %s146, %s148
      %p155 = scmp.eq.s32.totalorder %s33, 1
      %p156 = por %p154, %p155
      %p157 = scmp.ne.s32.totalorder %s148, %s149
      %p158 = scmp.eq.s32.totalorder %s33, 0
      %p159 = por %p157, %p158
      %p160 = scmp.ne.s32.totalorder %s148, %s149
      %p161 = scmp.eq.s32.totalorder %s34, 1
      %p162 = por %p160, %p161
      %p164 = scmp.ne.s32.totalorder %s149, %s163
      %p165 = scmp.eq.s32.totalorder %s34, 0
      %p166 = por %p164, %p165
      %s168 = sadd.s32 %s167, 1
      %p171 = scmp.eq.s32.totalorder %s28, 1
      %p172 = scmp.ne.s32.totalorder %s167, %s169
      %p173 = scmp.eq.s32.totalorder %s28, 0
      %p174 = por %p172, %p173
      %p175 = scmp.ne.s32.totalorder %s167, %s169
      %p176 = scmp.eq.s32.totalorder %s33, 1
      %p177 = por %p175, %p176
      %p178 = scmp.ne.s32.totalorder %s169, %s170
      %p179 = scmp.eq.s32.totalorder %s33, 0
      %p180 = por %p178, %p179
      %p181 = scmp.ne.s32.totalorder %s169, %s170
      %p182 = scmp.eq.s32.totalorder %s34, 1
      %p183 = por %p181, %p182
      %p185 = scmp.ne.s32.totalorder %s170, %s184
      %p186 = scmp.eq.s32.totalorder %s34, 0
      %p187 = por %p185, %p186
      %s189 = sadd.s32 %s188, 1
      %p192 = scmp.eq.s32.totalorder %s28, 1
      %p193 = scmp.ne.s32.totalorder %s188, %s190
      %p194 = scmp.eq.s32.totalorder %s28, 0
      %p195 = por %p193, %p194
      %p196 = scmp.ne.s32.totalorder %s188, %s190
      %p197 = scmp.eq.s32.totalorder %s33, 1
      %p198 = por %p196, %p197
      %p199 = scmp.ne.s32.totalorder %s190, %s191
      %p200 = scmp.eq.s32.totalorder %s33, 0
      %p201 = por %p199, %p200
      %p202 = scmp.ne.s32.totalorder %s190, %s191
      %p203 = scmp.eq.s32.totalorder %s34, 1
      %p204 = por %p202, %p203
      %p206 = scmp.ne.s32.totalorder %s191, %s205
      %p207 = scmp.eq.s32.totalorder %s34, 0
      %p208 = por %p206, %p207
      %s210 = sadd.s32 %s209, 1
      %p213 = scmp.eq.s32.totalorder %s28, 1
      %p214 = scmp.ne.s32.totalorder %s209, %s211
      %p215 = scmp.eq.s32.totalorder %s28, 0
      %p216 = por %p214, %p215
      %p217 = scmp.ne.s32.totalorder %s209, %s211
      %p218 = scmp.eq.s32.totalorder %s33, 1
      %p219 = por %p217, %p218
      %p220 = scmp.ne.s32.totalorder %s211, %s212
      %p221 = scmp.eq.s32.totalorder %s33, 0
      %p222 = por %p220, %p221
      %p223 = scmp.ne.s32.totalorder %s211, %s212
      %p224 = scmp.eq.s32.totalorder %s34, 1
      %p225 = por %p223, %p224
      %p227 = scmp.ne.s32.totalorder %s212, %s226
      %p228 = scmp.eq.s32.totalorder %s34, 0
      %p229 = por %p227, %p228
      %s231 = sadd.s32 %s230, 1
      %p234 = scmp.eq.s32.totalorder %s28, 1
      %p235 = scmp.ne.s32.totalorder %s230, %s232
      %p236 = scmp.eq.s32.totalorder %s28, 0
      %p237 = por %p235, %p236
      %p238 = scmp.ne.s32.totalorder %s230, %s232
      %p239 = scmp.eq.s32.totalorder %s33, 1
      %p240 = por %p238, %p239
      %p241 = scmp.ne.s32.totalorder %s232, %s233
      %p242 = scmp.eq.s32.totalorder %s33, 0
      %p243 = por %p241, %p242
      %p244 = scmp.ne.s32.totalorder %s232, %s233
      %p245 = scmp.eq.s32.totalorder %s34, 1
      %p246 = por %p244, %p245
      %p248 = scmp.ne.s32.totalorder %s233, %s247
      %p249 = scmp.eq.s32.totalorder %s34, 0
      %p250 = por %p248, %p249
      %s252 = sadd.s32 %s251, 1
      %p255 = scmp.eq.s32.totalorder %s28, 1
      %p256 = scmp.ne.s32.totalorder %s251, %s253
      %p257 = scmp.eq.s32.totalorder %s28, 0
      %p258 = por %p256, %p257
      %p259 = scmp.ne.s32.totalorder %s251, %s253
      %p260 = scmp.eq.s32.totalorder %s33, 1
      %p261 = por %p259, %p260
      %p262 = scmp.ne.s32.totalorder %s253, %s254
      %p263 = scmp.eq.s32.totalorder %s33, 0
      %p264 = por %p262, %p263
      %p265 = scmp.ne.s32.totalorder %s253, %s254
      %p266 = scmp.eq.s32.totalorder %s34, 1
      %p267 = por %p265, %p266
      %p269 = scmp.ne.s32.totalorder %s254, %s268
      %p270 = scmp.eq.s32.totalorder %s34, 0
      %p271 = por %p269, %p270
      %s273 = sadd.s32 %s272, 1
      %p276 = scmp.eq.s32.totalorder %s28, 1
      %p277 = scmp.ne.s32.totalorder %s272, %s274
      %p278 = scmp.eq.s32.totalorder %s28, 0
      %p279 = por %p277, %p278
      %p280 = scmp.ne.s32.totalorder %s272, %s274
      %p281 = scmp.eq.s32.totalorder %s33, 1
      %p282 = por %p280, %p281
      %p283 = scmp.ne.s32.totalorder %s274, %s275
      %p284 = scmp.eq.s32.totalorder %s33, 0
      %p285 = por %p283, %p284
      %p286 = scmp.ne.s32.totalorder %s274, %s275
      %p287 = scmp.eq.s32.totalorder %s34, 1
      %p288 = por %p286, %p287
      %p290 = scmp.ne.s32.totalorder %s275, %s289
      %p291 = scmp.eq.s32.totalorder %s34, 0
      %p292 = por %p290, %p291
      %s294 = sadd.s32 %s293, 1
      %p297 = scmp.eq.s32.totalorder %s28, 1
      %p298 = scmp.ne.s32.totalorder %s293, %s295
      %p299 = scmp.eq.s32.totalorder %s28, 0
      %p300 = por %p298, %p299
      %p301 = scmp.ne.s32.totalorder %s293, %s295
      %p302 = scmp.eq.s32.totalorder %s33, 1
      %p303 = por %p301, %p302
      %p304 = scmp.ne.s32.totalorder %s295, %s296
      %p305 = scmp.eq.s32.totalorder %s33, 0
      %p306 = por %p304, %p305
      %p307 = scmp.ne.s32.totalorder %s295, %s296
      %p308 = scmp.eq.s32.totalorder %s34, 1
      %p309 = por %p307, %p308
      %p311 = scmp.ne.s32.totalorder %s296, %s310
      %p312 = scmp.eq.s32.totalorder %s34, 0
      %p313 = por %p311, %p312
      %s314 = ssub.s32 %s28, %s35
      %p315 = scmp.eq.s32.totalorder %s314, 0
      %s317 = sadd.s32 %s316, 1
      %s318 = scalar_select %p315, %s316, %s317
      %p321 = pneg %p315
      %p322 = scmp.eq.s32.totalorder %s28, 1
      %p323 = por %p321, %p322
      %p324 = scmp.ne.s32.totalorder %s316, %s319
      %p325 = scmp.eq.s32.totalorder %s28, 0
      %p326 = por %p324, %p325
      %p327 = scmp.ne.s32.totalorder %s316, %s319
      %p328 = scmp.eq.s32.totalorder %s33, 1
      %p329 = por %p327, %p328
      %p330 = scmp.ne.s32.totalorder %s319, %s320
      %p331 = scmp.eq.s32.totalorder %s33, 0
      %p332 = por %p330, %p331
      %p333 = scmp.ne.s32.totalorder %s319, %s320
      %p334 = scmp.eq.s32.totalorder %s34, 1
      %p335 = por %p333, %p334
      %p337 = scmp.ne.s32.totalorder %s320, %s336
      %p338 = scmp.eq.s32.totalorder %s34, 0
      %p339 = por %p337, %p338
      %p340 = scmp.le.s32.totalorder 1, %s28
      %p341 = scmp.lt.s32.totalorder %s28, 3
      %p342 = pnand %p340, %p341
      %p343 = pneg %p342
      // Predicated region
      $region9: #{tpu_custom_call.1} parent=5 // pred_check
        _
      $region10: #{tpu_custom_call.1} parent=5 // pred_check_branch
        %345 = sbr.rel (%p342) target = $region12
      $region11: #{tpu_custom_call.1} parent=5 // pred_region
        %s346 = ssub.s32 %s28, 1
        // Predicated region
        $region13: #{tpu_custom_call.1} parent=11 // pred_check
          %p347 = pneg %p75
        $region14: #{tpu_custom_call.1} parent=11 // pred_check_branch
          %349 = sbr.rel (%p347) target = $region16
        $region15: #{tpu_custom_call.1} parent=11 // pred_region
          %s351 = ssub.s32 32768, 32768
          %352 = vsyncadd [#allocation6], %s351
          %s353 = sshll.u32 [#allocation5], 4
          %s354 = int_to_ptr.vmem [resolvable:$true] %s353
          %359 = dma.hbm_to_vmem [thread:$0]  %s1, 32768, %s354, [#allocation6], 256, 256, 16
        $region16: #{tpu_custom_call.1} parent=11 // pred_fallthru
          _
        // Predicated region
        $region17: #{tpu_custom_call.1} parent=11 // pred_check
          %p360 = pneg %p96
        $region18: #{tpu_custom_call.1} parent=11 // pred_check_branch
          %362 = sbr.rel (%p360) target = $region20
        $region19: #{tpu_custom_call.1} parent=11 // pred_region
          _
        $region20: #{tpu_custom_call.1} parent=11 // pred_fallthru
          _
        // Predicated region
        $region21: #{tpu_custom_call.1} parent=11 // pred_check
          %p363 = pneg %p117
        $region22: #{tpu_custom_call.1} parent=11 // pred_check_branch
          %365 = sbr.rel (%p363) target = $region24
        $region23: #{tpu_custom_call.1} parent=11 // pred_region
          %s367 = ssub.s32 8192, 8192
          %368 = vsyncadd [#allocation6], %s367
          %s369 = sshll.u32 [#allocation7], 4
          %s370 = int_to_ptr.vmem [resolvable:$true] %s369
          %375 = dma.hbm_to_vmem [thread:$0]  %s3, 8192, %s370, [#allocation6], 128, 128, 8
        $region24: #{tpu_custom_call.1} parent=11 // pred_fallthru
          _
        // Predicated region
        $region25: #{tpu_custom_call.1} parent=11 // pred_check
          %p376 = pneg %p138
        $region26: #{tpu_custom_call.1} parent=11 // pred_check_branch
          %378 = sbr.rel (%p376) target = $region28
        $region27: #{tpu_custom_call.1} parent=11 // pred_region
          _
        $region28: #{tpu_custom_call.1} parent=11 // pred_fallthru
          _
        // Predicated region
        $region29: #{tpu_custom_call.1} parent=11 // pred_check
          %p379 = pneg %p159
        $region30: #{tpu_custom_call.1} parent=11 // pred_check_branch
          %381 = sbr.rel (%p379) target = $region32
        $region31: #{tpu_custom_call.1} parent=11 // pred_region
          %s383 = ssub.s32 2048, 2048
          %384 = vsyncadd [#allocation9], %s383
          %s385 = sshll.u32 [#allocation8], 4
          %s386 = int_to_ptr.vmem [resolvable:$true] %s385
          %391 = dma.hbm_to_vmem [thread:$0]  %s5, 2048, %s386, [#allocation9], 64, 64, 4
        $region32: #{tpu_custom_call.1} parent=11 // pred_fallthru
          _
        // Predicated region
        $region33: #{tpu_custom_call.1} parent=11 // pred_check
          %p392 = pneg %p180
        $region34: #{tpu_custom_call.1} parent=11 // pred_check_branch
          %394 = sbr.rel (%p392) target = $region36
        $region35: #{tpu_custom_call.1} parent=11 // pred_region
          _
        $region36: #{tpu_custom_call.1} parent=11 // pred_fallthru
          _
        // Predicated region
        $region37: #{tpu_custom_call.1} parent=11 // pred_check
          %p395 = pneg %p201
        $region38: #{tpu_custom_call.1} parent=11 // pred_check_branch
          %397 = sbr.rel (%p395) target = $region40
        $region39: #{tpu_custom_call.1} parent=11 // pred_region
          %s399 = ssub.s32 1024, 1024
          %400 = vsyncadd [#allocation9], %s399
          %s401 = sshll.u32 [#allocation10], 4
          %s402 = int_to_ptr.vmem [resolvable:$true] %s401
          %407 = dma.hbm_to_vmem [thread:$0]  %s7, 1024, %s402, [#allocation9], 64, 64, 4
        $region40: #{tpu_custom_call.1} parent=11 // pred_fallthru
          _
        // Predicated region
        $region41: #{tpu_custom_call.1} parent=11 // pred_check
          %p408 = pneg %p222
        $region42: #{tpu_custom_call.1} parent=11 // pred_check_branch
          %410 = sbr.rel (%p408) target = $region44
        $region43: #{tpu_custom_call.1} parent=11 // pred_region
          _
        $region44: #{tpu_custom_call.1} parent=11 // pred_fallthru
          _
        // Predicated region
        $region45: #{tpu_custom_call.1} parent=11 // pred_check
          %p411 = pneg %p243
        $region46: #{tpu_custom_call.1} parent=11 // pred_check_branch
          %413 = sbr.rel (%p411) target = $region48
        $region47: #{tpu_custom_call.1} parent=11 // pred_region
          %s415 = ssub.s32 1024, 1024
          %416 = vsyncadd [#allocation12], %s415
          %s417 = sshll.u32 [#allocation11], 4
          %s418 = int_to_ptr.vmem [resolvable:$true] %s417
          %423 = dma.hbm_to_vmem [thread:$0]  %s9, 1024, %s418, [#allocation12], 64, 64, 4
        $region48: #{tpu_custom_call.1} parent=11 // pred_fallthru
          _
        // Predicated region
        $region49: #{tpu_custom_call.1} parent=11 // pred_check
          %p424 = pneg %p264
        $region50: #{tpu_custom_call.1} parent=11 // pred_check_branch
          %426 = sbr.rel (%p424) target = $region52
        $region51: #{tpu_custom_call.1} parent=11 // pred_region
          _
        $region52: #{tpu_custom_call.1} parent=11 // pred_fallthru
          _
        // Predicated region
        $region53: #{tpu_custom_call.1} parent=11 // pred_check
          %p427 = pneg %p285
        $region54: #{tpu_custom_call.1} parent=11 // pred_check_branch
          %429 = sbr.rel (%p427) target = $region56
        $region55: #{tpu_custom_call.1} parent=11 // pred_region
          %s431 = ssub.s32 1024, 1024
          %432 = vsyncadd [#allocation12], %s431
          %s433 = sshll.u32 [#allocation13], 4
          %s434 = int_to_ptr.vmem [resolvable:$true] %s433
          %439 = dma.hbm_to_vmem [thread:$0]  %s11, 1024, %s434, [#allocation12], 64, 64, 4
        $region56: #{tpu_custom_call.1} parent=11 // pred_fallthru
          _
        // Predicated region
        $region57: #{tpu_custom_call.1} parent=11 // pred_check
          %p440 = pneg %p306
        $region58: #{tpu_custom_call.1} parent=11 // pred_check_branch
          %442 = sbr.rel (%p440) target = $region60
        $region59: #{tpu_custom_call.1} parent=11 // pred_region
          _
        $region60: #{tpu_custom_call.1} parent=11 // pred_fallthru
          _
      $region12: #{tpu_custom_call.1} parent=5 // pred_fallthru
        _
      %p443 = scmp.lt.s32.totalorder %s28, 2
      // Predicated region
      $region61: #{tpu_custom_call.1} parent=5 // pred_check
        %p444 = pneg %p443
      $region62: #{tpu_custom_call.1} parent=5 // pred_check_branch
        %446 = sbr.rel (%p444) target = $region64
      $region63: #{tpu_custom_call.1} parent=5 // pred_region
        // Predicated region
        $region65: #{tpu_custom_call.1} parent=63 // pred_check
          %p447 = pneg %p48
        $region66: #{tpu_custom_call.1} parent=63 // pred_check_branch
          %449 = sbr.rel (%p447) target = $region68
        $region67: #{tpu_custom_call.1} parent=63 // pred_region
          %s450 = sand.u32 %s38, 1
          %s451 = scalar_lea.sflag [#allocation3], %s450
          %s452 = sand.u32 %s38, 1
          %s453 = smul.addr %s452, 512
          %s454 = scalar_lea.vmem [#allocation2], %s453
          %s455 = smul.u32 16, %s28
          %s457 = ssub.s32 8192, 8192
          %458 = vsyncadd %s451, %s457
          %s459 = smul.addr %s455, 8
          %s460 = smul.addr %s459, 64
          %s461 = scalar_lea.hbm %s0, %s460
          %s462 = sshll.u32 %s454, 4
          %s463 = int_to_ptr.vmem [resolvable:$true] %s462
          %468 = dma.hbm_to_vmem [thread:$0]  %s461, 8192, %s463, %s451, 512, 512, 32
        $region68: #{tpu_custom_call.1} parent=63 // pred_fallthru
          _
      $region64: #{tpu_custom_call.1} parent=5 // pred_fallthru
        _
      %p469 = scmp.le.s32.totalorder 1, %s28
      %p470 = scmp.lt.s32.totalorder %s28, 3
      %p471 = pnand %p469, %p470
      %p472 = pneg %p471
      // Predicated region
      $region69: #{tpu_custom_call.1} parent=5 // pred_check
        _
      $region70: #{tpu_custom_call.1} parent=5 // pred_check_branch
        %474 = sbr.rel (%p471) target = $region72
      $region71: #{tpu_custom_call.1} parent=5 // pred_region
        %s475 = ssub.s32 %s28, 1
        %s476 = sand.u32 %s41, 1
        %s477 = scalar_lea.sflag [#allocation3], %s476
        %s478 = sand.u32 %s41, 1
        %s479 = smul.addr %s478, 512
        %s480 = scalar_lea.vmem [#allocation2], %s479
        // Predicated region
        $region73: #{tpu_custom_call.1} parent=71 // pred_check
          %p481 = pneg %p54
        $region74: #{tpu_custom_call.1} parent=71 // pred_check_branch
          %483 = sbr.rel (%p481) target = $region76
        $region75: #{tpu_custom_call.1} parent=71 // pred_region
          %484 = dma.done %s477, 8192
        $region76: #{tpu_custom_call.1} parent=71 // pred_fallthru
          _
        // Predicated region
        $region77: #{tpu_custom_call.1} parent=71 // pred_check
          %p485 = pneg %p75
        $region78: #{tpu_custom_call.1} parent=71 // pred_check_branch
          %487 = sbr.rel (%p485) target = $region80
        $region79: #{tpu_custom_call.1} parent=71 // pred_region
          %488 = dma.done [#allocation6], 32768
        $region80: #{tpu_custom_call.1} parent=71 // pred_fallthru
          _
        // Predicated region
        $region81: #{tpu_custom_call.1} parent=71 // pred_check
          %p489 = pneg %p117
        $region82: #{tpu_custom_call.1} parent=71 // pred_check_branch
          %491 = sbr.rel (%p489) target = $region84
        $region83: #{tpu_custom_call.1} parent=71 // pred_region
          %492 = dma.done [#allocation6], 8192
        $region84: #{tpu_custom_call.1} parent=71 // pred_fallthru
          _
        // Predicated region
        $region85: #{tpu_custom_call.1} parent=71 // pred_check
          %p493 = pneg %p159
        $region86: #{tpu_custom_call.1} parent=71 // pred_check_branch
          %495 = sbr.rel (%p493) target = $region88
        $region87: #{tpu_custom_call.1} parent=71 // pred_region
          %496 = dma.done [#allocation9], 2048
        $region88: #{tpu_custom_call.1} parent=71 // pred_fallthru
          _
        // Predicated region
        $region89: #{tpu_custom_call.1} parent=71 // pred_check
          %p497 = pneg %p201
        $region90: #{tpu_custom_call.1} parent=71 // pred_check_branch
          %499 = sbr.rel (%p497) target = $region92
        $region91: #{tpu_custom_call.1} parent=71 // pred_region
          %500 = dma.done [#allocation9], 1024
        $region92: #{tpu_custom_call.1} parent=71 // pred_fallthru
          _
        // Predicated region
        $region93: #{tpu_custom_call.1} parent=71 // pred_check
          %p501 = pneg %p243
        $region94: #{tpu_custom_call.1} parent=71 // pred_check_branch
          %503 = sbr.rel (%p501) target = $region96
        $region95: #{tpu_custom_call.1} parent=71 // pred_region
          %504 = dma.done [#allocation12], 1024
        $region96: #{tpu_custom_call.1} parent=71 // pred_fallthru
          _
        // Predicated region
        $region97: #{tpu_custom_call.1} parent=71 // pred_check
          %p505 = pneg %p285
        $region98: #{tpu_custom_call.1} parent=71 // pred_check_branch
          %507 = sbr.rel (%p505) target = $region100
        $region99: #{tpu_custom_call.1} parent=71 // pred_region
          %508 = dma.done [#allocation12], 1024
        $region100: #{tpu_custom_call.1} parent=71 // pred_fallthru
          _
        %s509 = sand.u32 %s41, 1
        %s510 = scalar_lea.sflag [#allocation3], %s509
        %s511 = sand.u32 %s41, 1
        %s512 = smul.addr %s511, 512
        %s513 = scalar_lea.vmem [#allocation2], %s512
        %p514 = pneg %p54
        %p515 = pneg %p51
        %p516 = pneg %p75
        %p517 = pneg %p72
        %p518 = pneg %p96
        %p519 = pneg %p93
        %p520 = pneg %p117
        %p521 = pneg %p114
        %p522 = pneg %p138
        %p523 = pneg %p135
        %p524 = pneg %p159
        %p525 = pneg %p156
        %p526 = pneg %p180
        %p527 = pneg %p177
        %p528 = pneg %p201
        %p529 = pneg %p198
        %p530 = pneg %p222
        %p531 = pneg %p219
        %p532 = pneg %p243
        %p533 = pneg %p240
        %p534 = pneg %p264
        %p535 = pneg %p261
        %p536 = pneg %p285
        %p537 = pneg %p282
        %p538 = pneg %p306
        %p539 = pneg %p303
        %p540 = pneg %p332
        %p541 = pneg %p329
        %s542 = sand.u32 %s319, 1
        %s543 = scalar_lea.sflag [#allocation4], %s542
        %s544 = sand.u32 %s319, 1
        %s545 = smul.addr %s544, 64
        %s546 = scalar_lea.vmem [#allocation14], %s545
        %s547 = smul.u32 16, %s33
        %s548 = smul.u32 16, %s33
        %v550 = vld [vmem:[%s480] sm:$0xff]
        %v551 = vld [vmem:[%s480 + $0x8] sm:$0xff]
        %v552 = vld [vmem:[%s480 + $0x10] sm:$0xff]
        %v553 = vld [vmem:[%s480 + $0x18] sm:$0xff]
        %v554 = vld [vmem:[%s480 + $0x20] sm:$0xff]
        %v555 = vld [vmem:[%s480 + $0x28] sm:$0xff]
        %v556 = vld [vmem:[%s480 + $0x30] sm:$0xff]
        %v557 = vld [vmem:[%s480 + $0x38] sm:$0xff]
        %v558 = vld [vmem:[%s480 + $0x40] sm:$0xff]
        %v559 = vld [vmem:[%s480 + $0x48] sm:$0xff]
        %v560 = vld [vmem:[%s480 + $0x50] sm:$0xff]
        %v561 = vld [vmem:[%s480 + $0x58] sm:$0xff]
        %v562 = vld [vmem:[%s480 + $0x60] sm:$0xff]
        %v563 = vld [vmem:[%s480 + $0x68] sm:$0xff]
        %v564 = vld [vmem:[%s480 + $0x70] sm:$0xff]
        %v565 = vld [vmem:[%s480 + $0x78] sm:$0xff]
        %v566 = vld [vmem:[%s480 + $0x80] sm:$0xff]
        %v567 = vld [vmem:[%s480 + $0x88] sm:$0xff]
        %v568 = vld [vmem:[%s480 + $0x90] sm:$0xff]
        %v569 = vld [vmem:[%s480 + $0x98] sm:$0xff]
        %v570 = vld [vmem:[%s480 + $0xa0] sm:$0xff]
        %v571 = vld [vmem:[%s480 + $0xa8] sm:$0xff]
        %v572 = vld [vmem:[%s480 + $0xb0] sm:$0xff]
        %v573 = vld [vmem:[%s480 + $0xb8] sm:$0xff]
        %v574 = vld [vmem:[%s480 + $0xc0] sm:$0xff]
        %v575 = vld [vmem:[%s480 + $0xc8] sm:$0xff]
        %v576 = vld [vmem:[%s480 + $0xd0] sm:$0xff]
        %v577 = vld [vmem:[%s480 + $0xd8] sm:$0xff]
        %v578 = vld [vmem:[%s480 + $0xe0] sm:$0xff]
        %v579 = vld [vmem:[%s480 + $0xe8] sm:$0xff]
        %v580 = vld [vmem:[%s480 + $0xf0] sm:$0xff]
        %v581 = vld [vmem:[%s480 + $0xf8] sm:$0xff]
        %v582 = vld [vmem:[%s480 + $0x100] sm:$0xff]
        %v583 = vld [vmem:[%s480 + $0x108] sm:$0xff]
        %v584 = vld [vmem:[%s480 + $0x110] sm:$0xff]
        %v585 = vld [vmem:[%s480 + $0x118] sm:$0xff]
        %v586 = vld [vmem:[%s480 + $0x120] sm:$0xff]
        %v587 = vld [vmem:[%s480 + $0x128] sm:$0xff]
        %v588 = vld [vmem:[%s480 + $0x130] sm:$0xff]
        %v589 = vld [vmem:[%s480 + $0x138] sm:$0xff]
        %v590 = vld [vmem:[%s480 + $0x140] sm:$0xff]
        %v591 = vld [vmem:[%s480 + $0x148] sm:$0xff]
        %v592 = vld [vmem:[%s480 + $0x150] sm:$0xff]
        %v593 = vld [vmem:[%s480 + $0x158] sm:$0xff]
        %v594 = vld [vmem:[%s480 + $0x160] sm:$0xff]
        %v595 = vld [vmem:[%s480 + $0x168] sm:$0xff]
        %v596 = vld [vmem:[%s480 + $0x170] sm:$0xff]
        %v597 = vld [vmem:[%s480 + $0x178] sm:$0xff]
        %v598 = vld [vmem:[%s480 + $0x180] sm:$0xff]
        %v599 = vld [vmem:[%s480 + $0x188] sm:$0xff]
        %v600 = vld [vmem:[%s480 + $0x190] sm:$0xff]
        %v601 = vld [vmem:[%s480 + $0x198] sm:$0xff]
        %v602 = vld [vmem:[%s480 + $0x1a0] sm:$0xff]
        %v603 = vld [vmem:[%s480 + $0x1a8] sm:$0xff]
        %v604 = vld [vmem:[%s480 + $0x1b0] sm:$0xff]
        %v605 = vld [vmem:[%s480 + $0x1b8] sm:$0xff]
        %v606 = vld [vmem:[%s480 + $0x1c0] sm:$0xff]
        %v607 = vld [vmem:[%s480 + $0x1c8] sm:$0xff]
        %v608 = vld [vmem:[%s480 + $0x1d0] sm:$0xff]
        %v609 = vld [vmem:[%s480 + $0x1d8] sm:$0xff]
        %v610 = vld [vmem:[%s480 + $0x1e0] sm:$0xff]
        %v611 = vld [vmem:[%s480 + $0x1e8] sm:$0xff]
        %v612 = vld [vmem:[%s480 + $0x1f0] sm:$0xff]
        %v613 = vld [vmem:[%s480 + $0x1f8] sm:$0xff]
        %v614 = vld [vmem:[#allocation5] sm:$0xff]
        %v615 = vld [vmem:[#allocation5 + $0x8] sm:$0xff]
        %v616 = vld [vmem:[#allocation5 + $0x10] sm:$0xff]
        %v617 = vld [vmem:[#allocation5 + $0x18] sm:$0xff]
        %v618 = vld [vmem:[#allocation5 + $0x20] sm:$0xff]
        %v619 = vld [vmem:[#allocation5 + $0x28] sm:$0xff]
        %v620 = vld [vmem:[#allocation5 + $0x30] sm:$0xff]
        %v621 = vld [vmem:[#allocation5 + $0x38] sm:$0xff]
        %v622 = vld [vmem:[#allocation5 + $0x40] sm:$0xff]
        %v623 = vld [vmem:[#allocation5 + $0x48] sm:$0xff]
        %v624 = vld [vmem:[#allocation5 + $0x50] sm:$0xff]
        %v625 = vld [vmem:[#allocation5 + $0x58] sm:$0xff]
        %v626 = vld [vmem:[#allocation5 + $0x60] sm:$0xff]
        %v627 = vld [vmem:[#allocation5 + $0x68] sm:$0xff]
        %v628 = vld [vmem:[#allocation5 + $0x70] sm:$0xff]
        %v629 = vld [vmem:[#allocation5 + $0x78] sm:$0xff]
        %v630 = vld [vmem:[#allocation5 + $0x80] sm:$0xff]
        %v631 = vld [vmem:[#allocation5 + $0x88] sm:$0xff]
        %v632 = vld [vmem:[#allocation5 + $0x90] sm:$0xff]
        %v633 = vld [vmem:[#allocation5 + $0x98] sm:$0xff]
        %v634 = vld [vmem:[#allocation5 + $0xa0] sm:$0xff]
        %v635 = vld [vmem:[#allocation5 + $0xa8] sm:$0xff]
        %v636 = vld [vmem:[#allocation5 + $0xb0] sm:$0xff]
        %v637 = vld [vmem:[#allocation5 + $0xb8] sm:$0xff]
        %v638 = vld [vmem:[#allocation5 + $0xc0] sm:$0xff]
        %v639 = vld [vmem:[#allocation5 + $0xc8] sm:$0xff]
        %v640 = vld [vmem:[#allocation5 + $0xd0] sm:$0xff]
        %v641 = vld [vmem:[#allocation5 + $0xd8] sm:$0xff]
        %v642 = vld [vmem:[#allocation5 + $0xe0] sm:$0xff]
        %v643 = vld [vmem:[#allocation5 + $0xe8] sm:$0xff]
        %v644 = vld [vmem:[#allocation5 + $0xf0] sm:$0xff]
        %v645 = vld [vmem:[#allocation5 + $0xf8] sm:$0xff]
        %v646 = vld [vmem:[#allocation5 + $0x100] sm:$0xff]
        %v647 = vld [vmem:[#allocation5 + $0x108] sm:$0xff]
        %v648 = vld [vmem:[#allocation5 + $0x110] sm:$0xff]
        %v649 = vld [vmem:[#allocation5 + $0x118] sm:$0xff]
        %v650 = vld [vmem:[#allocation5 + $0x120] sm:$0xff]
        %v651 = vld [vmem:[#allocation5 + $0x128] sm:$0xff]
        %v652 = vld [vmem:[#allocation5 + $0x130] sm:$0xff]
        %v653 = vld [vmem:[#allocation5 + $0x138] sm:$0xff]
        %v654 = vld [vmem:[#allocation5 + $0x140] sm:$0xff]
        %v655 = vld [vmem:[#allocation5 + $0x148] sm:$0xff]
        %v656 = vld [vmem:[#allocation5 + $0x150] sm:$0xff]
        %v657 = vld [vmem:[#allocation5 + $0x158] sm:$0xff]
        %v658 = vld [vmem:[#allocation5 + $0x160] sm:$0xff]
        %v659 = vld [vmem:[#allocation5 + $0x168] sm:$0xff]
        %v660 = vld [vmem:[#allocation5 + $0x170] sm:$0xff]
        %v661 = vld [vmem:[#allocation5 + $0x178] sm:$0xff]
        %v662 = vld [vmem:[#allocation5 + $0x180] sm:$0xff]
        %v663 = vld [vmem:[#allocation5 + $0x188] sm:$0xff]
        %v664 = vld [vmem:[#allocation5 + $0x190] sm:$0xff]
        %v665 = vld [vmem:[#allocation5 + $0x198] sm:$0xff]
        %v666 = vld [vmem:[#allocation5 + $0x1a0] sm:$0xff]
        %v667 = vld [vmem:[#allocation5 + $0x1a8] sm:$0xff]
        %v668 = vld [vmem:[#allocation5 + $0x1b0] sm:$0xff]
        %v669 = vld [vmem:[#allocation5 + $0x1b8] sm:$0xff]
        %v670 = vld [vmem:[#allocation5 + $0x1c0] sm:$0xff]
        %v671 = vld [vmem:[#allocation5 + $0x1c8] sm:$0xff]
        %v672 = vld [vmem:[#allocation5 + $0x1d0] sm:$0xff]
        %v673 = vld [vmem:[#allocation5 + $0x1d8] sm:$0xff]
        %v674 = vld [vmem:[#allocation5 + $0x1e0] sm:$0xff]
        %v675 = vld [vmem:[#allocation5 + $0x1e8] sm:$0xff]
        %v676 = vld [vmem:[#allocation5 + $0x1f0] sm:$0xff]
        %v677 = vld [vmem:[#allocation5 + $0x1f8] sm:$0xff]
        %v678 = vld [vmem:[#allocation5 + $0x200] sm:$0xff]
        %v679 = vld [vmem:[#allocation5 + $0x208] sm:$0xff]
        %v680 = vld [vmem:[#allocation5 + $0x210] sm:$0xff]
        %v681 = vld [vmem:[#allocation5 + $0x218] sm:$0xff]
        %v682 = vld [vmem:[#allocation5 + $0x220] sm:$0xff]
        %v683 = vld [vmem:[#allocation5 + $0x228] sm:$0xff]
        %v684 = vld [vmem:[#allocation5 + $0x230] sm:$0xff]
        %v685 = vld [vmem:[#allocation5 + $0x238] sm:$0xff]
        %v686 = vld [vmem:[#allocation5 + $0x240] sm:$0xff]
        %v687 = vld [vmem:[#allocation5 + $0x248] sm:$0xff]
        %v688 = vld [vmem:[#allocation5 + $0x250] sm:$0xff]
        %v689 = vld [vmem:[#allocation5 + $0x258] sm:$0xff]
        %v690 = vld [vmem:[#allocation5 + $0x260] sm:$0xff]
        %v691 = vld [vmem:[#allocation5 + $0x268] sm:$0xff]
        %v692 = vld [vmem:[#allocation5 + $0x270] sm:$0xff]
        %v693 = vld [vmem:[#allocation5 + $0x278] sm:$0xff]
        %v694 = vld [vmem:[#allocation5 + $0x280] sm:$0xff]
        %v695 = vld [vmem:[#allocation5 + $0x288] sm:$0xff]
        %v696 = vld [vmem:[#allocation5 + $0x290] sm:$0xff]
        %v697 = vld [vmem:[#allocation5 + $0x298] sm:$0xff]
        %v698 = vld [vmem:[#allocation5 + $0x2a0] sm:$0xff]
        %v699 = vld [vmem:[#allocation5 + $0x2a8] sm:$0xff]
        %v700 = vld [vmem:[#allocation5 + $0x2b0] sm:$0xff]
        %v701 = vld [vmem:[#allocation5 + $0x2b8] sm:$0xff]
        %v702 = vld [vmem:[#allocation5 + $0x2c0] sm:$0xff]
        %v703 = vld [vmem:[#allocation5 + $0x2c8] sm:$0xff]
        %v704 = vld [vmem:[#allocation5 + $0x2d0] sm:$0xff]
        %v705 = vld [vmem:[#allocation5 + $0x2d8] sm:$0xff]
        %v706 = vld [vmem:[#allocation5 + $0x2e0] sm:$0xff]
        %v707 = vld [vmem:[#allocation5 + $0x2e8] sm:$0xff]
        %v708 = vld [vmem:[#allocation5 + $0x2f0] sm:$0xff]
        %v709 = vld [vmem:[#allocation5 + $0x2f8] sm:$0xff]
        %v710 = vld [vmem:[#allocation5 + $0x300] sm:$0xff]
        %v711 = vld [vmem:[#allocation5 + $0x308] sm:$0xff]
        %v712 = vld [vmem:[#allocation5 + $0x310] sm:$0xff]
        %v713 = vld [vmem:[#allocation5 + $0x318] sm:$0xff]
        %v714 = vld [vmem:[#allocation5 + $0x320] sm:$0xff]
        %v715 = vld [vmem:[#allocation5 + $0x328] sm:$0xff]
        %v716 = vld [vmem:[#allocation5 + $0x330] sm:$0xff]
        %v717 = vld [vmem:[#allocation5 + $0x338] sm:$0xff]
        %v718 = vld [vmem:[#allocation5 + $0x340] sm:$0xff]
        %v719 = vld [vmem:[#allocation5 + $0x348] sm:$0xff]
        %v720 = vld [vmem:[#allocation5 + $0x350] sm:$0xff]
        %v721 = vld [vmem:[#allocation5 + $0x358] sm:$0xff]
        %v722 = vld [vmem:[#allocation5 + $0x360] sm:$0xff]
        %v723 = vld [vmem:[#allocation5 + $0x368] sm:$0xff]
        %v724 = vld [vmem:[#allocation5 + $0x370] sm:$0xff]
        %v725 = vld [vmem:[#allocation5 + $0x378] sm:$0xff]
        %v726 = vld [vmem:[#allocation5 + $0x380] sm:$0xff]
        %v727 = vld [vmem:[#allocation5 + $0x388] sm:$0xff]
        %v728 = vld [vmem:[#allocation5 + $0x390] sm:$0xff]
        %v729 = vld [vmem:[#allocation5 + $0x398] sm:$0xff]
        %v730 = vld [vmem:[#allocation5 + $0x3a0] sm:$0xff]
        %v731 = vld [vmem:[#allocation5 + $0x3a8] sm:$0xff]
        %v732 = vld [vmem:[#allocation5 + $0x3b0] sm:$0xff]
        %v733 = vld [vmem:[#allocation5 + $0x3b8] sm:$0xff]
        %v734 = vld [vmem:[#allocation5 + $0x3c0] sm:$0xff]
        %v735 = vld [vmem:[#allocation5 + $0x3c8] sm:$0xff]
        %v736 = vld [vmem:[#allocation5 + $0x3d0] sm:$0xff]
        %v737 = vld [vmem:[#allocation5 + $0x3d8] sm:$0xff]
        %v738 = vld [vmem:[#allocation5 + $0x3e0] sm:$0xff]
        %v739 = vld [vmem:[#allocation5 + $0x3e8] sm:$0xff]
        %v740 = vld [vmem:[#allocation5 + $0x3f0] sm:$0xff]
        %v741 = vld [vmem:[#allocation5 + $0x3f8] sm:$0xff]
        %v742 = vld [vmem:[#allocation5 + $0x400] sm:$0xff]
        %v743 = vld [vmem:[#allocation5 + $0x408] sm:$0xff]
        %v744 = vld [vmem:[#allocation5 + $0x410] sm:$0xff]
        %v745 = vld [vmem:[#allocation5 + $0x418] sm:$0xff]
        %v746 = vld [vmem:[#allocation5 + $0x420] sm:$0xff]
        %v747 = vld [vmem:[#allocation5 + $0x428] sm:$0xff]
        %v748 = vld [vmem:[#allocation5 + $0x430] sm:$0xff]
        %v749 = vld [vmem:[#allocation5 + $0x438] sm:$0xff]
        %v750 = vld [vmem:[#allocation5 + $0x440] sm:$0xff]
        %v751 = vld [vmem:[#allocation5 + $0x448] sm:$0xff]
        %v752 = vld [vmem:[#allocation5 + $0x450] sm:$0xff]
        %v753 = vld [vmem:[#allocation5 + $0x458] sm:$0xff]
        %v754 = vld [vmem:[#allocation5 + $0x460] sm:$0xff]
        %v755 = vld [vmem:[#allocation5 + $0x468] sm:$0xff]
        %v756 = vld [vmem:[#allocation5 + $0x470] sm:$0xff]
        %v757 = vld [vmem:[#allocation5 + $0x478] sm:$0xff]
        %v758 = vld [vmem:[#allocation5 + $0x480] sm:$0xff]
        %v759 = vld [vmem:[#allocation5 + $0x488] sm:$0xff]
        %v760 = vld [vmem:[#allocation5 + $0x490] sm:$0xff]
        %v761 = vld [vmem:[#allocation5 + $0x498] sm:$0xff]
        %v762 = vld [vmem:[#allocation5 + $0x4a0] sm:$0xff]
        %v763 = vld [vmem:[#allocation5 + $0x4a8] sm:$0xff]
        %v764 = vld [vmem:[#allocation5 + $0x4b0] sm:$0xff]
        %v765 = vld [vmem:[#allocation5 + $0x4b8] sm:$0xff]
        %v766 = vld [vmem:[#allocation5 + $0x4c0] sm:$0xff]
        %v767 = vld [vmem:[#allocation5 + $0x4c8] sm:$0xff]
        %v768 = vld [vmem:[#allocation5 + $0x4d0] sm:$0xff]
        %v769 = vld [vmem:[#allocation5 + $0x4d8] sm:$0xff]
        %v770 = vld [vmem:[#allocation5 + $0x4e0] sm:$0xff]
        %v771 = vld [vmem:[#allocation5 + $0x4e8] sm:$0xff]
        %v772 = vld [vmem:[#allocation5 + $0x4f0] sm:$0xff]
        %v773 = vld [vmem:[#allocation5 + $0x4f8] sm:$0xff]
        %v774 = vld [vmem:[#allocation5 + $0x500] sm:$0xff]
        %v775 = vld [vmem:[#allocation5 + $0x508] sm:$0xff]
        %v776 = vld [vmem:[#allocation5 + $0x510] sm:$0xff]
        %v777 = vld [vmem:[#allocation5 + $0x518] sm:$0xff]
        %v778 = vld [vmem:[#allocation5 + $0x520] sm:$0xff]
        %v779 = vld [vmem:[#allocation5 + $0x528] sm:$0xff]
        %v780 = vld [vmem:[#allocation5 + $0x530] sm:$0xff]
        %v781 = vld [vmem:[#allocation5 + $0x538] sm:$0xff]
        %v782 = vld [vmem:[#allocation5 + $0x540] sm:$0xff]
        %v783 = vld [vmem:[#allocation5 + $0x548] sm:$0xff]
        %v784 = vld [vmem:[#allocation5 + $0x550] sm:$0xff]
        %v785 = vld [vmem:[#allocation5 + $0x558] sm:$0xff]
        %v786 = vld [vmem:[#allocation5 + $0x560] sm:$0xff]
        %v787 = vld [vmem:[#allocation5 + $0x568] sm:$0xff]
        %v788 = vld [vmem:[#allocation5 + $0x570] sm:$0xff]
        %v789 = vld [vmem:[#allocation5 + $0x578] sm:$0xff]
        %v790 = vld [vmem:[#allocation5 + $0x580] sm:$0xff]
        %v791 = vld [vmem:[#allocation5 + $0x588] sm:$0xff]
        %v792 = vld [vmem:[#allocation5 + $0x590] sm:$0xff]
        %v793 = vld [vmem:[#allocation5 + $0x598] sm:$0xff]
        %v794 = vld [vmem:[#allocation5 + $0x5a0] sm:$0xff]
        %v795 = vld [vmem:[#allocation5 + $0x5a8] sm:$0xff]
        %v796 = vld [vmem:[#allocation5 + $0x5b0] sm:$0xff]
        %v797 = vld [vmem:[#allocation5 + $0x5b8] sm:$0xff]
        %v798 = vld [vmem:[#allocation5 + $0x5c0] sm:$0xff]
        %v799 = vld [vmem:[#allocation5 + $0x5c8] sm:$0xff]
        %v800 = vld [vmem:[#allocation5 + $0x5d0] sm:$0xff]
        %v801 = vld [vmem:[#allocation5 + $0x5d8] sm:$0xff]
        %v802 = vld [vmem:[#allocation5 + $0x5e0] sm:$0xff]
        %v803 = vld [vmem:[#allocation5 + $0x5e8] sm:$0xff]
        %v804 = vld [vmem:[#allocation5 + $0x5f0] sm:$0xff]
        %v805 = vld [vmem:[#allocation5 + $0x5f8] sm:$0xff]
        %v806 = vld [vmem:[#allocation5 + $0x600] sm:$0xff]
        %v807 = vld [vmem:[#allocation5 + $0x608] sm:$0xff]
        %v808 = vld [vmem:[#allocation5 + $0x610] sm:$0xff]
        %v809 = vld [vmem:[#allocation5 + $0x618] sm:$0xff]
        %v810 = vld [vmem:[#allocation5 + $0x620] sm:$0xff]
        %v811 = vld [vmem:[#allocation5 + $0x628] sm:$0xff]
        %v812 = vld [vmem:[#allocation5 + $0x630] sm:$0xff]
        %v813 = vld [vmem:[#allocation5 + $0x638] sm:$0xff]
        %v814 = vld [vmem:[#allocation5 + $0x640] sm:$0xff]
        %v815 = vld [vmem:[#allocation5 + $0x648] sm:$0xff]
        %v816 = vld [vmem:[#allocation5 + $0x650] sm:$0xff]
        %v817 = vld [vmem:[#allocation5 + $0x658] sm:$0xff]
        %v818 = vld [vmem:[#allocation5 + $0x660] sm:$0xff]
        %v819 = vld [vmem:[#allocation5 + $0x668] sm:$0xff]
        %v820 = vld [vmem:[#allocation5 + $0x670] sm:$0xff]
        %v821 = vld [vmem:[#allocation5 + $0x678] sm:$0xff]
        %v822 = vld [vmem:[#allocation5 + $0x680] sm:$0xff]
        %v823 = vld [vmem:[#allocation5 + $0x688] sm:$0xff]
        %v824 = vld [vmem:[#allocation5 + $0x690] sm:$0xff]
        %v825 = vld [vmem:[#allocation5 + $0x698] sm:$0xff]
        %v826 = vld [vmem:[#allocation5 + $0x6a0] sm:$0xff]
        %v827 = vld [vmem:[#allocation5 + $0x6a8] sm:$0xff]
        %v828 = vld [vmem:[#allocation5 + $0x6b0] sm:$0xff]
        %v829 = vld [vmem:[#allocation5 + $0x6b8] sm:$0xff]
        %v830 = vld [vmem:[#allocation5 + $0x6c0] sm:$0xff]
        %v831 = vld [vmem:[#allocation5 + $0x6c8] sm:$0xff]
        %v832 = vld [vmem:[#allocation5 + $0x6d0] sm:$0xff]
        %v833 = vld [vmem:[#allocation5 + $0x6d8] sm:$0xff]
        %v834 = vld [vmem:[#allocation5 + $0x6e0] sm:$0xff]
        %v835 = vld [vmem:[#allocation5 + $0x6e8] sm:$0xff]
        %v836 = vld [vmem:[#allocation5 + $0x6f0] sm:$0xff]
        %v837 = vld [vmem:[#allocation5 + $0x6f8] sm:$0xff]
        %v838 = vld [vmem:[#allocation5 + $0x700] sm:$0xff]
        %v839 = vld [vmem:[#allocation5 + $0x708] sm:$0xff]
        %v840 = vld [vmem:[#allocation5 + $0x710] sm:$0xff]
        %v841 = vld [vmem:[#allocation5 + $0x718] sm:$0xff]
        %v842 = vld [vmem:[#allocation5 + $0x720] sm:$0xff]
        %v843 = vld [vmem:[#allocation5 + $0x728] sm:$0xff]
        %v844 = vld [vmem:[#allocation5 + $0x730] sm:$0xff]
        %v845 = vld [vmem:[#allocation5 + $0x738] sm:$0xff]
        %v846 = vld [vmem:[#allocation5 + $0x740] sm:$0xff]
        %v847 = vld [vmem:[#allocation5 + $0x748] sm:$0xff]
        %v848 = vld [vmem:[#allocation5 + $0x750] sm:$0xff]
        %v849 = vld [vmem:[#allocation5 + $0x758] sm:$0xff]
        %v850 = vld [vmem:[#allocation5 + $0x760] sm:$0xff]
        %v851 = vld [vmem:[#allocation5 + $0x768] sm:$0xff]
        %v852 = vld [vmem:[#allocation5 + $0x770] sm:$0xff]
        %v853 = vld [vmem:[#allocation5 + $0x778] sm:$0xff]
        %v854 = vld [vmem:[#allocation5 + $0x780] sm:$0xff]
        %v855 = vld [vmem:[#allocation5 + $0x788] sm:$0xff]
        %v856 = vld [vmem:[#allocation5 + $0x790] sm:$0xff]
        %v857 = vld [vmem:[#allocation5 + $0x798] sm:$0xff]
        %v858 = vld [vmem:[#allocation5 + $0x7a0] sm:$0xff]
        %v859 = vld [vmem:[#allocation5 + $0x7a8] sm:$0xff]
        %v860 = vld [vmem:[#allocation5 + $0x7b0] sm:$0xff]
        %v861 = vld [vmem:[#allocation5 + $0x7b8] sm:$0xff]
        %v862 = vld [vmem:[#allocation5 + $0x7c0] sm:$0xff]
        %v863 = vld [vmem:[#allocation5 + $0x7c8] sm:$0xff]
        %v864 = vld [vmem:[#allocation5 + $0x7d0] sm:$0xff]
        %v865 = vld [vmem:[#allocation5 + $0x7d8] sm:$0xff]
        %v866 = vld [vmem:[#allocation5 + $0x7e0] sm:$0xff]
        %v867 = vld [vmem:[#allocation5 + $0x7e8] sm:$0xff]
        %v868 = vld [vmem:[#allocation5 + $0x7f0] sm:$0xff]
        %v869 = vld [vmem:[#allocation5 + $0x7f8] sm:$0xff]
        %v870 = vld [vmem:[%s2] sm:$0xf]
        %v872 = vlaneseq
        %v873 = vshrl.u32 %v872, 7
        %v874 = vsub.s32 0, %v873
        %v875 = vrot.slane %v870, %v874
        %v876 = vlaneseq
        %v877 = vshrl.u32 %v876, 7
        %v878 = vsub.s32 1, %v877
        %v879 = vrot.slane %v870, %v878
        %v880 = vlaneseq
        %v881 = vshrl.u32 %v880, 7
        %v882 = vsub.s32 2, %v881
        %v883 = vrot.slane %v870, %v882
        %v884 = vlaneseq
        %v885 = vshrl.u32 %v884, 7
        %v886 = vsub.s32 3, %v885
        %v887 = vrot.slane %v870, %v886
        %v956 = vunpack.c.l.b16 %v550
        %v957 = vunpack.c.h.b16 %v550
        %v958 = vunpack.c.l.b16 %v551
        %v959 = vunpack.c.h.b16 %v551
        %v960 = vunpack.c.l.b16 %v552
        %v961 = vunpack.c.h.b16 %v552
        %v962 = vunpack.c.l.b16 %v553
        %v963 = vunpack.c.h.b16 %v553
        %v964 = vunpack.c.l.b16 %v554
        %v965 = vunpack.c.h.b16 %v554
        %v966 = vunpack.c.l.b16 %v555
        %v967 = vunpack.c.h.b16 %v555
        %v968 = vunpack.c.l.b16 %v556
        %v969 = vunpack.c.h.b16 %v556
        %v970 = vunpack.c.l.b16 %v557
        %v971 = vunpack.c.h.b16 %v557
        %v972 = vunpack.c.l.b16 %v558
        %v973 = vunpack.c.h.b16 %v558
        %v974 = vunpack.c.l.b16 %v559
        %v975 = vunpack.c.h.b16 %v559
        %v976 = vunpack.c.l.b16 %v560
        %v977 = vunpack.c.h.b16 %v560
        %v978 = vunpack.c.l.b16 %v561
        %v979 = vunpack.c.h.b16 %v561
        %v980 = vunpack.c.l.b16 %v562
        %v981 = vunpack.c.h.b16 %v562
        %v982 = vunpack.c.l.b16 %v563
        %v983 = vunpack.c.h.b16 %v563
        %v984 = vunpack.c.l.b16 %v564
        %v985 = vunpack.c.h.b16 %v564
        %v986 = vunpack.c.l.b16 %v565
        %v987 = vunpack.c.h.b16 %v565
        %v988 = vunpack.c.l.b16 %v566
        %v989 = vunpack.c.h.b16 %v566
        %v990 = vunpack.c.l.b16 %v567
        %v991 = vunpack.c.h.b16 %v567
        %v992 = vunpack.c.l.b16 %v568
        %v993 = vunpack.c.h.b16 %v568
        %v994 = vunpack.c.l.b16 %v569
        %v995 = vunpack.c.h.b16 %v569
        %v996 = vunpack.c.l.b16 %v570
        %v997 = vunpack.c.h.b16 %v570
        %v998 = vunpack.c.l.b16 %v571
        %v999 = vunpack.c.h.b16 %v571
        %v1000 = vunpack.c.l.b16 %v572
        %v1001 = vunpack.c.h.b16 %v572
        %v1002 = vunpack.c.l.b16 %v573
        %v1003 = vunpack.c.h.b16 %v573
        %v1004 = vunpack.c.l.b16 %v574
        %v1005 = vunpack.c.h.b16 %v574
        %v1006 = vunpack.c.l.b16 %v575
        %v1007 = vunpack.c.h.b16 %v575
        %v1008 = vunpack.c.l.b16 %v576
        %v1009 = vunpack.c.h.b16 %v576
        %v1010 = vunpack.c.l.b16 %v577
        %v1011 = vunpack.c.h.b16 %v577
        %v1012 = vunpack.c.l.b16 %v578
        %v1013 = vunpack.c.h.b16 %v578
        %v1014 = vunpack.c.l.b16 %v579
        %v1015 = vunpack.c.h.b16 %v579
        %v1016 = vunpack.c.l.b16 %v580
        %v1017 = vunpack.c.h.b16 %v580
        %v1018 = vunpack.c.l.b16 %v581
        %v1019 = vunpack.c.h.b16 %v581
        %v1020 = vunpack.c.l.b16 %v582
        %v1021 = vunpack.c.h.b16 %v582
        %v1022 = vunpack.c.l.b16 %v583
        %v1023 = vunpack.c.h.b16 %v583
        %v1024 = vunpack.c.l.b16 %v584
        %v1025 = vunpack.c.h.b16 %v584
        %v1026 = vunpack.c.l.b16 %v585
        %v1027 = vunpack.c.h.b16 %v585
        %v1028 = vunpack.c.l.b16 %v586
        %v1029 = vunpack.c.h.b16 %v586
        %v1030 = vunpack.c.l.b16 %v587
        %v1031 = vunpack.c.h.b16 %v587
        %v1032 = vunpack.c.l.b16 %v588
        %v1033 = vunpack.c.h.b16 %v588
        %v1034 = vunpack.c.l.b16 %v589
        %v1035 = vunpack.c.h.b16 %v589
        %v1036 = vunpack.c.l.b16 %v590
        %v1037 = vunpack.c.h.b16 %v590
        %v1038 = vunpack.c.l.b16 %v591
        %v1039 = vunpack.c.h.b16 %v591
        %v1040 = vunpack.c.l.b16 %v592
        %v1041 = vunpack.c.h.b16 %v592
        %v1042 = vunpack.c.l.b16 %v593
        %v1043 = vunpack.c.h.b16 %v593
        %v1044 = vunpack.c.l.b16 %v594
        %v1045 = vunpack.c.h.b16 %v594
        %v1046 = vunpack.c.l.b16 %v595
        %v1047 = vunpack.c.h.b16 %v595
        %v1048 = vunpack.c.l.b16 %v596
        %v1049 = vunpack.c.h.b16 %v596
        %v1050 = vunpack.c.l.b16 %v597
        %v1051 = vunpack.c.h.b16 %v597
        %v1052 = vunpack.c.l.b16 %v598
        %v1053 = vunpack.c.h.b16 %v598
        %v1054 = vunpack.c.l.b16 %v599
        %v1055 = vunpack.c.h.b16 %v599
        %v1056 = vunpack.c.l.b16 %v600
        %v1057 = vunpack.c.h.b16 %v600
        %v1058 = vunpack.c.l.b16 %v601
        %v1059 = vunpack.c.h.b16 %v601
        %v1060 = vunpack.c.l.b16 %v602
        %v1061 = vunpack.c.h.b16 %v602
        %v1062 = vunpack.c.l.b16 %v603
        %v1063 = vunpack.c.h.b16 %v603
        %v1064 = vunpack.c.l.b16 %v604
        %v1065 = vunpack.c.h.b16 %v604
        %v1066 = vunpack.c.l.b16 %v605
        %v1067 = vunpack.c.h.b16 %v605
        %v1068 = vunpack.c.l.b16 %v606
        %v1069 = vunpack.c.h.b16 %v606
        %v1070 = vunpack.c.l.b16 %v607
        %v1071 = vunpack.c.h.b16 %v607
        %v1072 = vunpack.c.l.b16 %v608
        %v1073 = vunpack.c.h.b16 %v608
        %v1074 = vunpack.c.l.b16 %v609
        %v1075 = vunpack.c.h.b16 %v609
        %v1076 = vunpack.c.l.b16 %v610
        %v1077 = vunpack.c.h.b16 %v610
        %v1078 = vunpack.c.l.b16 %v611
        %v1079 = vunpack.c.h.b16 %v611
        %v1080 = vunpack.c.l.b16 %v612
        %v1081 = vunpack.c.h.b16 %v612
        %v1082 = vunpack.c.l.b16 %v613
        %v1083 = vunpack.c.h.b16 %v613
        %v1084 = vpack.c.b16 %v964, %v956
        %v1085 = vpack.c.b16 %v965, %v957
        %v1086 = vpack.c.b16 %v966, %v958
        %v1087 = vpack.c.b16 %v967, %v959
        %v1088 = vpack.c.b16 %v968, %v960
        %v1089 = vpack.c.b16 %v969, %v961
        %v1090 = vpack.c.b16 %v970, %v962
        %v1091 = vpack.c.b16 %v971, %v963
        %v1092 = vpack.c.b16 %v980, %v972
        %v1093 = vpack.c.b16 %v981, %v973
        %v1094 = vpack.c.b16 %v982, %v974
        %v1095 = vpack.c.b16 %v983, %v975
        %v1096 = vpack.c.b16 %v984, %v976
        %v1097 = vpack.c.b16 %v985, %v977
        %v1098 = vpack.c.b16 %v986, %v978
        %v1099 = vpack.c.b16 %v987, %v979
        %v1100 = vpack.c.b16 %v996, %v988
        %v1101 = vpack.c.b16 %v997, %v989
        %v1102 = vpack.c.b16 %v998, %v990
        %v1103 = vpack.c.b16 %v999, %v991
        %v1104 = vpack.c.b16 %v1000, %v992
        %v1105 = vpack.c.b16 %v1001, %v993
        %v1106 = vpack.c.b16 %v1002, %v994
        %v1107 = vpack.c.b16 %v1003, %v995
        %v1108 = vpack.c.b16 %v1012, %v1004
        %v1109 = vpack.c.b16 %v1013, %v1005
        %v1110 = vpack.c.b16 %v1014, %v1006
        %v1111 = vpack.c.b16 %v1015, %v1007
        %v1112 = vpack.c.b16 %v1016, %v1008
        %v1113 = vpack.c.b16 %v1017, %v1009
        %v1114 = vpack.c.b16 %v1018, %v1010
        %v1115 = vpack.c.b16 %v1019, %v1011
        %v1116 = vpack.c.b16 %v1028, %v1020
        %v1117 = vpack.c.b16 %v1029, %v1021
        %v1118 = vpack.c.b16 %v1030, %v1022
        %v1119 = vpack.c.b16 %v1031, %v1023
        %v1120 = vpack.c.b16 %v1032, %v1024
        %v1121 = vpack.c.b16 %v1033, %v1025
        %v1122 = vpack.c.b16 %v1034, %v1026
        %v1123 = vpack.c.b16 %v1035, %v1027
        %v1124 = vpack.c.b16 %v1044, %v1036
        %v1125 = vpack.c.b16 %v1045, %v1037
        %v1126 = vpack.c.b16 %v1046, %v1038
        %v1127 = vpack.c.b16 %v1047, %v1039
        %v1128 = vpack.c.b16 %v1048, %v1040
        %v1129 = vpack.c.b16 %v1049, %v1041
        %v1130 = vpack.c.b16 %v1050, %v1042
        %v1131 = vpack.c.b16 %v1051, %v1043
        %v1132 = vpack.c.b16 %v1060, %v1052
        %v1133 = vpack.c.b16 %v1061, %v1053
        %v1134 = vpack.c.b16 %v1062, %v1054
        %v1135 = vpack.c.b16 %v1063, %v1055
        %v1136 = vpack.c.b16 %v1064, %v1056
        %v1137 = vpack.c.b16 %v1065, %v1057
        %v1138 = vpack.c.b16 %v1066, %v1058
        %v1139 = vpack.c.b16 %v1067, %v1059
        %v1140 = vpack.c.b16 %v1076, %v1068
        %v1141 = vpack.c.b16 %v1077, %v1069
        %v1142 = vpack.c.b16 %v1078, %v1070
        %v1143 = vpack.c.b16 %v1079, %v1071
        %v1144 = vpack.c.b16 %v1080, %v1072
        %v1145 = vpack.c.b16 %v1081, %v1073
        %v1146 = vpack.c.b16 %v1082, %v1074
        %v1147 = vpack.c.b16 %v1083, %v1075
        %v1468 = vunpack.c.l.b16 %v614
        %v1469 = vunpack.c.h.b16 %v614
        %v1470 = vunpack.c.l.b16 %v615
        %v1471 = vunpack.c.h.b16 %v615
        %v1472 = vunpack.c.l.b16 %v616
        %v1473 = vunpack.c.h.b16 %v616
        %v1474 = vunpack.c.l.b16 %v617
        %v1475 = vunpack.c.h.b16 %v617
        %v1476 = vunpack.c.l.b16 %v618
        %v1477 = vunpack.c.h.b16 %v618
        %v1478 = vunpack.c.l.b16 %v619
        %v1479 = vunpack.c.h.b16 %v619
        %v1480 = vunpack.c.l.b16 %v620
        %v1481 = vunpack.c.h.b16 %v620
        %v1482 = vunpack.c.l.b16 %v621
        %v1483 = vunpack.c.h.b16 %v621
        %v1484 = vunpack.c.l.b16 %v622
        %v1485 = vunpack.c.h.b16 %v622
        %v1486 = vunpack.c.l.b16 %v623
        %v1487 = vunpack.c.h.b16 %v623
        %v1488 = vunpack.c.l.b16 %v624
        %v1489 = vunpack.c.h.b16 %v624
        %v1490 = vunpack.c.l.b16 %v625
        %v1491 = vunpack.c.h.b16 %v625
        %v1492 = vunpack.c.l.b16 %v626
        %v1493 = vunpack.c.h.b16 %v626
        %v1494 = vunpack.c.l.b16 %v627
        %v1495 = vunpack.c.h.b16 %v627
        %v1496 = vunpack.c.l.b16 %v628
        %v1497 = vunpack.c.h.b16 %v628
        %v1498 = vunpack.c.l.b16 %v629
        %v1499 = vunpack.c.h.b16 %v629
        %v1500 = vunpack.c.l.b16 %v630
        %v1501 = vunpack.c.h.b16 %v630
        %v1502 = vunpack.c.l.b16 %v631
        %v1503 = vunpack.c.h.b16 %v631
        %v1504 = vunpack.c.l.b16 %v632
        %v1505 = vunpack.c.h.b16 %v632
        %v1506 = vunpack.c.l.b16 %v633
        %v1507 = vunpack.c.h.b16 %v633
        %v1508 = vunpack.c.l.b16 %v634
        %v1509 = vunpack.c.h.b16 %v634
        %v1510 = vunpack.c.l.b16 %v635
        %v1511 = vunpack.c.h.b16 %v635
        %v1512 = vunpack.c.l.b16 %v636
        %v1513 = vunpack.c.h.b16 %v636
        %v1514 = vunpack.c.l.b16 %v637
        %v1515 = vunpack.c.h.b16 %v637
        %v1516 = vunpack.c.l.b16 %v638
        %v1517 = vunpack.c.h.b16 %v638
        %v1518 = vunpack.c.l.b16 %v639
        %v1519 = vunpack.c.h.b16 %v639
        %v1520 = vunpack.c.l.b16 %v640
        %v1521 = vunpack.c.h.b16 %v640
        %v1522 = vunpack.c.l.b16 %v641
        %v1523 = vunpack.c.h.b16 %v641
        %v1524 = vunpack.c.l.b16 %v642
        %v1525 = vunpack.c.h.b16 %v642
        %v1526 = vunpack.c.l.b16 %v643
        %v1527 = vunpack.c.h.b16 %v643
        %v1528 = vunpack.c.l.b16 %v644
        %v1529 = vunpack.c.h.b16 %v644
        %v1530 = vunpack.c.l.b16 %v645
        %v1531 = vunpack.c.h.b16 %v645
        %v1532 = vunpack.c.l.b16 %v646
        %v1533 = vunpack.c.h.b16 %v646
        %v1534 = vunpack.c.l.b16 %v647
        %v1535 = vunpack.c.h.b16 %v647
        %v1536 = vunpack.c.l.b16 %v648
        %v1537 = vunpack.c.h.b16 %v648
        %v1538 = vunpack.c.l.b16 %v649
        %v1539 = vunpack.c.h.b16 %v649
        %v1540 = vunpack.c.l.b16 %v650
        %v1541 = vunpack.c.h.b16 %v650
        %v1542 = vunpack.c.l.b16 %v651
        %v1543 = vunpack.c.h.b16 %v651
        %v1544 = vunpack.c.l.b16 %v652
        %v1545 = vunpack.c.h.b16 %v652
        %v1546 = vunpack.c.l.b16 %v653
        %v1547 = vunpack.c.h.b16 %v653
        %v1548 = vunpack.c.l.b16 %v654
        %v1549 = vunpack.c.h.b16 %v654
        %v1550 = vunpack.c.l.b16 %v655
        %v1551 = vunpack.c.h.b16 %v655
        %v1552 = vunpack.c.l.b16 %v656
        %v1553 = vunpack.c.h.b16 %v656
        %v1554 = vunpack.c.l.b16 %v657
        %v1555 = vunpack.c.h.b16 %v657
        %v1556 = vunpack.c.l.b16 %v658
        %v1557 = vunpack.c.h.b16 %v658
        %v1558 = vunpack.c.l.b16 %v659
        %v1559 = vunpack.c.h.b16 %v659
        %v1560 = vunpack.c.l.b16 %v660
        %v1561 = vunpack.c.h.b16 %v660
        %v1562 = vunpack.c.l.b16 %v661
        %v1563 = vunpack.c.h.b16 %v661
        %v1564 = vunpack.c.l.b16 %v662
        %v1565 = vunpack.c.h.b16 %v662
        %v1566 = vunpack.c.l.b16 %v663
        %v1567 = vunpack.c.h.b16 %v663
        %v1568 = vunpack.c.l.b16 %v664
        %v1569 = vunpack.c.h.b16 %v664
        %v1570 = vunpack.c.l.b16 %v665
        %v1571 = vunpack.c.h.b16 %v665
        %v1572 = vunpack.c.l.b16 %v666
        %v1573 = vunpack.c.h.b16 %v666
        %v1574 = vunpack.c.l.b16 %v667
        %v1575 = vunpack.c.h.b16 %v667
        %v1576 = vunpack.c.l.b16 %v668
        %v1577 = vunpack.c.h.b16 %v668
        %v1578 = vunpack.c.l.b16 %v669
        %v1579 = vunpack.c.h.b16 %v669
        %v1580 = vunpack.c.l.b16 %v670
        %v1581 = vunpack.c.h.b16 %v670
        %v1582 = vunpack.c.l.b16 %v671
        %v1583 = vunpack.c.h.b16 %v671
        %v1584 = vunpack.c.l.b16 %v672
        %v1585 = vunpack.c.h.b16 %v672
        %v1586 = vunpack.c.l.b16 %v673
        %v1587 = vunpack.c.h.b16 %v673
        %v1588 = vunpack.c.l.b16 %v674
        %v1589 = vunpack.c.h.b16 %v674
        %v1590 = vunpack.c.l.b16 %v675
        %v1591 = vunpack.c.h.b16 %v675
        %v1592 = vunpack.c.l.b16 %v676
        %v1593 = vunpack.c.h.b16 %v676
        %v1594 = vunpack.c.l.b16 %v677
        %v1595 = vunpack.c.h.b16 %v677
        %v1596 = vunpack.c.l.b16 %v678
        %v1597 = vunpack.c.h.b16 %v678
        %v1598 = vunpack.c.l.b16 %v679
        %v1599 = vunpack.c.h.b16 %v679
        %v1600 = vunpack.c.l.b16 %v680
        %v1601 = vunpack.c.h.b16 %v680
        %v1602 = vunpack.c.l.b16 %v681
        %v1603 = vunpack.c.h.b16 %v681
        %v1604 = vunpack.c.l.b16 %v682
        %v1605 = vunpack.c.h.b16 %v682
        %v1606 = vunpack.c.l.b16 %v683
        %v1607 = vunpack.c.h.b16 %v683
        %v1608 = vunpack.c.l.b16 %v684
        %v1609 = vunpack.c.h.b16 %v684
        %v1610 = vunpack.c.l.b16 %v685
        %v1611 = vunpack.c.h.b16 %v685
        %v1612 = vunpack.c.l.b16 %v686
        %v1613 = vunpack.c.h.b16 %v686
        %v1614 = vunpack.c.l.b16 %v687
        %v1615 = vunpack.c.h.b16 %v687
        %v1616 = vunpack.c.l.b16 %v688
        %v1617 = vunpack.c.h.b16 %v688
        %v1618 = vunpack.c.l.b16 %v689
        %v1619 = vunpack.c.h.b16 %v689
        %v1620 = vunpack.c.l.b16 %v690
        %v1621 = vunpack.c.h.b16 %v690
        %v1622 = vunpack.c.l.b16 %v691
        %v1623 = vunpack.c.h.b16 %v691
        %v1624 = vunpack.c.l.b16 %v692
        %v1625 = vunpack.c.h.b16 %v692
        %v1626 = vunpack.c.l.b16 %v693
        %v1627 = vunpack.c.h.b16 %v693
        %v1628 = vunpack.c.l.b16 %v694
        %v1629 = vunpack.c.h.b16 %v694
        %v1630 = vunpack.c.l.b16 %v695
        %v1631 = vunpack.c.h.b16 %v695
        %v1632 = vunpack.c.l.b16 %v696
        %v1633 = vunpack.c.h.b16 %v696
        %v1634 = vunpack.c.l.b16 %v697
        %v1635 = vunpack.c.h.b16 %v697
        %v1636 = vunpack.c.l.b16 %v698
        %v1637 = vunpack.c.h.b16 %v698
        %v1638 = vunpack.c.l.b16 %v699
        %v1639 = vunpack.c.h.b16 %v699
        %v1640 = vunpack.c.l.b16 %v700
        %v1641 = vunpack.c.h.b16 %v700
        %v1642 = vunpack.c.l.b16 %v701
        %v1643 = vunpack.c.h.b16 %v701
        %v1644 = vunpack.c.l.b16 %v702
        %v1645 = vunpack.c.h.b16 %v702
        %v1646 = vunpack.c.l.b16 %v703
        %v1647 = vunpack.c.h.b16 %v703
        %v1648 = vunpack.c.l.b16 %v704
        %v1649 = vunpack.c.h.b16 %v704
        %v1650 = vunpack.c.l.b16 %v705
        %v1651 = vunpack.c.h.b16 %v705
        %v1652 = vunpack.c.l.b16 %v706
        %v1653 = vunpack.c.h.b16 %v706
        %v1654 = vunpack.c.l.b16 %v707
        %v1655 = vunpack.c.h.b16 %v707
        %v1656 = vunpack.c.l.b16 %v708
        %v1657 = vunpack.c.h.b16 %v708
        %v1658 = vunpack.c.l.b16 %v709
        %v1659 = vunpack.c.h.b16 %v709
        %v1660 = vunpack.c.l.b16 %v710
        %v1661 = vunpack.c.h.b16 %v710
        %v1662 = vunpack.c.l.b16 %v711
        %v1663 = vunpack.c.h.b16 %v711
        %v1664 = vunpack.c.l.b16 %v712
        %v1665 = vunpack.c.h.b16 %v712
        %v1666 = vunpack.c.l.b16 %v713
        %v1667 = vunpack.c.h.b16 %v713
        %v1668 = vunpack.c.l.b16 %v714
        %v1669 = vunpack.c.h.b16 %v714
        %v1670 = vunpack.c.l.b16 %v715
        %v1671 = vunpack.c.h.b16 %v715
        %v1672 = vunpack.c.l.b16 %v716
        %v1673 = vunpack.c.h.b16 %v716
        %v1674 = vunpack.c.l.b16 %v717
        %v1675 = vunpack.c.h.b16 %v717
        %v1676 = vunpack.c.l.b16 %v718
        %v1677 = vunpack.c.h.b16 %v718
        %v1678 = vunpack.c.l.b16 %v719
        %v1679 = vunpack.c.h.b16 %v719
        %v1680 = vunpack.c.l.b16 %v720
        %v1681 = vunpack.c.h.b16 %v720
        %v1682 = vunpack.c.l.b16 %v721
        %v1683 = vunpack.c.h.b16 %v721
        %v1684 = vunpack.c.l.b16 %v722
        %v1685 = vunpack.c.h.b16 %v722
        %v1686 = vunpack.c.l.b16 %v723
        %v1687 = vunpack.c.h.b16 %v723
        %v1688 = vunpack.c.l.b16 %v724
        %v1689 = vunpack.c.h.b16 %v724
        %v1690 = vunpack.c.l.b16 %v725
        %v1691 = vunpack.c.h.b16 %v725
        %v1692 = vunpack.c.l.b16 %v726
        %v1693 = vunpack.c.h.b16 %v726
        %v1694 = vunpack.c.l.b16 %v727
        %v1695 = vunpack.c.h.b16 %v727
        %v1696 = vunpack.c.l.b16 %v728
        %v1697 = vunpack.c.h.b16 %v728
        %v1698 = vunpack.c.l.b16 %v729
        %v1699 = vunpack.c.h.b16 %v729
        %v1700 = vunpack.c.l.b16 %v730
        %v1701 = vunpack.c.h.b16 %v730
        %v1702 = vunpack.c.l.b16 %v731
        %v1703 = vunpack.c.h.b16 %v731
        %v1704 = vunpack.c.l.b16 %v732
        %v1705 = vunpack.c.h.b16 %v732
        %v1706 = vunpack.c.l.b16 %v733
        %v1707 = vunpack.c.h.b16 %v733
        %v1708 = vunpack.c.l.b16 %v734
        %v1709 = vunpack.c.h.b16 %v734
        %v1710 = vunpack.c.l.b16 %v735
        %v1711 = vunpack.c.h.b16 %v735
        %v1712 = vunpack.c.l.b16 %v736
        %v1713 = vunpack.c.h.b16 %v736
        %v1714 = vunpack.c.l.b16 %v737
        %v1715 = vunpack.c.h.b16 %v737
        %v1716 = vunpack.c.l.b16 %v738
        %v1717 = vunpack.c.h.b16 %v738
        %v1718 = vunpack.c.l.b16 %v739
        %v1719 = vunpack.c.h.b16 %v739
        %v1720 = vunpack.c.l.b16 %v740
        %v1721 = vunpack.c.h.b16 %v740
        %v1722 = vunpack.c.l.b16 %v741
        %v1723 = vunpack.c.h.b16 %v741
        %v1724 = vunpack.c.l.b16 %v742
        %v1725 = vunpack.c.h.b16 %v742
        %v1726 = vunpack.c.l.b16 %v743
        %v1727 = vunpack.c.h.b16 %v743
        %v1728 = vunpack.c.l.b16 %v744
        %v1729 = vunpack.c.h.b16 %v744
        %v1730 = vunpack.c.l.b16 %v745
        %v1731 = vunpack.c.h.b16 %v745
        %v1732 = vunpack.c.l.b16 %v746
        %v1733 = vunpack.c.h.b16 %v746
        %v1734 = vunpack.c.l.b16 %v747
        %v1735 = vunpack.c.h.b16 %v747
        %v1736 = vunpack.c.l.b16 %v748
        %v1737 = vunpack.c.h.b16 %v748
        %v1738 = vunpack.c.l.b16 %v749
        %v1739 = vunpack.c.h.b16 %v749
        %v1740 = vunpack.c.l.b16 %v750
        %v1741 = vunpack.c.h.b16 %v750
        %v1742 = vunpack.c.l.b16 %v751
        %v1743 = vunpack.c.h.b16 %v751
        %v1744 = vunpack.c.l.b16 %v752
        %v1745 = vunpack.c.h.b16 %v752
        %v1746 = vunpack.c.l.b16 %v753
        %v1747 = vunpack.c.h.b16 %v753
        %v1748 = vunpack.c.l.b16 %v754
        %v1749 = vunpack.c.h.b16 %v754
        %v1750 = vunpack.c.l.b16 %v755
        %v1751 = vunpack.c.h.b16 %v755
        %v1752 = vunpack.c.l.b16 %v756
        %v1753 = vunpack.c.h.b16 %v756
        %v1754 = vunpack.c.l.b16 %v757
        %v1755 = vunpack.c.h.b16 %v757
        %v1756 = vunpack.c.l.b16 %v758
        %v1757 = vunpack.c.h.b16 %v758
        %v1758 = vunpack.c.l.b16 %v759
        %v1759 = vunpack.c.h.b16 %v759
        %v1760 = vunpack.c.l.b16 %v760
        %v1761 = vunpack.c.h.b16 %v760
        %v1762 = vunpack.c.l.b16 %v761
        %v1763 = vunpack.c.h.b16 %v761
        %v1764 = vunpack.c.l.b16 %v762
        %v1765 = vunpack.c.h.b16 %v762
        %v1766 = vunpack.c.l.b16 %v763
        %v1767 = vunpack.c.h.b16 %v763
        %v1768 = vunpack.c.l.b16 %v764
        %v1769 = vunpack.c.h.b16 %v764
        %v1770 = vunpack.c.l.b16 %v765
        %v1771 = vunpack.c.h.b16 %v765
        %v1772 = vunpack.c.l.b16 %v766
        %v1773 = vunpack.c.h.b16 %v766
        %v1774 = vunpack.c.l.b16 %v767
        %v1775 = vunpack.c.h.b16 %v767
        %v1776 = vunpack.c.l.b16 %v768
        %v1777 = vunpack.c.h.b16 %v768
        %v1778 = vunpack.c.l.b16 %v769
        %v1779 = vunpack.c.h.b16 %v769
        %v1780 = vunpack.c.l.b16 %v770
        %v1781 = vunpack.c.h.b16 %v770
        %v1782 = vunpack.c.l.b16 %v771
        %v1783 = vunpack.c.h.b16 %v771
        %v1784 = vunpack.c.l.b16 %v772
        %v1785 = vunpack.c.h.b16 %v772
        %v1786 = vunpack.c.l.b16 %v773
        %v1787 = vunpack.c.h.b16 %v773
        %v1788 = vunpack.c.l.b16 %v774
        %v1789 = vunpack.c.h.b16 %v774
        %v1790 = vunpack.c.l.b16 %v775
        %v1791 = vunpack.c.h.b16 %v775
        %v1792 = vunpack.c.l.b16 %v776
        %v1793 = vunpack.c.h.b16 %v776
        %v1794 = vunpack.c.l.b16 %v777
        %v1795 = vunpack.c.h.b16 %v777
        %v1796 = vunpack.c.l.b16 %v778
        %v1797 = vunpack.c.h.b16 %v778
        %v1798 = vunpack.c.l.b16 %v779
        %v1799 = vunpack.c.h.b16 %v779
        %v1800 = vunpack.c.l.b16 %v780
        %v1801 = vunpack.c.h.b16 %v780
        %v1802 = vunpack.c.l.b16 %v781
        %v1803 = vunpack.c.h.b16 %v781
        %v1804 = vunpack.c.l.b16 %v782
        %v1805 = vunpack.c.h.b16 %v782
        %v1806 = vunpack.c.l.b16 %v783
        %v1807 = vunpack.c.h.b16 %v783
        %v1808 = vunpack.c.l.b16 %v784
        %v1809 = vunpack.c.h.b16 %v784
        %v1810 = vunpack.c.l.b16 %v785
        %v1811 = vunpack.c.h.b16 %v785
        %v1812 = vunpack.c.l.b16 %v786
        %v1813 = vunpack.c.h.b16 %v786
        %v1814 = vunpack.c.l.b16 %v787
        %v1815 = vunpack.c.h.b16 %v787
        %v1816 = vunpack.c.l.b16 %v788
        %v1817 = vunpack.c.h.b16 %v788
        %v1818 = vunpack.c.l.b16 %v789
        %v1819 = vunpack.c.h.b16 %v789
        %v1820 = vunpack.c.l.b16 %v790
        %v1821 = vunpack.c.h.b16 %v790
        %v1822 = vunpack.c.l.b16 %v791
        %v1823 = vunpack.c.h.b16 %v791
        %v1824 = vunpack.c.l.b16 %v792
        %v1825 = vunpack.c.h.b16 %v792
        %v1826 = vunpack.c.l.b16 %v793
        %v1827 = vunpack.c.h.b16 %v793
        %v1828 = vunpack.c.l.b16 %v794
        %v1829 = vunpack.c.h.b16 %v794
        %v1830 = vunpack.c.l.b16 %v795
        %v1831 = vunpack.c.h.b16 %v795
        %v1832 = vunpack.c.l.b16 %v796
        %v1833 = vunpack.c.h.b16 %v796
        %v1834 = vunpack.c.l.b16 %v797
        %v1835 = vunpack.c.h.b16 %v797
        %v1836 = vunpack.c.l.b16 %v798
        %v1837 = vunpack.c.h.b16 %v798
        %v1838 = vunpack.c.l.b16 %v799
        %v1839 = vunpack.c.h.b16 %v799
        %v1840 = vunpack.c.l.b16 %v800
        %v1841 = vunpack.c.h.b16 %v800
        %v1842 = vunpack.c.l.b16 %v801
        %v1843 = vunpack.c.h.b16 %v801
        %v1844 = vunpack.c.l.b16 %v802
        %v1845 = vunpack.c.h.b16 %v802
        %v1846 = vunpack.c.l.b16 %v803
        %v1847 = vunpack.c.h.b16 %v803
        %v1848 = vunpack.c.l.b16 %v804
        %v1849 = vunpack.c.h.b16 %v804
        %v1850 = vunpack.c.l.b16 %v805
        %v1851 = vunpack.c.h.b16 %v805
        %v1852 = vunpack.c.l.b16 %v806
        %v1853 = vunpack.c.h.b16 %v806
        %v1854 = vunpack.c.l.b16 %v807
        %v1855 = vunpack.c.h.b16 %v807
        %v1856 = vunpack.c.l.b16 %v808
        %v1857 = vunpack.c.h.b16 %v808
        %v1858 = vunpack.c.l.b16 %v809
        %v1859 = vunpack.c.h.b16 %v809
        %v1860 = vunpack.c.l.b16 %v810
        %v1861 = vunpack.c.h.b16 %v810
        %v1862 = vunpack.c.l.b16 %v811
        %v1863 = vunpack.c.h.b16 %v811
        %v1864 = vunpack.c.l.b16 %v812
        %v1865 = vunpack.c.h.b16 %v812
        %v1866 = vunpack.c.l.b16 %v813
        %v1867 = vunpack.c.h.b16 %v813
        %v1868 = vunpack.c.l.b16 %v814
        %v1869 = vunpack.c.h.b16 %v814
        %v1870 = vunpack.c.l.b16 %v815
        %v1871 = vunpack.c.h.b16 %v815
        %v1872 = vunpack.c.l.b16 %v816
        %v1873 = vunpack.c.h.b16 %v816
        %v1874 = vunpack.c.l.b16 %v817
        %v1875 = vunpack.c.h.b16 %v817
        %v1876 = vunpack.c.l.b16 %v818
        %v1877 = vunpack.c.h.b16 %v818
        %v1878 = vunpack.c.l.b16 %v819
        %v1879 = vunpack.c.h.b16 %v819
        %v1880 = vunpack.c.l.b16 %v820
        %v1881 = vunpack.c.h.b16 %v820
        %v1882 = vunpack.c.l.b16 %v821
        %v1883 = vunpack.c.h.b16 %v821
        %v1884 = vunpack.c.l.b16 %v822
        %v1885 = vunpack.c.h.b16 %v822
        %v1886 = vunpack.c.l.b16 %v823
        %v1887 = vunpack.c.h.b16 %v823
        %v1888 = vunpack.c.l.b16 %v824
        %v1889 = vunpack.c.h.b16 %v824
        %v1890 = vunpack.c.l.b16 %v825
        %v1891 = vunpack.c.h.b16 %v825
        %v1892 = vunpack.c.l.b16 %v826
        %v1893 = vunpack.c.h.b16 %v826
        %v1894 = vunpack.c.l.b16 %v827
        %v1895 = vunpack.c.h.b16 %v827
        %v1896 = vunpack.c.l.b16 %v828
        %v1897 = vunpack.c.h.b16 %v828
        %v1898 = vunpack.c.l.b16 %v829
        %v1899 = vunpack.c.h.b16 %v829
        %v1900 = vunpack.c.l.b16 %v830
        %v1901 = vunpack.c.h.b16 %v830
        %v1902 = vunpack.c.l.b16 %v831
        %v1903 = vunpack.c.h.b16 %v831
        %v1904 = vunpack.c.l.b16 %v832
        %v1905 = vunpack.c.h.b16 %v832
        %v1906 = vunpack.c.l.b16 %v833
        %v1907 = vunpack.c.h.b16 %v833
        %v1908 = vunpack.c.l.b16 %v834
        %v1909 = vunpack.c.h.b16 %v834
        %v1910 = vunpack.c.l.b16 %v835
        %v1911 = vunpack.c.h.b16 %v835
        %v1912 = vunpack.c.l.b16 %v836
        %v1913 = vunpack.c.h.b16 %v836
        %v1914 = vunpack.c.l.b16 %v837
        %v1915 = vunpack.c.h.b16 %v837
        %v1916 = vunpack.c.l.b16 %v838
        %v1917 = vunpack.c.h.b16 %v838
        %v1918 = vunpack.c.l.b16 %v839
        %v1919 = vunpack.c.h.b16 %v839
        %v1920 = vunpack.c.l.b16 %v840
        %v1921 = vunpack.c.h.b16 %v840
        %v1922 = vunpack.c.l.b16 %v841
        %v1923 = vunpack.c.h.b16 %v841
        %v1924 = vunpack.c.l.b16 %v842
        %v1925 = vunpack.c.h.b16 %v842
        %v1926 = vunpack.c.l.b16 %v843
        %v1927 = vunpack.c.h.b16 %v843
        %v1928 = vunpack.c.l.b16 %v844
        %v1929 = vunpack.c.h.b16 %v844
        %v1930 = vunpack.c.l.b16 %v845
        %v1931 = vunpack.c.h.b16 %v845
        %v1932 = vunpack.c.l.b16 %v846
        %v1933 = vunpack.c.h.b16 %v846
        %v1934 = vunpack.c.l.b16 %v847
        %v1935 = vunpack.c.h.b16 %v847
        %v1936 = vunpack.c.l.b16 %v848
        %v1937 = vunpack.c.h.b16 %v848
        %v1938 = vunpack.c.l.b16 %v849
        %v1939 = vunpack.c.h.b16 %v849
        %v1940 = vunpack.c.l.b16 %v850
        %v1941 = vunpack.c.h.b16 %v850
        %v1942 = vunpack.c.l.b16 %v851
        %v1943 = vunpack.c.h.b16 %v851
        %v1944 = vunpack.c.l.b16 %v852
        %v1945 = vunpack.c.h.b16 %v852
        %v1946 = vunpack.c.l.b16 %v853
        %v1947 = vunpack.c.h.b16 %v853
        %v1948 = vunpack.c.l.b16 %v854
        %v1949 = vunpack.c.h.b16 %v854
        %v1950 = vunpack.c.l.b16 %v855
        %v1951 = vunpack.c.h.b16 %v855
        %v1952 = vunpack.c.l.b16 %v856
        %v1953 = vunpack.c.h.b16 %v856
        %v1954 = vunpack.c.l.b16 %v857
        %v1955 = vunpack.c.h.b16 %v857
        %v1956 = vunpack.c.l.b16 %v858
        %v1957 = vunpack.c.h.b16 %v858
        %v1958 = vunpack.c.l.b16 %v859
        %v1959 = vunpack.c.h.b16 %v859
        %v1960 = vunpack.c.l.b16 %v860
        %v1961 = vunpack.c.h.b16 %v860
        %v1962 = vunpack.c.l.b16 %v861
        %v1963 = vunpack.c.h.b16 %v861
        %v1964 = vunpack.c.l.b16 %v862
        %v1965 = vunpack.c.h.b16 %v862
        %v1966 = vunpack.c.l.b16 %v863
        %v1967 = vunpack.c.h.b16 %v863
        %v1968 = vunpack.c.l.b16 %v864
        %v1969 = vunpack.c.h.b16 %v864
        %v1970 = vunpack.c.l.b16 %v865
        %v1971 = vunpack.c.h.b16 %v865
        %v1972 = vunpack.c.l.b16 %v866
        %v1973 = vunpack.c.h.b16 %v866
        %v1974 = vunpack.c.l.b16 %v867
        %v1975 = vunpack.c.h.b16 %v867
        %v1976 = vunpack.c.l.b16 %v868
        %v1977 = vunpack.c.h.b16 %v868
        %v1978 = vunpack.c.l.b16 %v869
        %v1979 = vunpack.c.h.b16 %v869
        %v1980 = vpack.c.b16 %v1472, %v1468
        %v1981 = vpack.c.b16 %v1473, %v1469
        %v1982 = vpack.c.b16 %v1474, %v1470
        %v1983 = vpack.c.b16 %v1475, %v1471
        %v1984 = vpack.c.b16 %v1480, %v1476
        %v1985 = vpack.c.b16 %v1481, %v1477
        %v1986 = vpack.c.b16 %v1482, %v1478
        %v1987 = vpack.c.b16 %v1483, %v1479
        %v1988 = vpack.c.b16 %v1488, %v1484
        %v1989 = vpack.c.b16 %v1489, %v1485
        %v1990 = vpack.c.b16 %v1490, %v1486
        %v1991 = vpack.c.b16 %v1491, %v1487
        %v1992 = vpack.c.b16 %v1496, %v1492
        %v1993 = vpack.c.b16 %v1497, %v1493
        %v1994 = vpack.c.b16 %v1498, %v1494
        %v1995 = vpack.c.b16 %v1499, %v1495
        %v1996 = vpack.c.b16 %v1504, %v1500
        %v1997 = vpack.c.b16 %v1505, %v1501
        %v1998 = vpack.c.b16 %v1506, %v1502
        %v1999 = vpack.c.b16 %v1507, %v1503
        %v2000 = vpack.c.b16 %v1512, %v1508
        %v2001 = vpack.c.b16 %v1513, %v1509
        %v2002 = vpack.c.b16 %v1514, %v1510
        %v2003 = vpack.c.b16 %v1515, %v1511
        %v2004 = vpack.c.b16 %v1520, %v1516
        %v2005 = vpack.c.b16 %v1521, %v1517
        %v2006 = vpack.c.b16 %v1522, %v1518
        %v2007 = vpack.c.b16 %v1523, %v1519
        %v2008 = vpack.c.b16 %v1528, %v1524
        %v2009 = vpack.c.b16 %v1529, %v1525
        %v2010 = vpack.c.b16 %v1530, %v1526
        %v2011 = vpack.c.b16 %v1531, %v1527
        %v2012 = vpack.c.b16 %v1536, %v1532
        %v2013 = vpack.c.b16 %v1537, %v1533
        %v2014 = vpack.c.b16 %v1538, %v1534
        %v2015 = vpack.c.b16 %v1539, %v1535
        %v2016 = vpack.c.b16 %v1544, %v1540
        %v2017 = vpack.c.b16 %v1545, %v1541
        %v2018 = vpack.c.b16 %v1546, %v1542
        %v2019 = vpack.c.b16 %v1547, %v1543
        %v2020 = vpack.c.b16 %v1552, %v1548
        %v2021 = vpack.c.b16 %v1553, %v1549
        %v2022 = vpack.c.b16 %v1554, %v1550
        %v2023 = vpack.c.b16 %v1555, %v1551
        %v2024 = vpack.c.b16 %v1560, %v1556
        %v2025 = vpack.c.b16 %v1561, %v1557
        %v2026 = vpack.c.b16 %v1562, %v1558
        %v2027 = vpack.c.b16 %v1563, %v1559
        %v2028 = vpack.c.b16 %v1568, %v1564
        %v2029 = vpack.c.b16 %v1569, %v1565
        %v2030 = vpack.c.b16 %v1570, %v1566
        %v2031 = vpack.c.b16 %v1571, %v1567
        %v2032 = vpack.c.b16 %v1576, %v1572
        %v2033 = vpack.c.b16 %v1577, %v1573
        %v2034 = vpack.c.b16 %v1578, %v1574
        %v2035 = vpack.c.b16 %v1579, %v1575
        %v2036 = vpack.c.b16 %v1584, %v1580
        %v2037 = vpack.c.b16 %v1585, %v1581
        %v2038 = vpack.c.b16 %v1586, %v1582
        %v2039 = vpack.c.b16 %v1587, %v1583
        %v2040 = vpack.c.b16 %v1592, %v1588
        %v2041 = vpack.c.b16 %v1593, %v1589
        %v2042 = vpack.c.b16 %v1594, %v1590
        %v2043 = vpack.c.b16 %v1595, %v1591
        %v2044 = vpack.c.b16 %v1600, %v1596
        %v2045 = vpack.c.b16 %v1601, %v1597
        %v2046 = vpack.c.b16 %v1602, %v1598
        %v2047 = vpack.c.b16 %v1603, %v1599
        %v2048 = vpack.c.b16 %v1608, %v1604
        %v2049 = vpack.c.b16 %v1609, %v1605
        %v2050 = vpack.c.b16 %v1610, %v1606
        %v2051 = vpack.c.b16 %v1611, %v1607
        %v2052 = vpack.c.b16 %v1616, %v1612
        %v2053 = vpack.c.b16 %v1617, %v1613
        %v2054 = vpack.c.b16 %v1618, %v1614
        %v2055 = vpack.c.b16 %v1619, %v1615
        %v2056 = vpack.c.b16 %v1624, %v1620
        %v2057 = vpack.c.b16 %v1625, %v1621
        %v2058 = vpack.c.b16 %v1626, %v1622
        %v2059 = vpack.c.b16 %v1627, %v1623
        %v2060 = vpack.c.b16 %v1632, %v1628
        %v2061 = vpack.c.b16 %v1633, %v1629
        %v2062 = vpack.c.b16 %v1634, %v1630
        %v2063 = vpack.c.b16 %v1635, %v1631
        %v2064 = vpack.c.b16 %v1640, %v1636
        %v2065 = vpack.c.b16 %v1641, %v1637
        %v2066 = vpack.c.b16 %v1642, %v1638
        %v2067 = vpack.c.b16 %v1643, %v1639
        %v2068 = vpack.c.b16 %v1648, %v1644
        %v2069 = vpack.c.b16 %v1649, %v1645
        %v2070 = vpack.c.b16 %v1650, %v1646
        %v2071 = vpack.c.b16 %v1651, %v1647
        %v2072 = vpack.c.b16 %v1656, %v1652
        %v2073 = vpack.c.b16 %v1657, %v1653
        %v2074 = vpack.c.b16 %v1658, %v1654
        %v2075 = vpack.c.b16 %v1659, %v1655
        %v2076 = vpack.c.b16 %v1664, %v1660
        %v2077 = vpack.c.b16 %v1665, %v1661
        %v2078 = vpack.c.b16 %v1666, %v1662
        %v2079 = vpack.c.b16 %v1667, %v1663
        %v2080 = vpack.c.b16 %v1672, %v1668
        %v2081 = vpack.c.b16 %v1673, %v1669
        %v2082 = vpack.c.b16 %v1674, %v1670
        %v2083 = vpack.c.b16 %v1675, %v1671
        %v2084 = vpack.c.b16 %v1680, %v1676
        %v2085 = vpack.c.b16 %v1681, %v1677
        %v2086 = vpack.c.b16 %v1682, %v1678
        %v2087 = vpack.c.b16 %v1683, %v1679
        %v2088 = vpack.c.b16 %v1688, %v1684
        %v2089 = vpack.c.b16 %v1689, %v1685
        %v2090 = vpack.c.b16 %v1690, %v1686
        %v2091 = vpack.c.b16 %v1691, %v1687
        %v2092 = vpack.c.b16 %v1696, %v1692
        %v2093 = vpack.c.b16 %v1697, %v1693
        %v2094 = vpack.c.b16 %v1698, %v1694
        %v2095 = vpack.c.b16 %v1699, %v1695
        %v2096 = vpack.c.b16 %v1704, %v1700
        %v2097 = vpack.c.b16 %v1705, %v1701
        %v2098 = vpack.c.b16 %v1706, %v1702
        %v2099 = vpack.c.b16 %v1707, %v1703
        %v2100 = vpack.c.b16 %v1712, %v1708
        %v2101 = vpack.c.b16 %v1713, %v1709
        %v2102 = vpack.c.b16 %v1714, %v1710
        %v2103 = vpack.c.b16 %v1715, %v1711
        %v2104 = vpack.c.b16 %v1720, %v1716
        %v2105 = vpack.c.b16 %v1721, %v1717
        %v2106 = vpack.c.b16 %v1722, %v1718
        %v2107 = vpack.c.b16 %v1723, %v1719
        %v2108 = vpack.c.b16 %v1728, %v1724
        %v2109 = vpack.c.b16 %v1729, %v1725
        %v2110 = vpack.c.b16 %v1730, %v1726
        %v2111 = vpack.c.b16 %v1731, %v1727
        %v2112 = vpack.c.b16 %v1736, %v1732
        %v2113 = vpack.c.b16 %v1737, %v1733
        %v2114 = vpack.c.b16 %v1738, %v1734
        %v2115 = vpack.c.b16 %v1739, %v1735
        %v2116 = vpack.c.b16 %v1744, %v1740
        %v2117 = vpack.c.b16 %v1745, %v1741
        %v2118 = vpack.c.b16 %v1746, %v1742
        %v2119 = vpack.c.b16 %v1747, %v1743
        %v2120 = vpack.c.b16 %v1752, %v1748
        %v2121 = vpack.c.b16 %v1753, %v1749
        %v2122 = vpack.c.b16 %v1754, %v1750
        %v2123 = vpack.c.b16 %v1755, %v1751
        %v2124 = vpack.c.b16 %v1760, %v1756
        %v2125 = vpack.c.b16 %v1761, %v1757
        %v2126 = vpack.c.b16 %v1762, %v1758
        %v2127 = vpack.c.b16 %v1763, %v1759
        %v2128 = vpack.c.b16 %v1768, %v1764
        %v2129 = vpack.c.b16 %v1769, %v1765
        %v2130 = vpack.c.b16 %v1770, %v1766
        %v2131 = vpack.c.b16 %v1771, %v1767
        %v2132 = vpack.c.b16 %v1776, %v1772
        %v2133 = vpack.c.b16 %v1777, %v1773
        %v2134 = vpack.c.b16 %v1778, %v1774
        %v2135 = vpack.c.b16 %v1779, %v1775
        %v2136 = vpack.c.b16 %v1784, %v1780
        %v2137 = vpack.c.b16 %v1785, %v1781
        %v2138 = vpack.c.b16 %v1786, %v1782
        %v2139 = vpack.c.b16 %v1787, %v1783
        %v2140 = vpack.c.b16 %v1792, %v1788
        %v2141 = vpack.c.b16 %v1793, %v1789
        %v2142 = vpack.c.b16 %v1794, %v1790
        %v2143 = vpack.c.b16 %v1795, %v1791
        %v2144 = vpack.c.b16 %v1800, %v1796
        %v2145 = vpack.c.b16 %v1801, %v1797
        %v2146 = vpack.c.b16 %v1802, %v1798
        %v2147 = vpack.c.b16 %v1803, %v1799
        %v2148 = vpack.c.b16 %v1808, %v1804
        %v2149 = vpack.c.b16 %v1809, %v1805
        %v2150 = vpack.c.b16 %v1810, %v1806
        %v2151 = vpack.c.b16 %v1811, %v1807
        %v2152 = vpack.c.b16 %v1816, %v1812
        %v2153 = vpack.c.b16 %v1817, %v1813
        %v2154 = vpack.c.b16 %v1818, %v1814
        %v2155 = vpack.c.b16 %v1819, %v1815
        %v2156 = vpack.c.b16 %v1824, %v1820
        %v2157 = vpack.c.b16 %v1825, %v1821
        %v2158 = vpack.c.b16 %v1826, %v1822
        %v2159 = vpack.c.b16 %v1827, %v1823
        %v2160 = vpack.c.b16 %v1832, %v1828
        %v2161 = vpack.c.b16 %v1833, %v1829
        %v2162 = vpack.c.b16 %v1834, %v1830
        %v2163 = vpack.c.b16 %v1835, %v1831
        %v2164 = vpack.c.b16 %v1840, %v1836
        %v2165 = vpack.c.b16 %v1841, %v1837
        %v2166 = vpack.c.b16 %v1842, %v1838
        %v2167 = vpack.c.b16 %v1843, %v1839
        %v2168 = vpack.c.b16 %v1848, %v1844
        %v2169 = vpack.c.b16 %v1849, %v1845
        %v2170 = vpack.c.b16 %v1850, %v1846
        %v2171 = vpack.c.b16 %v1851, %v1847
        %v2172 = vpack.c.b16 %v1856, %v1852
        %v2173 = vpack.c.b16 %v1857, %v1853
        %v2174 = vpack.c.b16 %v1858, %v1854
        %v2175 = vpack.c.b16 %v1859, %v1855
        %v2176 = vpack.c.b16 %v1864, %v1860
        %v2177 = vpack.c.b16 %v1865, %v1861
        %v2178 = vpack.c.b16 %v1866, %v1862
        %v2179 = vpack.c.b16 %v1867, %v1863
        %v2180 = vpack.c.b16 %v1872, %v1868
        %v2181 = vpack.c.b16 %v1873, %v1869
        %v2182 = vpack.c.b16 %v1874, %v1870
        %v2183 = vpack.c.b16 %v1875, %v1871
        %v2184 = vpack.c.b16 %v1880, %v1876
        %v2185 = vpack.c.b16 %v1881, %v1877
        %v2186 = vpack.c.b16 %v1882, %v1878
        %v2187 = vpack.c.b16 %v1883, %v1879
        %v2188 = vpack.c.b16 %v1888, %v1884
        %v2189 = vpack.c.b16 %v1889, %v1885
        %v2190 = vpack.c.b16 %v1890, %v1886
        %v2191 = vpack.c.b16 %v1891, %v1887
        %v2192 = vpack.c.b16 %v1896, %v1892
        %v2193 = vpack.c.b16 %v1897, %v1893
        %v2194 = vpack.c.b16 %v1898, %v1894
        %v2195 = vpack.c.b16 %v1899, %v1895
        %v2196 = vpack.c.b16 %v1904, %v1900
        %v2197 = vpack.c.b16 %v1905, %v1901
        %v2198 = vpack.c.b16 %v1906, %v1902
        %v2199 = vpack.c.b16 %v1907, %v1903
        %v2200 = vpack.c.b16 %v1912, %v1908
        %v2201 = vpack.c.b16 %v1913, %v1909
        %v2202 = vpack.c.b16 %v1914, %v1910
        %v2203 = vpack.c.b16 %v1915, %v1911
        %v2204 = vpack.c.b16 %v1920, %v1916
        %v2205 = vpack.c.b16 %v1921, %v1917
        %v2206 = vpack.c.b16 %v1922, %v1918
        %v2207 = vpack.c.b16 %v1923, %v1919
        %v2208 = vpack.c.b16 %v1928, %v1924
        %v2209 = vpack.c.b16 %v1929, %v1925
        %v2210 = vpack.c.b16 %v1930, %v1926
        %v2211 = vpack.c.b16 %v1931, %v1927
        %v2212 = vpack.c.b16 %v1936, %v1932
        %v2213 = vpack.c.b16 %v1937, %v1933
        %v2214 = vpack.c.b16 %v1938, %v1934
        %v2215 = vpack.c.b16 %v1939, %v1935
        %v2216 = vpack.c.b16 %v1944, %v1940
        %v2217 = vpack.c.b16 %v1945, %v1941
        %v2218 = vpack.c.b16 %v1946, %v1942
        %v2219 = vpack.c.b16 %v1947, %v1943
        %v2220 = vpack.c.b16 %v1952, %v1948
        %v2221 = vpack.c.b16 %v1953, %v1949
        %v2222 = vpack.c.b16 %v1954, %v1950
        %v2223 = vpack.c.b16 %v1955, %v1951
        %v2224 = vpack.c.b16 %v1960, %v1956
        %v2225 = vpack.c.b16 %v1961, %v1957
        %v2226 = vpack.c.b16 %v1962, %v1958
        %v2227 = vpack.c.b16 %v1963, %v1959
        %v2228 = vpack.c.b16 %v1968, %v1964
        %v2229 = vpack.c.b16 %v1969, %v1965
        %v2230 = vpack.c.b16 %v1970, %v1966
        %v2231 = vpack.c.b16 %v1971, %v1967
        %v2232 = vpack.c.b16 %v1976, %v1972
        %v2233 = vpack.c.b16 %v1977, %v1973
        %v2234 = vpack.c.b16 %v1978, %v1974
        %v2235 = vpack.c.b16 %v1979, %v1975
        %2492 = vmatprep.subr.bf16.mxu0 %v1981
        %2493 = vmatpush1.bf16.msra.mxu0 %v1980
        %2494 = vmatprep.subr.bf16.mxu0 %v1985
        %2495 = vmatpush1.bf16.msra.mxu0 %v1984
        %2496 = vmatprep.subr.bf16.mxu0 %v1989
        %2497 = vmatpush1.bf16.msra.mxu0 %v1988
        %2498 = vmatprep.subr.bf16.mxu0 %v1993
        %2499 = vmatpush1.bf16.msra.mxu0 %v1992
        %2500 = vmatprep.subr.bf16.mxu0 %v1997
        %2501 = vmatpush1.bf16.msra.mxu0 %v1996
        %2502 = vmatprep.subr.bf16.mxu0 %v2001
        %2503 = vmatpush1.bf16.msra.mxu0 %v2000
        %2504 = vmatprep.subr.bf16.mxu0 %v2005
        %2505 = vmatpush1.bf16.msra.mxu0 %v2004
        %2506 = vmatprep.subr.bf16.mxu0 %v2009
        %2507 = vmatpush1.bf16.msra.mxu0 %v2008
        %2508 = vmatprep.subr.bf16.mxu0 %v2013
        %2509 = vmatpush1.bf16.msra.mxu0 %v2012
        %2510 = vmatprep.subr.bf16.mxu0 %v2017
        %2511 = vmatpush1.bf16.msra.mxu0 %v2016
        %2512 = vmatprep.subr.bf16.mxu0 %v2021
        %2513 = vmatpush1.bf16.msra.mxu0 %v2020
        %2514 = vmatprep.subr.bf16.mxu0 %v2025
        %2515 = vmatpush1.bf16.msra.mxu0 %v2024
        %2516 = vmatprep.subr.bf16.mxu0 %v2029
        %2517 = vmatpush1.bf16.msra.mxu0 %v2028
        %2518 = vmatprep.subr.bf16.mxu0 %v2033
        %2519 = vmatpush1.bf16.msra.mxu0 %v2032
        %2520 = vmatprep.subr.bf16.mxu0 %v2037
        %2521 = vmatpush1.bf16.msra.mxu0 %v2036
        %2522 = vmatprep.subr.bf16.mxu0 %v2041
        %2523 = vmatpush1.bf16.msra.mxu0 %v2040
        %2524 = vmatprep.mubr.bf16.mxu0 %v1085
        %2525 = vmatmul.mubr.bf16.gmra.mrb[0].mxu0 %v1084
        %v2526 = vpop.f32.mrb[0].mxu0
        %v2527 = vadd.f32 %v875, %v2526
        %v2528 = vpop.f32.mrb[0].mxu0
        %v2529 = vadd.f32 %v879, %v2528
        %v2530 = vpop.f32.mrb[0].mxu0
        %v2531 = vadd.f32 %v875, %v2530
        %v2532 = vpop.f32.mrb[0].mxu0
        %v2533 = vadd.f32 %v879, %v2532
        %2534 = vmatprep.mubr.bf16.mxu0 %v1093
        %2535 = vmatmul.mubr.bf16.gmra.mrb[0].mxu0 %v1092
        %v2536 = vpop.f32.mrb[0].mxu0
        %v2537 = vadd.f32 %v875, %v2536
        %v2538 = vpop.f32.mrb[0].mxu0
        %v2539 = vadd.f32 %v879, %v2538
        %v2540 = vpop.f32.mrb[0].mxu0
        %v2541 = vadd.f32 %v875, %v2540
        %v2542 = vpop.f32.mrb[0].mxu0
        %v2543 = vadd.f32 %v879, %v2542
        %2544 = vmatprep.mubr.bf16.mxu0 %v1101
        %2545 = vmatmul.mubr.bf16.gmra.mrb[0].mxu0 %v1100
        %v2546 = vpop.f32.mrb[0].mxu0
        %v2547 = vadd.f32 %v875, %v2546
        %v2548 = vpop.f32.mrb[0].mxu0
        %v2549 = vadd.f32 %v879, %v2548
        %v2550 = vpop.f32.mrb[0].mxu0
        %v2551 = vadd.f32 %v875, %v2550
        %v2552 = vpop.f32.mrb[0].mxu0
        %v2553 = vadd.f32 %v879, %v2552
        %2554 = vmatprep.mubr.bf16.mxu0 %v1109
        %2555 = vmatmul.mubr.bf16.gmra.mrb[0].mxu0 %v1108
        %v2556 = vpop.f32.mrb[0].mxu0
        %v2557 = vadd.f32 %v875, %v2556
        %v2558 = vpop.f32.mrb[0].mxu0
        %v2559 = vadd.f32 %v879, %v2558
        %v2560 = vpop.f32.mrb[0].mxu0
        %v2561 = vadd.f32 %v875, %v2560
        %v2562 = vpop.f32.mrb[0].mxu0
        %v2563 = vadd.f32 %v879, %v2562
        %2564 = vmatprep.mubr.bf16.mxu0 %v1117
        %2565 = vmatmul.mubr.bf16.gmra.mrb[0].mxu0 %v1116
        %v2566 = vpop.f32.mrb[0].mxu0
        %v2567 = vadd.f32 %v875, %v2566
        %v2568 = vpop.f32.mrb[0].mxu0
        %v2569 = vadd.f32 %v879, %v2568
        %v2570 = vpop.f32.mrb[0].mxu0
        %v2571 = vadd.f32 %v875, %v2570
        %v2572 = vpop.f32.mrb[0].mxu0
        %v2573 = vadd.f32 %v879, %v2572
        %2574 = vmatprep.mubr.bf16.mxu0 %v1125
        %2575 = vmatmul.mubr.bf16.gmra.mrb[0].mxu0 %v1124
        %v2576 = vpop.f32.mrb[0].mxu0
        %v2577 = vadd.f32 %v875, %v2576
        %v2578 = vpop.f32.mrb[0].mxu0
        %v2579 = vadd.f32 %v879, %v2578
        %v2580 = vpop.f32.mrb[0].mxu0
        %v2581 = vadd.f32 %v875, %v2580
        %v2582 = vpop.f32.mrb[0].mxu0
        %v2583 = vadd.f32 %v879, %v2582
        %2584 = vmatprep.mubr.bf16.mxu0 %v1133
        %2585 = vmatmul.mubr.bf16.gmra.mrb[0].mxu0 %v1132
        %v2586 = vpop.f32.mrb[0].mxu0
        %v2587 = vadd.f32 %v875, %v2586
        %v2588 = vpop.f32.mrb[0].mxu0
        %v2589 = vadd.f32 %v879, %v2588
        %v2590 = vpop.f32.mrb[0].mxu0
        %v2591 = vadd.f32 %v875, %v2590
        %v2592 = vpop.f32.mrb[0].mxu0
        %v2593 = vadd.f32 %v879, %v2592
        %2594 = vmatprep.mubr.bf16.mxu0 %v1141
        %2595 = vmatmul.mubr.bf16.gmra.mrb[0].mxu0 %v1140
        %v2596 = vpop.f32.mrb[0].mxu0
        %v2597 = vadd.f32 %v875, %v2596
        %v2598 = vpop.f32.mrb[0].mxu0
        %v2599 = vadd.f32 %v879, %v2598
        %v2600 = vpop.f32.mrb[0].mxu0
        %v2601 = vadd.f32 %v875, %v2600
        %v2602 = vpop.f32.mrb[0].mxu0
        %v2603 = vadd.f32 %v879, %v2602
        %2604 = vdwg.mxu0
        %2605 = vmatprep.subr.bf16.mxu0 %v2045
        %2606 = vmatpush1.bf16.msra.mxu0 %v2044
        %2607 = vmatprep.subr.bf16.mxu0 %v2049
        %2608 = vmatpush1.bf16.msra.mxu0 %v2048
        %2609 = vmatprep.subr.bf16.mxu0 %v2053
        %2610 = vmatpush1.bf16.msra.mxu0 %v2052
        %2611 = vmatprep.subr.bf16.mxu0 %v2057
        %2612 = vmatpush1.bf16.msra.mxu0 %v2056
        %2613 = vmatprep.subr.bf16.mxu0 %v2061
        %2614 = vmatpush1.bf16.msra.mxu0 %v2060
        %2615 = vmatprep.subr.bf16.mxu0 %v2065
        %2616 = vmatpush1.bf16.msra.mxu0 %v2064
        %2617 = vmatprep.subr.bf16.mxu0 %v2069
        %2618 = vmatpush1.bf16.msra.mxu0 %v2068
        %2619 = vmatprep.subr.bf16.mxu0 %v2073
        %2620 = vmatpush1.bf16.msra.mxu0 %v2072
        %2621 = vmatprep.subr.bf16.mxu0 %v2077
        %2622 = vmatpush1.bf16.msra.mxu0 %v2076
        %2623 = vmatprep.subr.bf16.mxu0 %v2081
        %2624 = vmatpush1.bf16.msra.mxu0 %v2080
        %2625 = vmatprep.subr.bf16.mxu0 %v2085
        %2626 = vmatpush1.bf16.msra.mxu0 %v2084
        %2627 = vmatprep.subr.bf16.mxu0 %v2089
        %2628 = vmatpush1.bf16.msra.mxu0 %v2088
        %2629 = vmatprep.subr.bf16.mxu0 %v2093
        %2630 = vmatpush1.bf16.msra.mxu0 %v2092
        %2631 = vmatprep.subr.bf16.mxu0 %v2097
        %2632 = vmatpush1.bf16.msra.mxu0 %v2096
        %2633 = vmatprep.subr.bf16.mxu0 %v2101
        %2634 = vmatpush1.bf16.msra.mxu0 %v2100
        %2635 = vmatprep.subr.bf16.mxu0 %v2105
        %2636 = vmatpush1.bf16.msra.mxu0 %v2104
        %2637 = vmatprep.mubr.bf16.mxu0 %v1087
        %2638 = vmatmul.mubr.bf16.gmra.mrb[0].mxu0 %v1086
        %v2639 = vpop.f32.mrb[0].mxu0
        %v2640 = vadd.f32 %v2527, %v2639
        %v2641 = vpop.f32.mrb[0].mxu0
        %v2642 = vadd.f32 %v2529, %v2641
        %v2643 = vpop.f32.mrb[0].mxu0
        %v2644 = vadd.f32 %v2531, %v2643
        %v2645 = vpop.f32.mrb[0].mxu0
        %v2646 = vadd.f32 %v2533, %v2645
        %2647 = vmatprep.mubr.bf16.mxu0 %v1095
        %2648 = vmatmul.mubr.bf16.gmra.mrb[0].mxu0 %v1094
        %v2649 = vpop.f32.mrb[0].mxu0
        %v2650 = vadd.f32 %v2537, %v2649
        %v2651 = vpop.f32.mrb[0].mxu0
        %v2652 = vadd.f32 %v2539, %v2651
        %v2653 = vpop.f32.mrb[0].mxu0
        %v2654 = vadd.f32 %v2541, %v2653
        %v2655 = vpop.f32.mrb[0].mxu0
        %v2656 = vadd.f32 %v2543, %v2655
        %2657 = vmatprep.mubr.bf16.mxu0 %v1103
        %2658 = vmatmul.mubr.bf16.gmra.mrb[0].mxu0 %v1102
        %v2659 = vpop.f32.mrb[0].mxu0
        %v2660 = vadd.f32 %v2547, %v2659
        %v2661 = vpop.f32.mrb[0].mxu0
        %v2662 = vadd.f32 %v2549, %v2661
        %v2663 = vpop.f32.mrb[0].mxu0
        %v2664 = vadd.f32 %v2551, %v2663
        %v2665 = vpop.f32.mrb[0].mxu0
        %v2666 = vadd.f32 %v2553, %v2665
        %2667 = vmatprep.mubr.bf16.mxu0 %v1111
        %2668 = vmatmul.mubr.bf16.gmra.mrb[0].mxu0 %v1110
        %v2669 = vpop.f32.mrb[0].mxu0
        %v2670 = vadd.f32 %v2557, %v2669
        %v2671 = vpop.f32.mrb[0].mxu0
        %v2672 = vadd.f32 %v2559, %v2671
        %v2673 = vpop.f32.mrb[0].mxu0
        %v2674 = vadd.f32 %v2561, %v2673
        %v2675 = vpop.f32.mrb[0].mxu0
        %v2676 = vadd.f32 %v2563, %v2675
        %2677 = vmatprep.mubr.bf16.mxu0 %v1119
        %2678 = vmatmul.mubr.bf16.gmra.mrb[0].mxu0 %v1118
        %v2679 = vpop.f32.mrb[0].mxu0
        %v2680 = vadd.f32 %v2567, %v2679
        %v2681 = vpop.f32.mrb[0].mxu0
        %v2682 = vadd.f32 %v2569, %v2681
        %v2683 = vpop.f32.mrb[0].mxu0
        %v2684 = vadd.f32 %v2571, %v2683
        %v2685 = vpop.f32.mrb[0].mxu0
        %v2686 = vadd.f32 %v2573, %v2685
        %2687 = vmatprep.mubr.bf16.mxu0 %v1127
        %2688 = vmatmul.mubr.bf16.gmra.mrb[0].mxu0 %v1126
        %v2689 = vpop.f32.mrb[0].mxu0
        %v2690 = vadd.f32 %v2577, %v2689
        %v2691 = vpop.f32.mrb[0].mxu0
        %v2692 = vadd.f32 %v2579, %v2691
        %v2693 = vpop.f32.mrb[0].mxu0
        %v2694 = vadd.f32 %v2581, %v2693
        %v2695 = vpop.f32.mrb[0].mxu0
        %v2696 = vadd.f32 %v2583, %v2695
        %2697 = vmatprep.mubr.bf16.mxu0 %v1135
        %2698 = vmatmul.mubr.bf16.gmra.mrb[0].mxu0 %v1134
        %v2699 = vpop.f32.mrb[0].mxu0
        %v2700 = vadd.f32 %v2587, %v2699
        %v2701 = vpop.f32.mrb[0].mxu0
        %v2702 = vadd.f32 %v2589, %v2701
        %v2703 = vpop.f32.mrb[0].mxu0
        %v2704 = vadd.f32 %v2591, %v2703
        %v2705 = vpop.f32.mrb[0].mxu0
        %v2706 = vadd.f32 %v2593, %v2705
        %2707 = vmatprep.mubr.bf16.mxu0 %v1143
        %2708 = vmatmul.mubr.bf16.gmra.mrb[0].mxu0 %v1142
        %v2709 = vpop.f32.mrb[0].mxu0
        %v2710 = vadd.f32 %v2597, %v2709
        %v2711 = vpop.f32.mrb[0].mxu0
        %v2712 = vadd.f32 %v2599, %v2711
        %v2713 = vpop.f32.mrb[0].mxu0
        %v2714 = vadd.f32 %v2601, %v2713
        %v2715 = vpop.f32.mrb[0].mxu0
        %v2716 = vadd.f32 %v2603, %v2715
        %2717 = vdwg.mxu0
        %2718 = vmatprep.subr.bf16.mxu0 %v2109
        %2719 = vmatpush1.bf16.msra.mxu0 %v2108
        %2720 = vmatprep.subr.bf16.mxu0 %v2113
        %2721 = vmatpush1.bf16.msra.mxu0 %v2112
        %2722 = vmatprep.subr.bf16.mxu0 %v2117
        %2723 = vmatpush1.bf16.msra.mxu0 %v2116
        %2724 = vmatprep.subr.bf16.mxu0 %v2121
        %2725 = vmatpush1.bf16.msra.mxu0 %v2120
        %2726 = vmatprep.subr.bf16.mxu0 %v2125
        %2727 = vmatpush1.bf16.msra.mxu0 %v2124
        %2728 = vmatprep.subr.bf16.mxu0 %v2129
        %2729 = vmatpush1.bf16.msra.mxu0 %v2128
        %2730 = vmatprep.subr.bf16.mxu0 %v2133
        %2731 = vmatpush1.bf16.msra.mxu0 %v2132
        %2732 = vmatprep.subr.bf16.mxu0 %v2137
        %2733 = vmatpush1.bf16.msra.mxu0 %v2136
        %2734 = vmatprep.subr.bf16.mxu0 %v2141
        %2735 = vmatpush1.bf16.msra.mxu0 %v2140
        %2736 = vmatprep.subr.bf16.mxu0 %v2145
        %2737 = vmatpush1.bf16.msra.mxu0 %v2144
        %2738 = vmatprep.subr.bf16.mxu0 %v2149
        %2739 = vmatpush1.bf16.msra.mxu0 %v2148
        %2740 = vmatprep.subr.bf16.mxu0 %v2153
        %2741 = vmatpush1.bf16.msra.mxu0 %v2152
        %2742 = vmatprep.subr.bf16.mxu0 %v2157
        %2743 = vmatpush1.bf16.msra.mxu0 %v2156
        %2744 = vmatprep.subr.bf16.mxu0 %v2161
        %2745 = vmatpush1.bf16.msra.mxu0 %v2160
        %2746 = vmatprep.subr.bf16.mxu0 %v2165
        %2747 = vmatpush1.bf16.msra.mxu0 %v2164
        %2748 = vmatprep.subr.bf16.mxu0 %v2169
        %2749 = vmatpush1.bf16.msra.mxu0 %v2168
        %2750 = vmatprep.mubr.bf16.mxu0 %v1089
        %2751 = vmatmul.mubr.bf16.gmra.mrb[0].mxu0 %v1088
        %v2752 = vpop.f32.mrb[0].mxu0
        %v2753 = vadd.f32 %v2640, %v2752
        %v2754 = vpop.f32.mrb[0].mxu0
        %v2755 = vadd.f32 %v2642, %v2754
        %v2756 = vpop.f32.mrb[0].mxu0
        %v2757 = vadd.f32 %v2644, %v2756
        %v2758 = vpop.f32.mrb[0].mxu0
        %v2759 = vadd.f32 %v2646, %v2758
        %2760 = vmatprep.mubr.bf16.mxu0 %v1097
        %2761 = vmatmul.mubr.bf16.gmra.mrb[0].mxu0 %v1096
        %v2762 = vpop.f32.mrb[0].mxu0
        %v2763 = vadd.f32 %v2650, %v2762
        %v2764 = vpop.f32.mrb[0].mxu0
        %v2765 = vadd.f32 %v2652, %v2764
        %v2766 = vpop.f32.mrb[0].mxu0
        %v2767 = vadd.f32 %v2654, %v2766
        %v2768 = vpop.f32.mrb[0].mxu0
        %v2769 = vadd.f32 %v2656, %v2768
        %2770 = vmatprep.mubr.bf16.mxu0 %v1105
        %2771 = vmatmul.mubr.bf16.gmra.mrb[0].mxu0 %v1104
        %v2772 = vpop.f32.mrb[0].mxu0
        %v2773 = vadd.f32 %v2660, %v2772
        %v2774 = vpop.f32.mrb[0].mxu0
        %v2775 = vadd.f32 %v2662, %v2774
        %v2776 = vpop.f32.mrb[0].mxu0
        %v2777 = vadd.f32 %v2664, %v2776
        %v2778 = vpop.f32.mrb[0].mxu0
        %v2779 = vadd.f32 %v2666, %v2778
        %2780 = vmatprep.mubr.bf16.mxu0 %v1113
        %2781 = vmatmul.mubr.bf16.gmra.mrb[0].mxu0 %v1112
        %v2782 = vpop.f32.mrb[0].mxu0
        %v2783 = vadd.f32 %v2670, %v2782
        %v2784 = vpop.f32.mrb[0].mxu0
        %v2785 = vadd.f32 %v2672, %v2784
        %v2786 = vpop.f32.mrb[0].mxu0
        %v2787 = vadd.f32 %v2674, %v2786
        %v2788 = vpop.f32.mrb[0].mxu0
        %v2789 = vadd.f32 %v2676, %v2788
        %2790 = vmatprep.mubr.bf16.mxu0 %v1121
        %2791 = vmatmul.mubr.bf16.gmra.mrb[0].mxu0 %v1120
        %v2792 = vpop.f32.mrb[0].mxu0
        %v2793 = vadd.f32 %v2680, %v2792
        %v2794 = vpop.f32.mrb[0].mxu0
        %v2795 = vadd.f32 %v2682, %v2794
        %v2796 = vpop.f32.mrb[0].mxu0
        %v2797 = vadd.f32 %v2684, %v2796
        %v2798 = vpop.f32.mrb[0].mxu0
        %v2799 = vadd.f32 %v2686, %v2798
        %2800 = vmatprep.mubr.bf16.mxu0 %v1129
        %2801 = vmatmul.mubr.bf16.gmra.mrb[0].mxu0 %v1128
        %v2802 = vpop.f32.mrb[0].mxu0
        %v2803 = vadd.f32 %v2690, %v2802
        %v2804 = vpop.f32.mrb[0].mxu0
        %v2805 = vadd.f32 %v2692, %v2804
        %v2806 = vpop.f32.mrb[0].mxu0
        %v2807 = vadd.f32 %v2694, %v2806
        %v2808 = vpop.f32.mrb[0].mxu0
        %v2809 = vadd.f32 %v2696, %v2808
        %2810 = vmatprep.mubr.bf16.mxu0 %v1137
        %2811 = vmatmul.mubr.bf16.gmra.mrb[0].mxu0 %v1136
        %v2812 = vpop.f32.mrb[0].mxu0
        %v2813 = vadd.f32 %v2700, %v2812
        %v2814 = vpop.f32.mrb[0].mxu0
        %v2815 = vadd.f32 %v2702, %v2814
        %v2816 = vpop.f32.mrb[0].mxu0
        %v2817 = vadd.f32 %v2704, %v2816
        %v2818 = vpop.f32.mrb[0].mxu0
        %v2819 = vadd.f32 %v2706, %v2818
        %2820 = vmatprep.mubr.bf16.mxu0 %v1145
        %2821 = vmatmul.mubr.bf16.gmra.mrb[0].mxu0 %v1144
        %v2822 = vpop.f32.mrb[0].mxu0
        %v2823 = vadd.f32 %v2710, %v2822
        %v2824 = vpop.f32.mrb[0].mxu0
        %v2825 = vadd.f32 %v2712, %v2824
        %v2826 = vpop.f32.mrb[0].mxu0
        %v2827 = vadd.f32 %v2714, %v2826
        %v2828 = vpop.f32.mrb[0].mxu0
        %v2829 = vadd.f32 %v2716, %v2828
        %2830 = vdwg.mxu0
        %2831 = vmatprep.subr.bf16.mxu0 %v2173
        %2832 = vmatpush1.bf16.msra.mxu0 %v2172
        %2833 = vmatprep.subr.bf16.mxu0 %v2177
        %2834 = vmatpush1.bf16.msra.mxu0 %v2176
        %2835 = vmatprep.subr.bf16.mxu0 %v2181
        %2836 = vmatpush1.bf16.msra.mxu0 %v2180
        %2837 = vmatprep.subr.bf16.mxu0 %v2185
        %2838 = vmatpush1.bf16.msra.mxu0 %v2184
        %2839 = vmatprep.subr.bf16.mxu0 %v2189
        %2840 = vmatpush1.bf16.msra.mxu0 %v2188
        %2841 = vmatprep.subr.bf16.mxu0 %v2193
        %2842 = vmatpush1.bf16.msra.mxu0 %v2192
        %2843 = vmatprep.subr.bf16.mxu0 %v2197
        %2844 = vmatpush1.bf16.msra.mxu0 %v2196
        %2845 = vmatprep.subr.bf16.mxu0 %v2201
        %2846 = vmatpush1.bf16.msra.mxu0 %v2200
        %2847 = vmatprep.subr.bf16.mxu0 %v2205
        %2848 = vmatpush1.bf16.msra.mxu0 %v2204
        %2849 = vmatprep.subr.bf16.mxu0 %v2209
        %2850 = vmatpush1.bf16.msra.mxu0 %v2208
        %2851 = vmatprep.subr.bf16.mxu0 %v2213
        %2852 = vmatpush1.bf16.msra.mxu0 %v2212
        %2853 = vmatprep.subr.bf16.mxu0 %v2217
        %2854 = vmatpush1.bf16.msra.mxu0 %v2216
        %2855 = vmatprep.subr.bf16.mxu0 %v2221
        %2856 = vmatpush1.bf16.msra.mxu0 %v2220
        %2857 = vmatprep.subr.bf16.mxu0 %v2225
        %2858 = vmatpush1.bf16.msra.mxu0 %v2224
        %2859 = vmatprep.subr.bf16.mxu0 %v2229
        %2860 = vmatpush1.bf16.msra.mxu0 %v2228
        %2861 = vmatprep.subr.bf16.mxu0 %v2233
        %2862 = vmatpush1.bf16.msra.mxu0 %v2232
        %2863 = vmatprep.mubr.bf16.mxu0 %v1091
        %2864 = vmatmul.mubr.bf16.gmra.mrb[0].mxu0 %v1090
        %v2865 = vpop.f32.mrb[0].mxu0
        %v2866 = vadd.f32 %v2753, %v2865
        %v2867 = vpop.f32.mrb[0].mxu0
        %v2868 = vadd.f32 %v2755, %v2867
        %v2869 = vpop.f32.mrb[0].mxu0
        %v2870 = vadd.f32 %v2757, %v2869
        %v2871 = vpop.f32.mrb[0].mxu0
        %v2872 = vadd.f32 %v2759, %v2871
        %2873 = vmatprep.mubr.bf16.mxu0 %v1099
        %2874 = vmatmul.mubr.bf16.gmra.mrb[0].mxu0 %v1098
        %v2875 = vpop.f32.mrb[0].mxu0
        %v2876 = vadd.f32 %v2763, %v2875
        %v2877 = vpop.f32.mrb[0].mxu0
        %v2878 = vadd.f32 %v2765, %v2877
        %v2879 = vpop.f32.mrb[0].mxu0
        %v2880 = vadd.f32 %v2767, %v2879
        %v2881 = vpop.f32.mrb[0].mxu0
        %v2882 = vadd.f32 %v2769, %v2881
        %2883 = vmatprep.mubr.bf16.mxu0 %v1107
        %2884 = vmatmul.mubr.bf16.gmra.mrb[0].mxu0 %v1106
        %v2885 = vpop.f32.mrb[0].mxu0
        %v2886 = vadd.f32 %v2773, %v2885
        %v2887 = vpop.f32.mrb[0].mxu0
        %v2888 = vadd.f32 %v2775, %v2887
        %v2889 = vpop.f32.mrb[0].mxu0
        %v2890 = vadd.f32 %v2777, %v2889
        %v2891 = vpop.f32.mrb[0].mxu0
        %v2892 = vadd.f32 %v2779, %v2891
        %2893 = vmatprep.mubr.bf16.mxu0 %v1115
        %2894 = vmatmul.mubr.bf16.gmra.mrb[0].mxu0 %v1114
        %v2895 = vpop.f32.mrb[0].mxu0
        %v2896 = vadd.f32 %v2783, %v2895
        %v2897 = vpop.f32.mrb[0].mxu0
        %v2898 = vadd.f32 %v2785, %v2897
        %v2899 = vpop.f32.mrb[0].mxu0
        %v2900 = vadd.f32 %v2787, %v2899
        %v2901 = vpop.f32.mrb[0].mxu0
        %v2902 = vadd.f32 %v2789, %v2901
        %2903 = vmatprep.mubr.bf16.mxu0 %v1123
        %2904 = vmatmul.mubr.bf16.gmra.mrb[0].mxu0 %v1122
        %v2905 = vpop.f32.mrb[0].mxu0
        %v2906 = vadd.f32 %v2793, %v2905
        %v2907 = vpop.f32.mrb[0].mxu0
        %v2908 = vadd.f32 %v2795, %v2907
        %v2909 = vpop.f32.mrb[0].mxu0
        %v2910 = vadd.f32 %v2797, %v2909
        %v2911 = vpop.f32.mrb[0].mxu0
        %v2912 = vadd.f32 %v2799, %v2911
        %2913 = vmatprep.mubr.bf16.mxu0 %v1131
        %2914 = vmatmul.mubr.bf16.gmra.mrb[0].mxu0 %v1130
        %v2915 = vpop.f32.mrb[0].mxu0
        %v2916 = vadd.f32 %v2803, %v2915
        %v2917 = vpop.f32.mrb[0].mxu0
        %v2918 = vadd.f32 %v2805, %v2917
        %v2919 = vpop.f32.mrb[0].mxu0
        %v2920 = vadd.f32 %v2807, %v2919
        %v2921 = vpop.f32.mrb[0].mxu0
        %v2922 = vadd.f32 %v2809, %v2921
        %2923 = vmatprep.mubr.bf16.mxu0 %v1139
        %2924 = vmatmul.mubr.bf16.gmra.mrb[0].mxu0 %v1138
        %v2925 = vpop.f32.mrb[0].mxu0
        %v2926 = vadd.f32 %v2813, %v2925
        %v2927 = vpop.f32.mrb[0].mxu0
        %v2928 = vadd.f32 %v2815, %v2927
        %v2929 = vpop.f32.mrb[0].mxu0
        %v2930 = vadd.f32 %v2817, %v2929
        %v2931 = vpop.f32.mrb[0].mxu0
        %v2932 = vadd.f32 %v2819, %v2931
        %2933 = vmatprep.mubr.bf16.mxu0 %v1147
        %2934 = vmatmul.mubr.bf16.gmra.mrb[0].mxu0 %v1146
        %v2935 = vpop.f32.mrb[0].mxu0
        %v2936 = vadd.f32 %v2823, %v2935
        %v2937 = vpop.f32.mrb[0].mxu0
        %v2938 = vadd.f32 %v2825, %v2937
        %v2939 = vpop.f32.mrb[0].mxu0
        %v2940 = vadd.f32 %v2827, %v2939
        %v2941 = vpop.f32.mrb[0].mxu0
        %v2942 = vadd.f32 %v2829, %v2941
        %2943 = vdwg.mxu0
        %2944 = vmatprep.subr.bf16.mxu0 %v1983
        %2945 = vmatpush1.bf16.msra.mxu0 %v1982
        %2946 = vmatprep.subr.bf16.mxu0 %v1987
        %2947 = vmatpush1.bf16.msra.mxu0 %v1986
        %2948 = vmatprep.subr.bf16.mxu0 %v1991
        %2949 = vmatpush1.bf16.msra.mxu0 %v1990
        %2950 = vmatprep.subr.bf16.mxu0 %v1995
        %2951 = vmatpush1.bf16.msra.mxu0 %v1994
        %2952 = vmatprep.subr.bf16.mxu0 %v1999
        %2953 = vmatpush1.bf16.msra.mxu0 %v1998
        %2954 = vmatprep.subr.bf16.mxu0 %v2003
        %2955 = vmatpush1.bf16.msra.mxu0 %v2002
        %2956 = vmatprep.subr.bf16.mxu0 %v2007
        %2957 = vmatpush1.bf16.msra.mxu0 %v2006
        %2958 = vmatprep.subr.bf16.mxu0 %v2011
        %2959 = vmatpush1.bf16.msra.mxu0 %v2010
        %2960 = vmatprep.subr.bf16.mxu0 %v2015
        %2961 = vmatpush1.bf16.msra.mxu0 %v2014
        %2962 = vmatprep.subr.bf16.mxu0 %v2019
        %2963 = vmatpush1.bf16.msra.mxu0 %v2018
        %2964 = vmatprep.subr.bf16.mxu0 %v2023
        %2965 = vmatpush1.bf16.msra.mxu0 %v2022
        %2966 = vmatprep.subr.bf16.mxu0 %v2027
        %2967 = vmatpush1.bf16.msra.mxu0 %v2026
        %2968 = vmatprep.subr.bf16.mxu0 %v2031
        %2969 = vmatpush1.bf16.msra.mxu0 %v2030
        %2970 = vmatprep.subr.bf16.mxu0 %v2035
        %2971 = vmatpush1.bf16.msra.mxu0 %v2034
        %2972 = vmatprep.subr.bf16.mxu0 %v2039
        %2973 = vmatpush1.bf16.msra.mxu0 %v2038
        %2974 = vmatprep.subr.bf16.mxu0 %v2043
        %2975 = vmatpush1.bf16.msra.mxu0 %v2042
        %2976 = vmatprep.mubr.bf16.mxu0 %v1085
        %2977 = vmatmul.mubr.bf16.gmra.mrb[0].mxu0 %v1084
        %v2978 = vpop.f32.mrb[0].mxu0
        %v2979 = vadd.f32 %v883, %v2978
        %v2980 = vpop.f32.mrb[0].mxu0
        %v2981 = vadd.f32 %v887, %v2980
        %v2982 = vpop.f32.mrb[0].mxu0
        %v2983 = vadd.f32 %v883, %v2982
        %v2984 = vpop.f32.mrb[0].mxu0
        %v2985 = vadd.f32 %v887, %v2984
        %2986 = vmatprep.mubr.bf16.mxu0 %v1093
        %2987 = vmatmul.mubr.bf16.gmra.mrb[0].mxu0 %v1092
        %v2988 = vpop.f32.mrb[0].mxu0
        %v2989 = vadd.f32 %v883, %v2988
        %v2990 = vpop.f32.mrb[0].mxu0
        %v2991 = vadd.f32 %v887, %v2990
        %v2992 = vpop.f32.mrb[0].mxu0
        %v2993 = vadd.f32 %v883, %v2992
        %v2994 = vpop.f32.mrb[0].mxu0
        %v2995 = vadd.f32 %v887, %v2994
        %2996 = vmatprep.mubr.bf16.mxu0 %v1101
        %2997 = vmatmul.mubr.bf16.gmra.mrb[0].mxu0 %v1100
        %v2998 = vpop.f32.mrb[0].mxu0
        %v2999 = vadd.f32 %v883, %v2998
        %v3000 = vpop.f32.mrb[0].mxu0
        %v3001 = vadd.f32 %v887, %v3000
        %v3002 = vpop.f32.mrb[0].mxu0
        %v3003 = vadd.f32 %v883, %v3002
        %v3004 = vpop.f32.mrb[0].mxu0
        %v3005 = vadd.f32 %v887, %v3004
        %3006 = vmatprep.mubr.bf16.mxu0 %v1109
        %3007 = vmatmul.mubr.bf16.gmra.mrb[0].mxu0 %v1108
        %v3008 = vpop.f32.mrb[0].mxu0
        %v3009 = vadd.f32 %v883, %v3008
        %v3010 = vpop.f32.mrb[0].mxu0
        %v3011 = vadd.f32 %v887, %v3010
        %v3012 = vpop.f32.mrb[0].mxu0
        %v3013 = vadd.f32 %v883, %v3012
        %v3014 = vpop.f32.mrb[0].mxu0
        %v3015 = vadd.f32 %v887, %v3014
        %3016 = vmatprep.mubr.bf16.mxu0 %v1117
        %3017 = vmatmul.mubr.bf16.gmra.mrb[0].mxu0 %v1116
        %v3018 = vpop.f32.mrb[0].mxu0
        %v3019 = vadd.f32 %v883, %v3018
        %v3020 = vpop.f32.mrb[0].mxu0
        %v3021 = vadd.f32 %v887, %v3020
        %v3022 = vpop.f32.mrb[0].mxu0
        %v3023 = vadd.f32 %v883, %v3022
        %v3024 = vpop.f32.mrb[0].mxu0
        %v3025 = vadd.f32 %v887, %v3024
        %3026 = vmatprep.mubr.bf16.mxu0 %v1125
        %3027 = vmatmul.mubr.bf16.gmra.mrb[0].mxu0 %v1124
        %v3028 = vpop.f32.mrb[0].mxu0
        %v3029 = vadd.f32 %v883, %v3028
        %v3030 = vpop.f32.mrb[0].mxu0
        %v3031 = vadd.f32 %v887, %v3030
        %v3032 = vpop.f32.mrb[0].mxu0
        %v3033 = vadd.f32 %v883, %v3032
        %v3034 = vpop.f32.mrb[0].mxu0
        %v3035 = vadd.f32 %v887, %v3034
        %3036 = vmatprep.mubr.bf16.mxu0 %v1133
        %3037 = vmatmul.mubr.bf16.gmra.mrb[0].mxu0 %v1132
        %v3038 = vpop.f32.mrb[0].mxu0
        %v3039 = vadd.f32 %v883, %v3038
        %v3040 = vpop.f32.mrb[0].mxu0
        %v3041 = vadd.f32 %v887, %v3040
        %v3042 = vpop.f32.mrb[0].mxu0
        %v3043 = vadd.f32 %v883, %v3042
        %v3044 = vpop.f32.mrb[0].mxu0
        %v3045 = vadd.f32 %v887, %v3044
        %3046 = vmatprep.mubr.bf16.mxu0 %v1141
        %3047 = vmatmul.mubr.bf16.gmra.mrb[0].mxu0 %v1140
        %v3048 = vpop.f32.mrb[0].mxu0
        %v3049 = vadd.f32 %v883, %v3048
        %v3050 = vpop.f32.mrb[0].mxu0
        %v3051 = vadd.f32 %v887, %v3050
        %v3052 = vpop.f32.mrb[0].mxu0
        %v3053 = vadd.f32 %v883, %v3052
        %v3054 = vpop.f32.mrb[0].mxu0
        %v3055 = vadd.f32 %v887, %v3054
        %3056 = vdwg.mxu0
        %3057 = vmatprep.subr.bf16.mxu0 %v2047
        %3058 = vmatpush1.bf16.msra.mxu0 %v2046
        %3059 = vmatprep.subr.bf16.mxu0 %v2051
        %3060 = vmatpush1.bf16.msra.mxu0 %v2050
        %3061 = vmatprep.subr.bf16.mxu0 %v2055
        %3062 = vmatpush1.bf16.msra.mxu0 %v2054
        %3063 = vmatprep.subr.bf16.mxu0 %v2059
        %3064 = vmatpush1.bf16.msra.mxu0 %v2058
        %3065 = vmatprep.subr.bf16.mxu0 %v2063
        %3066 = vmatpush1.bf16.msra.mxu0 %v2062
        %3067 = vmatprep.subr.bf16.mxu0 %v2067
        %3068 = vmatpush1.bf16.msra.mxu0 %v2066
        %3069 = vmatprep.subr.bf16.mxu0 %v2071
        %3070 = vmatpush1.bf16.msra.mxu0 %v2070
        %3071 = vmatprep.subr.bf16.mxu0 %v2075
        %3072 = vmatpush1.bf16.msra.mxu0 %v2074
        %3073 = vmatprep.subr.bf16.mxu0 %v2079
        %3074 = vmatpush1.bf16.msra.mxu0 %v2078
        %3075 = vmatprep.subr.bf16.mxu0 %v2083
        %3076 = vmatpush1.bf16.msra.mxu0 %v2082
        %3077 = vmatprep.subr.bf16.mxu0 %v2087
        %3078 = vmatpush1.bf16.msra.mxu0 %v2086
        %3079 = vmatprep.subr.bf16.mxu0 %v2091
        %3080 = vmatpush1.bf16.msra.mxu0 %v2090
        %3081 = vmatprep.subr.bf16.mxu0 %v2095
        %3082 = vmatpush1.bf16.msra.mxu0 %v2094
        %3083 = vmatprep.subr.bf16.mxu0 %v2099
        %3084 = vmatpush1.bf16.msra.mxu0 %v2098
        %3085 = vmatprep.subr.bf16.mxu0 %v2103
        %3086 = vmatpush1.bf16.msra.mxu0 %v2102
        %3087 = vmatprep.subr.bf16.mxu0 %v2107
        %3088 = vmatpush1.bf16.msra.mxu0 %v2106
        %3089 = vmatprep.mubr.bf16.mxu0 %v1087
        %3090 = vmatmul.mubr.bf16.gmra.mrb[0].mxu0 %v1086
        %v3091 = vpop.f32.mrb[0].mxu0
        %v3092 = vadd.f32 %v2979, %v3091
        %v3093 = vpop.f32.mrb[0].mxu0
        %v3094 = vadd.f32 %v2981, %v3093
        %v3095 = vpop.f32.mrb[0].mxu0
        %v3096 = vadd.f32 %v2983, %v3095
        %v3097 = vpop.f32.mrb[0].mxu0
        %v3098 = vadd.f32 %v2985, %v3097
        %3099 = vmatprep.mubr.bf16.mxu0 %v1095
        %3100 = vmatmul.mubr.bf16.gmra.mrb[0].mxu0 %v1094
        %v3101 = vpop.f32.mrb[0].mxu0
        %v3102 = vadd.f32 %v2989, %v3101
        %v3103 = vpop.f32.mrb[0].mxu0
        %v3104 = vadd.f32 %v2991, %v3103
        %v3105 = vpop.f32.mrb[0].mxu0
        %v3106 = vadd.f32 %v2993, %v3105
        %v3107 = vpop.f32.mrb[0].mxu0
        %v3108 = vadd.f32 %v2995, %v3107
        %3109 = vmatprep.mubr.bf16.mxu0 %v1103
        %3110 = vmatmul.mubr.bf16.gmra.mrb[0].mxu0 %v1102
        %v3111 = vpop.f32.mrb[0].mxu0
        %v3112 = vadd.f32 %v2999, %v3111
        %v3113 = vpop.f32.mrb[0].mxu0
        %v3114 = vadd.f32 %v3001, %v3113
        %v3115 = vpop.f32.mrb[0].mxu0
        %v3116 = vadd.f32 %v3003, %v3115
        %v3117 = vpop.f32.mrb[0].mxu0
        %v3118 = vadd.f32 %v3005, %v3117
        %3119 = vmatprep.mubr.bf16.mxu0 %v1111
        %3120 = vmatmul.mubr.bf16.gmra.mrb[0].mxu0 %v1110
        %v3121 = vpop.f32.mrb[0].mxu0
        %v3122 = vadd.f32 %v3009, %v3121
        %v3123 = vpop.f32.mrb[0].mxu0
        %v3124 = vadd.f32 %v3011, %v3123
        %v3125 = vpop.f32.mrb[0].mxu0
        %v3126 = vadd.f32 %v3013, %v3125
        %v3127 = vpop.f32.mrb[0].mxu0
        %v3128 = vadd.f32 %v3015, %v3127
        %3129 = vmatprep.mubr.bf16.mxu0 %v1119
        %3130 = vmatmul.mubr.bf16.gmra.mrb[0].mxu0 %v1118
        %v3131 = vpop.f32.mrb[0].mxu0
        %v3132 = vadd.f32 %v3019, %v3131
        %v3133 = vpop.f32.mrb[0].mxu0
        %v3134 = vadd.f32 %v3021, %v3133
        %v3135 = vpop.f32.mrb[0].mxu0
        %v3136 = vadd.f32 %v3023, %v3135
        %v3137 = vpop.f32.mrb[0].mxu0
        %v3138 = vadd.f32 %v3025, %v3137
        %3139 = vmatprep.mubr.bf16.mxu0 %v1127
        %3140 = vmatmul.mubr.bf16.gmra.mrb[0].mxu0 %v1126
        %v3141 = vpop.f32.mrb[0].mxu0
        %v3142 = vadd.f32 %v3029, %v3141
        %v3143 = vpop.f32.mrb[0].mxu0
        %v3144 = vadd.f32 %v3031, %v3143
        %v3145 = vpop.f32.mrb[0].mxu0
        %v3146 = vadd.f32 %v3033, %v3145
        %v3147 = vpop.f32.mrb[0].mxu0
        %v3148 = vadd.f32 %v3035, %v3147
        %3149 = vmatprep.mubr.bf16.mxu0 %v1135
        %3150 = vmatmul.mubr.bf16.gmra.mrb[0].mxu0 %v1134
        %v3151 = vpop.f32.mrb[0].mxu0
        %v3152 = vadd.f32 %v3039, %v3151
        %v3153 = vpop.f32.mrb[0].mxu0
        %v3154 = vadd.f32 %v3041, %v3153
        %v3155 = vpop.f32.mrb[0].mxu0
        %v3156 = vadd.f32 %v3043, %v3155
        %v3157 = vpop.f32.mrb[0].mxu0
        %v3158 = vadd.f32 %v3045, %v3157
        %3159 = vmatprep.mubr.bf16.mxu0 %v1143
        %3160 = vmatmul.mubr.bf16.gmra.mrb[0].mxu0 %v1142
        %v3161 = vpop.f32.mrb[0].mxu0
        %v3162 = vadd.f32 %v3049, %v3161
        %v3163 = vpop.f32.mrb[0].mxu0
        %v3164 = vadd.f32 %v3051, %v3163
        %v3165 = vpop.f32.mrb[0].mxu0
        %v3166 = vadd.f32 %v3053, %v3165
        %v3167 = vpop.f32.mrb[0].mxu0
        %v3168 = vadd.f32 %v3055, %v3167
        %3169 = vdwg.mxu0
        %3170 = vmatprep.subr.bf16.mxu0 %v2111
        %3171 = vmatpush1.bf16.msra.mxu0 %v2110
        %3172 = vmatprep.subr.bf16.mxu0 %v2115
        %3173 = vmatpush1.bf16.msra.mxu0 %v2114
        %3174 = vmatprep.subr.bf16.mxu0 %v2119
        %3175 = vmatpush1.bf16.msra.mxu0 %v2118
        %3176 = vmatprep.subr.bf16.mxu0 %v2123
        %3177 = vmatpush1.bf16.msra.mxu0 %v2122
        %3178 = vmatprep.subr.bf16.mxu0 %v2127
        %3179 = vmatpush1.bf16.msra.mxu0 %v2126
        %3180 = vmatprep.subr.bf16.mxu0 %v2131
        %3181 = vmatpush1.bf16.msra.mxu0 %v2130
        %3182 = vmatprep.subr.bf16.mxu0 %v2135
        %3183 = vmatpush1.bf16.msra.mxu0 %v2134
        %3184 = vmatprep.subr.bf16.mxu0 %v2139
        %3185 = vmatpush1.bf16.msra.mxu0 %v2138
        %3186 = vmatprep.subr.bf16.mxu0 %v2143
        %3187 = vmatpush1.bf16.msra.mxu0 %v2142
        %3188 = vmatprep.subr.bf16.mxu0 %v2147
        %3189 = vmatpush1.bf16.msra.mxu0 %v2146
        %3190 = vmatprep.subr.bf16.mxu0 %v2151
        %3191 = vmatpush1.bf16.msra.mxu0 %v2150
        %3192 = vmatprep.subr.bf16.mxu0 %v2155
        %3193 = vmatpush1.bf16.msra.mxu0 %v2154
        %3194 = vmatprep.subr.bf16.mxu0 %v2159
        %3195 = vmatpush1.bf16.msra.mxu0 %v2158
        %3196 = vmatprep.subr.bf16.mxu0 %v2163
        %3197 = vmatpush1.bf16.msra.mxu0 %v2162
        %3198 = vmatprep.subr.bf16.mxu0 %v2167
        %3199 = vmatpush1.bf16.msra.mxu0 %v2166
        %3200 = vmatprep.subr.bf16.mxu0 %v2171
        %3201 = vmatpush1.bf16.msra.mxu0 %v2170
        %3202 = vmatprep.mubr.bf16.mxu0 %v1089
        %3203 = vmatmul.mubr.bf16.gmra.mrb[0].mxu0 %v1088
        %v3204 = vpop.f32.mrb[0].mxu0
        %v3205 = vadd.f32 %v3092, %v3204
        %v3206 = vpop.f32.mrb[0].mxu0
        %v3207 = vadd.f32 %v3094, %v3206
        %v3208 = vpop.f32.mrb[0].mxu0
        %v3209 = vadd.f32 %v3096, %v3208
        %v3210 = vpop.f32.mrb[0].mxu0
        %v3211 = vadd.f32 %v3098, %v3210
        %3212 = vmatprep.mubr.bf16.mxu0 %v1097
        %3213 = vmatmul.mubr.bf16.gmra.mrb[0].mxu0 %v1096
        %v3214 = vpop.f32.mrb[0].mxu0
        %v3215 = vadd.f32 %v3102, %v3214
        %v3216 = vpop.f32.mrb[0].mxu0
        %v3217 = vadd.f32 %v3104, %v3216
        %v3218 = vpop.f32.mrb[0].mxu0
        %v3219 = vadd.f32 %v3106, %v3218
        %v3220 = vpop.f32.mrb[0].mxu0
        %v3221 = vadd.f32 %v3108, %v3220
        %3222 = vmatprep.mubr.bf16.mxu0 %v1105
        %3223 = vmatmul.mubr.bf16.gmra.mrb[0].mxu0 %v1104
        %v3224 = vpop.f32.mrb[0].mxu0
        %v3225 = vadd.f32 %v3112, %v3224
        %v3226 = vpop.f32.mrb[0].mxu0
        %v3227 = vadd.f32 %v3114, %v3226
        %v3228 = vpop.f32.mrb[0].mxu0
        %v3229 = vadd.f32 %v3116, %v3228
        %v3230 = vpop.f32.mrb[0].mxu0
        %v3231 = vadd.f32 %v3118, %v3230
        %3232 = vmatprep.mubr.bf16.mxu0 %v1113
        %3233 = vmatmul.mubr.bf16.gmra.mrb[0].mxu0 %v1112
        %v3234 = vpop.f32.mrb[0].mxu0
        %v3235 = vadd.f32 %v3122, %v3234
        %v3236 = vpop.f32.mrb[0].mxu0
        %v3237 = vadd.f32 %v3124, %v3236
        %v3238 = vpop.f32.mrb[0].mxu0
        %v3239 = vadd.f32 %v3126, %v3238
        %v3240 = vpop.f32.mrb[0].mxu0
        %v3241 = vadd.f32 %v3128, %v3240
        %3242 = vmatprep.mubr.bf16.mxu0 %v1121
        %3243 = vmatmul.mubr.bf16.gmra.mrb[0].mxu0 %v1120
        %v3244 = vpop.f32.mrb[0].mxu0
        %v3245 = vadd.f32 %v3132, %v3244
        %v3246 = vpop.f32.mrb[0].mxu0
        %v3247 = vadd.f32 %v3134, %v3246
        %v3248 = vpop.f32.mrb[0].mxu0
        %v3249 = vadd.f32 %v3136, %v3248
        %v3250 = vpop.f32.mrb[0].mxu0
        %v3251 = vadd.f32 %v3138, %v3250
        %3252 = vmatprep.mubr.bf16.mxu0 %v1129
        %3253 = vmatmul.mubr.bf16.gmra.mrb[0].mxu0 %v1128
        %v3254 = vpop.f32.mrb[0].mxu0
        %v3255 = vadd.f32 %v3142, %v3254
        %v3256 = vpop.f32.mrb[0].mxu0
        %v3257 = vadd.f32 %v3144, %v3256
        %v3258 = vpop.f32.mrb[0].mxu0
        %v3259 = vadd.f32 %v3146, %v3258
        %v3260 = vpop.f32.mrb[0].mxu0
        %v3261 = vadd.f32 %v3148, %v3260
        %3262 = vmatprep.mubr.bf16.mxu0 %v1137
        %3263 = vmatmul.mubr.bf16.gmra.mrb[0].mxu0 %v1136
        %v3264 = vpop.f32.mrb[0].mxu0
        %v3265 = vadd.f32 %v3152, %v3264
        %v3266 = vpop.f32.mrb[0].mxu0
        %v3267 = vadd.f32 %v3154, %v3266
        %v3268 = vpop.f32.mrb[0].mxu0
        %v3269 = vadd.f32 %v3156, %v3268
        %v3270 = vpop.f32.mrb[0].mxu0
        %v3271 = vadd.f32 %v3158, %v3270
        %3272 = vmatprep.mubr.bf16.mxu0 %v1145
        %3273 = vmatmul.mubr.bf16.gmra.mrb[0].mxu0 %v1144
        %v3274 = vpop.f32.mrb[0].mxu0
        %v3275 = vadd.f32 %v3162, %v3274
        %v3276 = vpop.f32.mrb[0].mxu0
        %v3277 = vadd.f32 %v3164, %v3276
        %v3278 = vpop.f32.mrb[0].mxu0
        %v3279 = vadd.f32 %v3166, %v3278
        %v3280 = vpop.f32.mrb[0].mxu0
        %v3281 = vadd.f32 %v3168, %v3280
        %3282 = vdwg.mxu0
        %3283 = vmatprep.subr.bf16.mxu0 %v2175
        %3284 = vmatpush1.bf16.msra.mxu0 %v2174
        %3285 = vmatprep.subr.bf16.mxu0 %v2179
        %3286 = vmatpush1.bf16.msra.mxu0 %v2178
        %3287 = vmatprep.subr.bf16.mxu0 %v2183
        %3288 = vmatpush1.bf16.msra.mxu0 %v2182
        %3289 = vmatprep.subr.bf16.mxu0 %v2187
        %3290 = vmatpush1.bf16.msra.mxu0 %v2186
        %3291 = vmatprep.subr.bf16.mxu0 %v2191
        %3292 = vmatpush1.bf16.msra.mxu0 %v2190
        %3293 = vmatprep.subr.bf16.mxu0 %v2195
        %3294 = vmatpush1.bf16.msra.mxu0 %v2194
        %3295 = vmatprep.subr.bf16.mxu0 %v2199
        %3296 = vmatpush1.bf16.msra.mxu0 %v2198
        %3297 = vmatprep.subr.bf16.mxu0 %v2203
        %3298 = vmatpush1.bf16.msra.mxu0 %v2202
        %3299 = vmatprep.subr.bf16.mxu0 %v2207
        %3300 = vmatpush1.bf16.msra.mxu0 %v2206
        %3301 = vmatprep.subr.bf16.mxu0 %v2211
        %3302 = vmatpush1.bf16.msra.mxu0 %v2210
        %3303 = vmatprep.subr.bf16.mxu0 %v2215
        %3304 = vmatpush1.bf16.msra.mxu0 %v2214
        %3305 = vmatprep.subr.bf16.mxu0 %v2219
        %3306 = vmatpush1.bf16.msra.mxu0 %v2218
        %3307 = vmatprep.subr.bf16.mxu0 %v2223
        %3308 = vmatpush1.bf16.msra.mxu0 %v2222
        %3309 = vmatprep.subr.bf16.mxu0 %v2227
        %3310 = vmatpush1.bf16.msra.mxu0 %v2226
        %3311 = vmatprep.subr.bf16.mxu0 %v2231
        %3312 = vmatpush1.bf16.msra.mxu0 %v2230
        %3313 = vmatprep.subr.bf16.mxu0 %v2235
        %3314 = vmatpush1.bf16.msra.mxu0 %v2234
        %3315 = vmatprep.mubr.bf16.mxu0 %v1091
        %3316 = vmatmul.mubr.bf16.gmra.mrb[0].mxu0 %v1090
        %v3317 = vpop.f32.mrb[0].mxu0
        %v3318 = vadd.f32 %v3205, %v3317
        %v3319 = vpop.f32.mrb[0].mxu0
        %v3320 = vadd.f32 %v3207, %v3319
        %v3321 = vpop.f32.mrb[0].mxu0
        %v3322 = vadd.f32 %v3209, %v3321
        %v3323 = vpop.f32.mrb[0].mxu0
        %v3324 = vadd.f32 %v3211, %v3323
        %3325 = vmatprep.mubr.bf16.mxu0 %v1099
        %3326 = vmatmul.mubr.bf16.gmra.mrb[0].mxu0 %v1098
        %v3327 = vpop.f32.mrb[0].mxu0
        %v3328 = vadd.f32 %v3215, %v3327
        %v3329 = vpop.f32.mrb[0].mxu0
        %v3330 = vadd.f32 %v3217, %v3329
        %v3331 = vpop.f32.mrb[0].mxu0
        %v3332 = vadd.f32 %v3219, %v3331
        %v3333 = vpop.f32.mrb[0].mxu0
        %v3334 = vadd.f32 %v3221, %v3333
        %3335 = vmatprep.mubr.bf16.mxu0 %v1107
        %3336 = vmatmul.mubr.bf16.gmra.mrb[0].mxu0 %v1106
        %v3337 = vpop.f32.mrb[0].mxu0
        %v3338 = vadd.f32 %v3225, %v3337
        %v3339 = vpop.f32.mrb[0].mxu0
        %v3340 = vadd.f32 %v3227, %v3339
        %v3341 = vpop.f32.mrb[0].mxu0
        %v3342 = vadd.f32 %v3229, %v3341
        %v3343 = vpop.f32.mrb[0].mxu0
        %v3344 = vadd.f32 %v3231, %v3343
        %3345 = vmatprep.mubr.bf16.mxu0 %v1115
        %3346 = vmatmul.mubr.bf16.gmra.mrb[0].mxu0 %v1114
        %v3347 = vpop.f32.mrb[0].mxu0
        %v3348 = vadd.f32 %v3235, %v3347
        %v3349 = vpop.f32.mrb[0].mxu0
        %v3350 = vadd.f32 %v3237, %v3349
        %v3351 = vpop.f32.mrb[0].mxu0
        %v3352 = vadd.f32 %v3239, %v3351
        %v3353 = vpop.f32.mrb[0].mxu0
        %v3354 = vadd.f32 %v3241, %v3353
        %3355 = vmatprep.mubr.bf16.mxu0 %v1123
        %3356 = vmatmul.mubr.bf16.gmra.mrb[0].mxu0 %v1122
        %v3357 = vpop.f32.mrb[0].mxu0
        %v3358 = vadd.f32 %v3245, %v3357
        %v3359 = vpop.f32.mrb[0].mxu0
        %v3360 = vadd.f32 %v3247, %v3359
        %v3361 = vpop.f32.mrb[0].mxu0
        %v3362 = vadd.f32 %v3249, %v3361
        %v3363 = vpop.f32.mrb[0].mxu0
        %v3364 = vadd.f32 %v3251, %v3363
        %3365 = vmatprep.mubr.bf16.mxu0 %v1131
        %3366 = vmatmul.mubr.bf16.gmra.mrb[0].mxu0 %v1130
        %v3367 = vpop.f32.mrb[0].mxu0
        %v3368 = vadd.f32 %v3255, %v3367
        %v3369 = vpop.f32.mrb[0].mxu0
        %v3370 = vadd.f32 %v3257, %v3369
        %v3371 = vpop.f32.mrb[0].mxu0
        %v3372 = vadd.f32 %v3259, %v3371
        %v3373 = vpop.f32.mrb[0].mxu0
        %v3374 = vadd.f32 %v3261, %v3373
        %3375 = vmatprep.mubr.bf16.mxu0 %v1139
        %3376 = vmatmul.mubr.bf16.gmra.mrb[0].mxu0 %v1138
        %v3377 = vpop.f32.mrb[0].mxu0
        %v3378 = vadd.f32 %v3265, %v3377
        %v3379 = vpop.f32.mrb[0].mxu0
        %v3380 = vadd.f32 %v3267, %v3379
        %v3381 = vpop.f32.mrb[0].mxu0
        %v3382 = vadd.f32 %v3269, %v3381
        %v3383 = vpop.f32.mrb[0].mxu0
        %v3384 = vadd.f32 %v3271, %v3383
        %3385 = vmatprep.mubr.bf16.mxu0 %v1147
        %3386 = vmatmul.mubr.bf16.gmra.mrb[0].mxu0 %v1146
        %v3387 = vpop.f32.mrb[0].mxu0
        %v3388 = vadd.f32 %v3275, %v3387
        %v3389 = vpop.f32.mrb[0].mxu0
        %v3390 = vadd.f32 %v3277, %v3389
        %v3391 = vpop.f32.mrb[0].mxu0
        %v3392 = vadd.f32 %v3279, %v3391
        %v3393 = vpop.f32.mrb[0].mxu0
        %v3394 = vadd.f32 %v3281, %v3393
        %3395 = vdwg.mxu0
        %v3396 = vmax.f32 %v2866, 0.0
        %v3397 = vmax.f32 %v2868, 0.0
        %v3398 = vmax.f32 %v3318, 0.0
        %v3399 = vmax.f32 %v3320, 0.0
        %v3400 = vmax.f32 %v2870, 0.0
        %v3401 = vmax.f32 %v2872, 0.0
        %v3402 = vmax.f32 %v3322, 0.0
        %v3403 = vmax.f32 %v3324, 0.0
        %v3404 = vmax.f32 %v2876, 0.0
        %v3405 = vmax.f32 %v2878, 0.0
        %v3406 = vmax.f32 %v3328, 0.0
        %v3407 = vmax.f32 %v3330, 0.0
        %v3408 = vmax.f32 %v2880, 0.0
        %v3409 = vmax.f32 %v2882, 0.0
        %v3410 = vmax.f32 %v3332, 0.0
        %v3411 = vmax.f32 %v3334, 0.0
        %v3412 = vmax.f32 %v2886, 0.0
        %v3413 = vmax.f32 %v2888, 0.0
        %v3414 = vmax.f32 %v3338, 0.0
        %v3415 = vmax.f32 %v3340, 0.0
        %v3416 = vmax.f32 %v2890, 0.0
        %v3417 = vmax.f32 %v2892, 0.0
        %v3418 = vmax.f32 %v3342, 0.0
        %v3419 = vmax.f32 %v3344, 0.0
        %v3420 = vmax.f32 %v2896, 0.0
        %v3421 = vmax.f32 %v2898, 0.0
        %v3422 = vmax.f32 %v3348, 0.0
        %v3423 = vmax.f32 %v3350, 0.0
        %v3424 = vmax.f32 %v2900, 0.0
        %v3425 = vmax.f32 %v2902, 0.0
        %v3426 = vmax.f32 %v3352, 0.0
        %v3427 = vmax.f32 %v3354, 0.0
        %v3428 = vmax.f32 %v2906, 0.0
        %v3429 = vmax.f32 %v2908, 0.0
        %v3430 = vmax.f32 %v3358, 0.0
        %v3431 = vmax.f32 %v3360, 0.0
        %v3432 = vmax.f32 %v2910, 0.0
        %v3433 = vmax.f32 %v2912, 0.0
        %v3434 = vmax.f32 %v3362, 0.0
        %v3435 = vmax.f32 %v3364, 0.0
        %v3436 = vmax.f32 %v2916, 0.0
        %v3437 = vmax.f32 %v2918, 0.0
        %v3438 = vmax.f32 %v3368, 0.0
        %v3439 = vmax.f32 %v3370, 0.0
        %v3440 = vmax.f32 %v2920, 0.0
        %v3441 = vmax.f32 %v2922, 0.0
        %v3442 = vmax.f32 %v3372, 0.0
        %v3443 = vmax.f32 %v3374, 0.0
        %v3444 = vmax.f32 %v2926, 0.0
        %v3445 = vmax.f32 %v2928, 0.0
        %v3446 = vmax.f32 %v3378, 0.0
        %v3447 = vmax.f32 %v3380, 0.0
        %v3448 = vmax.f32 %v2930, 0.0
        %v3449 = vmax.f32 %v2932, 0.0
        %v3450 = vmax.f32 %v3382, 0.0
        %v3451 = vmax.f32 %v3384, 0.0
        %v3452 = vmax.f32 %v2936, 0.0
        %v3453 = vmax.f32 %v2938, 0.0
        %v3454 = vmax.f32 %v3388, 0.0
        %v3455 = vmax.f32 %v3390, 0.0
        %v3456 = vmax.f32 %v2940, 0.0
        %v3457 = vmax.f32 %v2942, 0.0
        %v3458 = vmax.f32 %v3392, 0.0
        %v3459 = vmax.f32 %v3394, 0.0
        %v3460 = vpack.c.bf16 %v3400, %v3396
        %v3461 = vpack.c.bf16 %v3401, %v3397
        %v3462 = vpack.c.bf16 %v3402, %v3398
        %v3463 = vpack.c.bf16 %v3403, %v3399
        %v3464 = vpack.c.bf16 %v3408, %v3404
        %v3465 = vpack.c.bf16 %v3409, %v3405
        %v3466 = vpack.c.bf16 %v3410, %v3406
        %v3467 = vpack.c.bf16 %v3411, %v3407
        %v3468 = vpack.c.bf16 %v3416, %v3412
        %v3469 = vpack.c.bf16 %v3417, %v3413
        %v3470 = vpack.c.bf16 %v3418, %v3414
        %v3471 = vpack.c.bf16 %v3419, %v3415
        %v3472 = vpack.c.bf16 %v3424, %v3420
        %v3473 = vpack.c.bf16 %v3425, %v3421
        %v3474 = vpack.c.bf16 %v3426, %v3422
        %v3475 = vpack.c.bf16 %v3427, %v3423
        %v3476 = vpack.c.bf16 %v3432, %v3428
        %v3477 = vpack.c.bf16 %v3433, %v3429
        %v3478 = vpack.c.bf16 %v3434, %v3430
        %v3479 = vpack.c.bf16 %v3435, %v3431
        %v3480 = vpack.c.bf16 %v3440, %v3436
        %v3481 = vpack.c.bf16 %v3441, %v3437
        %v3482 = vpack.c.bf16 %v3442, %v3438
        %v3483 = vpack.c.bf16 %v3443, %v3439
        %v3484 = vpack.c.bf16 %v3448, %v3444
        %v3485 = vpack.c.bf16 %v3449, %v3445
        %v3486 = vpack.c.bf16 %v3450, %v3446
        %v3487 = vpack.c.bf16 %v3451, %v3447
        %v3488 = vpack.c.bf16 %v3456, %v3452
        %v3489 = vpack.c.bf16 %v3457, %v3453
        %v3490 = vpack.c.bf16 %v3458, %v3454
        %v3491 = vpack.c.bf16 %v3459, %v3455
        %v3492 = vld [vmem:[#allocation7] sm:$0xff]
        %v3493 = vld [vmem:[#allocation7 + $0x8] sm:$0xff]
        %v3494 = vld [vmem:[#allocation7 + $0x10] sm:$0xff]
        %v3495 = vld [vmem:[#allocation7 + $0x18] sm:$0xff]
        %v3496 = vld [vmem:[#allocation7 + $0x20] sm:$0xff]
        %v3497 = vld [vmem:[#allocation7 + $0x28] sm:$0xff]
        %v3498 = vld [vmem:[#allocation7 + $0x30] sm:$0xff]
        %v3499 = vld [vmem:[#allocation7 + $0x38] sm:$0xff]
        %v3500 = vld [vmem:[#allocation7 + $0x40] sm:$0xff]
        %v3501 = vld [vmem:[#allocation7 + $0x48] sm:$0xff]
        %v3502 = vld [vmem:[#allocation7 + $0x50] sm:$0xff]
        %v3503 = vld [vmem:[#allocation7 + $0x58] sm:$0xff]
        %v3504 = vld [vmem:[#allocation7 + $0x60] sm:$0xff]
        %v3505 = vld [vmem:[#allocation7 + $0x68] sm:$0xff]
        %v3506 = vld [vmem:[#allocation7 + $0x70] sm:$0xff]
        %v3507 = vld [vmem:[#allocation7 + $0x78] sm:$0xff]
        %v3508 = vld [vmem:[#allocation7 + $0x80] sm:$0xff]
        %v3509 = vld [vmem:[#allocation7 + $0x88] sm:$0xff]
        %v3510 = vld [vmem:[#allocation7 + $0x90] sm:$0xff]
        %v3511 = vld [vmem:[#allocation7 + $0x98] sm:$0xff]
        %v3512 = vld [vmem:[#allocation7 + $0xa0] sm:$0xff]
        %v3513 = vld [vmem:[#allocation7 + $0xa8] sm:$0xff]
        %v3514 = vld [vmem:[#allocation7 + $0xb0] sm:$0xff]
        %v3515 = vld [vmem:[#allocation7 + $0xb8] sm:$0xff]
        %v3516 = vld [vmem:[#allocation7 + $0xc0] sm:$0xff]
        %v3517 = vld [vmem:[#allocation7 + $0xc8] sm:$0xff]
        %v3518 = vld [vmem:[#allocation7 + $0xd0] sm:$0xff]
        %v3519 = vld [vmem:[#allocation7 + $0xd8] sm:$0xff]
        %v3520 = vld [vmem:[#allocation7 + $0xe0] sm:$0xff]
        %v3521 = vld [vmem:[#allocation7 + $0xe8] sm:$0xff]
        %v3522 = vld [vmem:[#allocation7 + $0xf0] sm:$0xff]
        %v3523 = vld [vmem:[#allocation7 + $0xf8] sm:$0xff]
        %v3524 = vld [vmem:[#allocation7 + $0x100] sm:$0xff]
        %v3525 = vld [vmem:[#allocation7 + $0x108] sm:$0xff]
        %v3526 = vld [vmem:[#allocation7 + $0x110] sm:$0xff]
        %v3527 = vld [vmem:[#allocation7 + $0x118] sm:$0xff]
        %v3528 = vld [vmem:[#allocation7 + $0x120] sm:$0xff]
        %v3529 = vld [vmem:[#allocation7 + $0x128] sm:$0xff]
        %v3530 = vld [vmem:[#allocation7 + $0x130] sm:$0xff]
        %v3531 = vld [vmem:[#allocation7 + $0x138] sm:$0xff]
        %v3532 = vld [vmem:[#allocation7 + $0x140] sm:$0xff]
        %v3533 = vld [vmem:[#allocation7 + $0x148] sm:$0xff]
        %v3534 = vld [vmem:[#allocation7 + $0x150] sm:$0xff]
        %v3535 = vld [vmem:[#allocation7 + $0x158] sm:$0xff]
        %v3536 = vld [vmem:[#allocation7 + $0x160] sm:$0xff]
        %v3537 = vld [vmem:[#allocation7 + $0x168] sm:$0xff]
        %v3538 = vld [vmem:[#allocation7 + $0x170] sm:$0xff]
        %v3539 = vld [vmem:[#allocation7 + $0x178] sm:$0xff]
        %v3540 = vld [vmem:[#allocation7 + $0x180] sm:$0xff]
        %v3541 = vld [vmem:[#allocation7 + $0x188] sm:$0xff]
        %v3542 = vld [vmem:[#allocation7 + $0x190] sm:$0xff]
        %v3543 = vld [vmem:[#allocation7 + $0x198] sm:$0xff]
        %v3544 = vld [vmem:[#allocation7 + $0x1a0] sm:$0xff]
        %v3545 = vld [vmem:[#allocation7 + $0x1a8] sm:$0xff]
        %v3546 = vld [vmem:[#allocation7 + $0x1b0] sm:$0xff]
        %v3547 = vld [vmem:[#allocation7 + $0x1b8] sm:$0xff]
        %v3548 = vld [vmem:[#allocation7 + $0x1c0] sm:$0xff]
        %v3549 = vld [vmem:[#allocation7 + $0x1c8] sm:$0xff]
        %v3550 = vld [vmem:[#allocation7 + $0x1d0] sm:$0xff]
        %v3551 = vld [vmem:[#allocation7 + $0x1d8] sm:$0xff]
        %v3552 = vld [vmem:[#allocation7 + $0x1e0] sm:$0xff]
        %v3553 = vld [vmem:[#allocation7 + $0x1e8] sm:$0xff]
        %v3554 = vld [vmem:[#allocation7 + $0x1f0] sm:$0xff]
        %v3555 = vld [vmem:[#allocation7 + $0x1f8] sm:$0xff]
        %v3556 = vld [vmem:[%s4] sm:$0x3]
        %v3558 = vlaneseq
        %v3559 = vshrl.u32 %v3558, 7
        %v3560 = vsub.s32 0, %v3559
        %v3561 = vrot.slane %v3556, %v3560
        %v3562 = vlaneseq
        %v3563 = vshrl.u32 %v3562, 7
        %v3564 = vsub.s32 1, %v3563
        %v3565 = vrot.slane %v3556, %v3564
        %v3632 = vunpack.c.l.b16 %v3492
        %v3633 = vunpack.c.h.b16 %v3492
        %v3634 = vunpack.c.l.b16 %v3493
        %v3635 = vunpack.c.h.b16 %v3493
        %v3636 = vunpack.c.l.b16 %v3494
        %v3637 = vunpack.c.h.b16 %v3494
        %v3638 = vunpack.c.l.b16 %v3495
        %v3639 = vunpack.c.h.b16 %v3495
        %v3640 = vunpack.c.l.b16 %v3496
        %v3641 = vunpack.c.h.b16 %v3496
        %v3642 = vunpack.c.l.b16 %v3497
        %v3643 = vunpack.c.h.b16 %v3497
        %v3644 = vunpack.c.l.b16 %v3498
        %v3645 = vunpack.c.h.b16 %v3498
        %v3646 = vunpack.c.l.b16 %v3499
        %v3647 = vunpack.c.h.b16 %v3499
        %v3648 = vunpack.c.l.b16 %v3500
        %v3649 = vunpack.c.h.b16 %v3500
        %v3650 = vunpack.c.l.b16 %v3501
        %v3651 = vunpack.c.h.b16 %v3501
        %v3652 = vunpack.c.l.b16 %v3502
        %v3653 = vunpack.c.h.b16 %v3502
        %v3654 = vunpack.c.l.b16 %v3503
        %v3655 = vunpack.c.h.b16 %v3503
        %v3656 = vunpack.c.l.b16 %v3504
        %v3657 = vunpack.c.h.b16 %v3504
        %v3658 = vunpack.c.l.b16 %v3505
        %v3659 = vunpack.c.h.b16 %v3505
        %v3660 = vunpack.c.l.b16 %v3506
        %v3661 = vunpack.c.h.b16 %v3506
        %v3662 = vunpack.c.l.b16 %v3507
        %v3663 = vunpack.c.h.b16 %v3507
        %v3664 = vunpack.c.l.b16 %v3508
        %v3665 = vunpack.c.h.b16 %v3508
        %v3666 = vunpack.c.l.b16 %v3509
        %v3667 = vunpack.c.h.b16 %v3509
        %v3668 = vunpack.c.l.b16 %v3510
        %v3669 = vunpack.c.h.b16 %v3510
        %v3670 = vunpack.c.l.b16 %v3511
        %v3671 = vunpack.c.h.b16 %v3511
        %v3672 = vunpack.c.l.b16 %v3512
        %v3673 = vunpack.c.h.b16 %v3512
        %v3674 = vunpack.c.l.b16 %v3513
        %v3675 = vunpack.c.h.b16 %v3513
        %v3676 = vunpack.c.l.b16 %v3514
        %v3677 = vunpack.c.h.b16 %v3514
        %v3678 = vunpack.c.l.b16 %v3515
        %v3679 = vunpack.c.h.b16 %v3515
        %v3680 = vunpack.c.l.b16 %v3516
        %v3681 = vunpack.c.h.b16 %v3516
        %v3682 = vunpack.c.l.b16 %v3517
        %v3683 = vunpack.c.h.b16 %v3517
        %v3684 = vunpack.c.l.b16 %v3518
        %v3685 = vunpack.c.h.b16 %v3518
        %v3686 = vunpack.c.l.b16 %v3519
        %v3687 = vunpack.c.h.b16 %v3519
        %v3688 = vunpack.c.l.b16 %v3520
        %v3689 = vunpack.c.h.b16 %v3520
        %v3690 = vunpack.c.l.b16 %v3521
        %v3691 = vunpack.c.h.b16 %v3521
        %v3692 = vunpack.c.l.b16 %v3522
        %v3693 = vunpack.c.h.b16 %v3522
        %v3694 = vunpack.c.l.b16 %v3523
        %v3695 = vunpack.c.h.b16 %v3523
        %v3696 = vunpack.c.l.b16 %v3524
        %v3697 = vunpack.c.h.b16 %v3524
        %v3698 = vunpack.c.l.b16 %v3525
        %v3699 = vunpack.c.h.b16 %v3525
        %v3700 = vunpack.c.l.b16 %v3526
        %v3701 = vunpack.c.h.b16 %v3526
        %v3702 = vunpack.c.l.b16 %v3527
        %v3703 = vunpack.c.h.b16 %v3527
        %v3704 = vunpack.c.l.b16 %v3528
        %v3705 = vunpack.c.h.b16 %v3528
        %v3706 = vunpack.c.l.b16 %v3529
        %v3707 = vunpack.c.h.b16 %v3529
        %v3708 = vunpack.c.l.b16 %v3530
        %v3709 = vunpack.c.h.b16 %v3530
        %v3710 = vunpack.c.l.b16 %v3531
        %v3711 = vunpack.c.h.b16 %v3531
        %v3712 = vunpack.c.l.b16 %v3532
        %v3713 = vunpack.c.h.b16 %v3532
        %v3714 = vunpack.c.l.b16 %v3533
        %v3715 = vunpack.c.h.b16 %v3533
        %v3716 = vunpack.c.l.b16 %v3534
        %v3717 = vunpack.c.h.b16 %v3534
        %v3718 = vunpack.c.l.b16 %v3535
        %v3719 = vunpack.c.h.b16 %v3535
        %v3720 = vunpack.c.l.b16 %v3536
        %v3721 = vunpack.c.h.b16 %v3536
        %v3722 = vunpack.c.l.b16 %v3537
        %v3723 = vunpack.c.h.b16 %v3537
        %v3724 = vunpack.c.l.b16 %v3538
        %v3725 = vunpack.c.h.b16 %v3538
        %v3726 = vunpack.c.l.b16 %v3539
        %v3727 = vunpack.c.h.b16 %v3539
        %v3728 = vunpack.c.l.b16 %v3540
        %v3729 = vunpack.c.h.b16 %v3540
        %v3730 = vunpack.c.l.b16 %v3541
        %v3731 = vunpack.c.h.b16 %v3541
        %v3732 = vunpack.c.l.b16 %v3542
        %v3733 = vunpack.c.h.b16 %v3542
        %v3734 = vunpack.c.l.b16 %v3543
        %v3735 = vunpack.c.h.b16 %v3543
        %v3736 = vunpack.c.l.b16 %v3544
        %v3737 = vunpack.c.h.b16 %v3544
        %v3738 = vunpack.c.l.b16 %v3545
        %v3739 = vunpack.c.h.b16 %v3545
        %v3740 = vunpack.c.l.b16 %v3546
        %v3741 = vunpack.c.h.b16 %v3546
        %v3742 = vunpack.c.l.b16 %v3547
        %v3743 = vunpack.c.h.b16 %v3547
        %v3744 = vunpack.c.l.b16 %v3548
        %v3745 = vunpack.c.h.b16 %v3548
        %v3746 = vunpack.c.l.b16 %v3549
        %v3747 = vunpack.c.h.b16 %v3549
        %v3748 = vunpack.c.l.b16 %v3550
        %v3749 = vunpack.c.h.b16 %v3550
        %v3750 = vunpack.c.l.b16 %v3551
        %v3751 = vunpack.c.h.b16 %v3551
        %v3752 = vunpack.c.l.b16 %v3552
        %v3753 = vunpack.c.h.b16 %v3552
        %v3754 = vunpack.c.l.b16 %v3553
        %v3755 = vunpack.c.h.b16 %v3553
        %v3756 = vunpack.c.l.b16 %v3554
        %v3757 = vunpack.c.h.b16 %v3554
        %v3758 = vunpack.c.l.b16 %v3555
        %v3759 = vunpack.c.h.b16 %v3555
        %v3760 = vpack.c.b16 %v3634, %v3632
        %v3761 = vpack.c.b16 %v3635, %v3633
        %v3762 = vpack.c.b16 %v3638, %v3636
        %v3763 = vpack.c.b16 %v3639, %v3637
        %v3764 = vpack.c.b16 %v3642, %v3640
        %v3765 = vpack.c.b16 %v3643, %v3641
        %v3766 = vpack.c.b16 %v3646, %v3644
        %v3767 = vpack.c.b16 %v3647, %v3645
        %v3768 = vpack.c.b16 %v3650, %v3648
        %v3769 = vpack.c.b16 %v3651, %v3649
        %v3770 = vpack.c.b16 %v3654, %v3652
        %v3771 = vpack.c.b16 %v3655, %v3653
        %v3772 = vpack.c.b16 %v3658, %v3656
        %v3773 = vpack.c.b16 %v3659, %v3657
        %v3774 = vpack.c.b16 %v3662, %v3660
        %v3775 = vpack.c.b16 %v3663, %v3661
        %v3776 = vpack.c.b16 %v3666, %v3664
        %v3777 = vpack.c.b16 %v3667, %v3665
        %v3778 = vpack.c.b16 %v3670, %v3668
        %v3779 = vpack.c.b16 %v3671, %v3669
        %v3780 = vpack.c.b16 %v3674, %v3672
        %v3781 = vpack.c.b16 %v3675, %v3673
        %v3782 = vpack.c.b16 %v3678, %v3676
        %v3783 = vpack.c.b16 %v3679, %v3677
        %v3784 = vpack.c.b16 %v3682, %v3680
        %v3785 = vpack.c.b16 %v3683, %v3681
        %v3786 = vpack.c.b16 %v3686, %v3684
        %v3787 = vpack.c.b16 %v3687, %v3685
        %v3788 = vpack.c.b16 %v3690, %v3688
        %v3789 = vpack.c.b16 %v3691, %v3689
        %v3790 = vpack.c.b16 %v3694, %v3692
        %v3791 = vpack.c.b16 %v3695, %v3693
        %v3792 = vpack.c.b16 %v3698, %v3696
        %v3793 = vpack.c.b16 %v3699, %v3697
        %v3794 = vpack.c.b16 %v3702, %v3700
        %v3795 = vpack.c.b16 %v3703, %v3701
        %v3796 = vpack.c.b16 %v3706, %v3704
        %v3797 = vpack.c.b16 %v3707, %v3705
        %v3798 = vpack.c.b16 %v3710, %v3708
        %v3799 = vpack.c.b16 %v3711, %v3709
        %v3800 = vpack.c.b16 %v3714, %v3712
        %v3801 = vpack.c.b16 %v3715, %v3713
        %v3802 = vpack.c.b16 %v3718, %v3716
        %v3803 = vpack.c.b16 %v3719, %v3717
        %v3804 = vpack.c.b16 %v3722, %v3720
        %v3805 = vpack.c.b16 %v3723, %v3721
        %v3806 = vpack.c.b16 %v3726, %v3724
        %v3807 = vpack.c.b16 %v3727, %v3725
        %v3808 = vpack.c.b16 %v3730, %v3728
        %v3809 = vpack.c.b16 %v3731, %v3729
        %v3810 = vpack.c.b16 %v3734, %v3732
        %v3811 = vpack.c.b16 %v3735, %v3733
        %v3812 = vpack.c.b16 %v3738, %v3736
        %v3813 = vpack.c.b16 %v3739, %v3737
        %v3814 = vpack.c.b16 %v3742, %v3740
        %v3815 = vpack.c.b16 %v3743, %v3741
        %v3816 = vpack.c.b16 %v3746, %v3744
        %v3817 = vpack.c.b16 %v3747, %v3745
        %v3818 = vpack.c.b16 %v3750, %v3748
        %v3819 = vpack.c.b16 %v3751, %v3749
        %v3820 = vpack.c.b16 %v3754, %v3752
        %v3821 = vpack.c.b16 %v3755, %v3753
        %v3822 = vpack.c.b16 %v3758, %v3756
        %v3823 = vpack.c.b16 %v3759, %v3757
        %3888 = vmatprep.subr.bf16.mxu0 %v3761
        %3889 = vmatpush1.bf16.msra.mxu0 %v3760
        %3890 = vmatprep.subr.bf16.mxu0 %v3763
        %3891 = vmatpush1.bf16.msra.mxu0 %v3762
        %3892 = vmatprep.subr.bf16.mxu0 %v3765
        %3893 = vmatpush1.bf16.msra.mxu0 %v3764
        %3894 = vmatprep.subr.bf16.mxu0 %v3767
        %3895 = vmatpush1.bf16.msra.mxu0 %v3766
        %3896 = vmatprep.subr.bf16.mxu0 %v3769
        %3897 = vmatpush1.bf16.msra.mxu0 %v3768
        %3898 = vmatprep.subr.bf16.mxu0 %v3771
        %3899 = vmatpush1.bf16.msra.mxu0 %v3770
        %3900 = vmatprep.subr.bf16.mxu0 %v3773
        %3901 = vmatpush1.bf16.msra.mxu0 %v3772
        %3902 = vmatprep.subr.bf16.mxu0 %v3775
        %3903 = vmatpush1.bf16.msra.mxu0 %v3774
        %3904 = vmatprep.subr.bf16.mxu0 %v3777
        %3905 = vmatpush1.bf16.msra.mxu0 %v3776
        %3906 = vmatprep.subr.bf16.mxu0 %v3779
        %3907 = vmatpush1.bf16.msra.mxu0 %v3778
        %3908 = vmatprep.subr.bf16.mxu0 %v3781
        %3909 = vmatpush1.bf16.msra.mxu0 %v3780
        %3910 = vmatprep.subr.bf16.mxu0 %v3783
        %3911 = vmatpush1.bf16.msra.mxu0 %v3782
        %3912 = vmatprep.subr.bf16.mxu0 %v3785
        %3913 = vmatpush1.bf16.msra.mxu0 %v3784
        %3914 = vmatprep.subr.bf16.mxu0 %v3787
        %3915 = vmatpush1.bf16.msra.mxu0 %v3786
        %3916 = vmatprep.subr.bf16.mxu0 %v3789
        %3917 = vmatpush1.bf16.msra.mxu0 %v3788
        %3918 = vmatprep.subr.bf16.mxu0 %v3791
        %3919 = vmatpush1.bf16.msra.mxu0 %v3790
        %3920 = vmatprep.mubr.bf16.mxu0 %v3461
        %3921 = vmatmul.mubr.bf16.gmra.mrb[0].mxu0 %v3460
        %v3922 = vpop.f32.mrb[0].mxu0
        %v3923 = vadd.f32 %v3561, %v3922
        %v3924 = vpop.f32.mrb[0].mxu0
        %v3925 = vadd.f32 %v3565, %v3924
        %v3926 = vpop.f32.mrb[0].mxu0
        %v3927 = vadd.f32 %v3561, %v3926
        %v3928 = vpop.f32.mrb[0].mxu0
        %v3929 = vadd.f32 %v3565, %v3928
        %3930 = vmatprep.mubr.bf16.mxu0 %v3465
        %3931 = vmatmul.mubr.bf16.gmra.mrb[0].mxu0 %v3464
        %v3932 = vpop.f32.mrb[0].mxu0
        %v3933 = vadd.f32 %v3561, %v3932
        %v3934 = vpop.f32.mrb[0].mxu0
        %v3935 = vadd.f32 %v3565, %v3934
        %v3936 = vpop.f32.mrb[0].mxu0
        %v3937 = vadd.f32 %v3561, %v3936
        %v3938 = vpop.f32.mrb[0].mxu0
        %v3939 = vadd.f32 %v3565, %v3938
        %3940 = vmatprep.mubr.bf16.mxu0 %v3469
        %3941 = vmatmul.mubr.bf16.gmra.mrb[0].mxu0 %v3468
        %v3942 = vpop.f32.mrb[0].mxu0
        %v3943 = vadd.f32 %v3561, %v3942
        %v3944 = vpop.f32.mrb[0].mxu0
        %v3945 = vadd.f32 %v3565, %v3944
        %v3946 = vpop.f32.mrb[0].mxu0
        %v3947 = vadd.f32 %v3561, %v3946
        %v3948 = vpop.f32.mrb[0].mxu0
        %v3949 = vadd.f32 %v3565, %v3948
        %3950 = vmatprep.mubr.bf16.mxu0 %v3473
        %3951 = vmatmul.mubr.bf16.gmra.mrb[0].mxu0 %v3472
        %v3952 = vpop.f32.mrb[0].mxu0
        %v3953 = vadd.f32 %v3561, %v3952
        %v3954 = vpop.f32.mrb[0].mxu0
        %v3955 = vadd.f32 %v3565, %v3954
        %v3956 = vpop.f32.mrb[0].mxu0
        %v3957 = vadd.f32 %v3561, %v3956
        %v3958 = vpop.f32.mrb[0].mxu0
        %v3959 = vadd.f32 %v3565, %v3958
        %3960 = vmatprep.mubr.bf16.mxu0 %v3477
        %3961 = vmatmul.mubr.bf16.gmra.mrb[0].mxu0 %v3476
        %v3962 = vpop.f32.mrb[0].mxu0
        %v3963 = vadd.f32 %v3561, %v3962
        %v3964 = vpop.f32.mrb[0].mxu0
        %v3965 = vadd.f32 %v3565, %v3964
        %v3966 = vpop.f32.mrb[0].mxu0
        %v3967 = vadd.f32 %v3561, %v3966
        %v3968 = vpop.f32.mrb[0].mxu0
        %v3969 = vadd.f32 %v3565, %v3968
        %3970 = vmatprep.mubr.bf16.mxu0 %v3481
        %3971 = vmatmul.mubr.bf16.gmra.mrb[0].mxu0 %v3480
        %v3972 = vpop.f32.mrb[0].mxu0
        %v3973 = vadd.f32 %v3561, %v3972
        %v3974 = vpop.f32.mrb[0].mxu0
        %v3975 = vadd.f32 %v3565, %v3974
        %v3976 = vpop.f32.mrb[0].mxu0
        %v3977 = vadd.f32 %v3561, %v3976
        %v3978 = vpop.f32.mrb[0].mxu0
        %v3979 = vadd.f32 %v3565, %v3978
        %3980 = vmatprep.mubr.bf16.mxu0 %v3485
        %3981 = vmatmul.mubr.bf16.gmra.mrb[0].mxu0 %v3484
        %v3982 = vpop.f32.mrb[0].mxu0
        %v3983 = vadd.f32 %v3561, %v3982
        %v3984 = vpop.f32.mrb[0].mxu0
        %v3985 = vadd.f32 %v3565, %v3984
        %v3986 = vpop.f32.mrb[0].mxu0
        %v3987 = vadd.f32 %v3561, %v3986
        %v3988 = vpop.f32.mrb[0].mxu0
        %v3989 = vadd.f32 %v3565, %v3988
        %3990 = vmatprep.mubr.bf16.mxu0 %v3489
        %3991 = vmatmul.mubr.bf16.gmra.mrb[0].mxu0 %v3488
        %v3992 = vpop.f32.mrb[0].mxu0
        %v3993 = vadd.f32 %v3561, %v3992
        %v3994 = vpop.f32.mrb[0].mxu0
        %v3995 = vadd.f32 %v3565, %v3994
        %v3996 = vpop.f32.mrb[0].mxu0
        %v3997 = vadd.f32 %v3561, %v3996
        %v3998 = vpop.f32.mrb[0].mxu0
        %v3999 = vadd.f32 %v3565, %v3998
        %4000 = vdwg.mxu0
        %4001 = vmatprep.subr.bf16.mxu0 %v3793
        %4002 = vmatpush1.bf16.msra.mxu0 %v3792
        %4003 = vmatprep.subr.bf16.mxu0 %v3795
        %4004 = vmatpush1.bf16.msra.mxu0 %v3794
        %4005 = vmatprep.subr.bf16.mxu0 %v3797
        %4006 = vmatpush1.bf16.msra.mxu0 %v3796
        %4007 = vmatprep.subr.bf16.mxu0 %v3799
        %4008 = vmatpush1.bf16.msra.mxu0 %v3798
        %4009 = vmatprep.subr.bf16.mxu0 %v3801
        %4010 = vmatpush1.bf16.msra.mxu0 %v3800
        %4011 = vmatprep.subr.bf16.mxu0 %v3803
        %4012 = vmatpush1.bf16.msra.mxu0 %v3802
        %4013 = vmatprep.subr.bf16.mxu0 %v3805
        %4014 = vmatpush1.bf16.msra.mxu0 %v3804
        %4015 = vmatprep.subr.bf16.mxu0 %v3807
        %4016 = vmatpush1.bf16.msra.mxu0 %v3806
        %4017 = vmatprep.subr.bf16.mxu0 %v3809
        %4018 = vmatpush1.bf16.msra.mxu0 %v3808
        %4019 = vmatprep.subr.bf16.mxu0 %v3811
        %4020 = vmatpush1.bf16.msra.mxu0 %v3810
        %4021 = vmatprep.subr.bf16.mxu0 %v3813
        %4022 = vmatpush1.bf16.msra.mxu0 %v3812
        %4023 = vmatprep.subr.bf16.mxu0 %v3815
        %4024 = vmatpush1.bf16.msra.mxu0 %v3814
        %4025 = vmatprep.subr.bf16.mxu0 %v3817
        %4026 = vmatpush1.bf16.msra.mxu0 %v3816
        %4027 = vmatprep.subr.bf16.mxu0 %v3819
        %4028 = vmatpush1.bf16.msra.mxu0 %v3818
        %4029 = vmatprep.subr.bf16.mxu0 %v3821
        %4030 = vmatpush1.bf16.msra.mxu0 %v3820
        %4031 = vmatprep.subr.bf16.mxu0 %v3823
        %4032 = vmatpush1.bf16.msra.mxu0 %v3822
        %4033 = vmatprep.mubr.bf16.mxu0 %v3463
        %4034 = vmatmul.mubr.bf16.gmra.mrb[0].mxu0 %v3462
        %v4035 = vpop.f32.mrb[0].mxu0
        %v4036 = vadd.f32 %v3923, %v4035
        %v4037 = vpop.f32.mrb[0].mxu0
        %v4038 = vadd.f32 %v3925, %v4037
        %v4039 = vpop.f32.mrb[0].mxu0
        %v4040 = vadd.f32 %v3927, %v4039
        %v4041 = vpop.f32.mrb[0].mxu0
        %v4042 = vadd.f32 %v3929, %v4041
        %4043 = vmatprep.mubr.bf16.mxu0 %v3467
        %4044 = vmatmul.mubr.bf16.gmra.mrb[0].mxu0 %v3466
        %v4045 = vpop.f32.mrb[0].mxu0
        %v4046 = vadd.f32 %v3933, %v4045
        %v4047 = vpop.f32.mrb[0].mxu0
        %v4048 = vadd.f32 %v3935, %v4047
        %v4049 = vpop.f32.mrb[0].mxu0
        %v4050 = vadd.f32 %v3937, %v4049
        %v4051 = vpop.f32.mrb[0].mxu0
        %v4052 = vadd.f32 %v3939, %v4051
        %4053 = vmatprep.mubr.bf16.mxu0 %v3471
        %4054 = vmatmul.mubr.bf16.gmra.mrb[0].mxu0 %v3470
        %v4055 = vpop.f32.mrb[0].mxu0
        %v4056 = vadd.f32 %v3943, %v4055
        %v4057 = vpop.f32.mrb[0].mxu0
        %v4058 = vadd.f32 %v3945, %v4057
        %v4059 = vpop.f32.mrb[0].mxu0
        %v4060 = vadd.f32 %v3947, %v4059
        %v4061 = vpop.f32.mrb[0].mxu0
        %v4062 = vadd.f32 %v3949, %v4061
        %4063 = vmatprep.mubr.bf16.mxu0 %v3475
        %4064 = vmatmul.mubr.bf16.gmra.mrb[0].mxu0 %v3474
        %v4065 = vpop.f32.mrb[0].mxu0
        %v4066 = vadd.f32 %v3953, %v4065
        %v4067 = vpop.f32.mrb[0].mxu0
        %v4068 = vadd.f32 %v3955, %v4067
        %v4069 = vpop.f32.mrb[0].mxu0
        %v4070 = vadd.f32 %v3957, %v4069
        %v4071 = vpop.f32.mrb[0].mxu0
        %v4072 = vadd.f32 %v3959, %v4071
        %4073 = vmatprep.mubr.bf16.mxu0 %v3479
        %4074 = vmatmul.mubr.bf16.gmra.mrb[0].mxu0 %v3478
        %v4075 = vpop.f32.mrb[0].mxu0
        %v4076 = vadd.f32 %v3963, %v4075
        %v4077 = vpop.f32.mrb[0].mxu0
        %v4078 = vadd.f32 %v3965, %v4077
        %v4079 = vpop.f32.mrb[0].mxu0
        %v4080 = vadd.f32 %v3967, %v4079
        %v4081 = vpop.f32.mrb[0].mxu0
        %v4082 = vadd.f32 %v3969, %v4081
        %4083 = vmatprep.mubr.bf16.mxu0 %v3483
        %4084 = vmatmul.mubr.bf16.gmra.mrb[0].mxu0 %v3482
        %v4085 = vpop.f32.mrb[0].mxu0
        %v4086 = vadd.f32 %v3973, %v4085
        %v4087 = vpop.f32.mrb[0].mxu0
        %v4088 = vadd.f32 %v3975, %v4087
        %v4089 = vpop.f32.mrb[0].mxu0
        %v4090 = vadd.f32 %v3977, %v4089
        %v4091 = vpop.f32.mrb[0].mxu0
        %v4092 = vadd.f32 %v3979, %v4091
        %4093 = vmatprep.mubr.bf16.mxu0 %v3487
        %4094 = vmatmul.mubr.bf16.gmra.mrb[0].mxu0 %v3486
        %v4095 = vpop.f32.mrb[0].mxu0
        %v4096 = vadd.f32 %v3983, %v4095
        %v4097 = vpop.f32.mrb[0].mxu0
        %v4098 = vadd.f32 %v3985, %v4097
        %v4099 = vpop.f32.mrb[0].mxu0
        %v4100 = vadd.f32 %v3987, %v4099
        %v4101 = vpop.f32.mrb[0].mxu0
        %v4102 = vadd.f32 %v3989, %v4101
        %4103 = vmatprep.mubr.bf16.mxu0 %v3491
        %4104 = vmatmul.mubr.bf16.gmra.mrb[0].mxu0 %v3490
        %v4105 = vpop.f32.mrb[0].mxu0
        %v4106 = vadd.f32 %v3993, %v4105
        %v4107 = vpop.f32.mrb[0].mxu0
        %v4108 = vadd.f32 %v3995, %v4107
        %v4109 = vpop.f32.mrb[0].mxu0
        %v4110 = vadd.f32 %v3997, %v4109
        %v4111 = vpop.f32.mrb[0].mxu0
        %v4112 = vadd.f32 %v3999, %v4111
        %4113 = vdwg.mxu0
        %v4114 = vmax.f32 %v4036, 0.0
        %v4115 = vmax.f32 %v4038, 0.0
        %v4116 = vmax.f32 %v4040, 0.0
        %v4117 = vmax.f32 %v4042, 0.0
        %v4118 = vmax.f32 %v4046, 0.0
        %v4119 = vmax.f32 %v4048, 0.0
        %v4120 = vmax.f32 %v4050, 0.0
        %v4121 = vmax.f32 %v4052, 0.0
        %v4122 = vmax.f32 %v4056, 0.0
        %v4123 = vmax.f32 %v4058, 0.0
        %v4124 = vmax.f32 %v4060, 0.0
        %v4125 = vmax.f32 %v4062, 0.0
        %v4126 = vmax.f32 %v4066, 0.0
        %v4127 = vmax.f32 %v4068, 0.0
        %v4128 = vmax.f32 %v4070, 0.0
        %v4129 = vmax.f32 %v4072, 0.0
        %v4130 = vmax.f32 %v4076, 0.0
        %v4131 = vmax.f32 %v4078, 0.0
        %v4132 = vmax.f32 %v4080, 0.0
        %v4133 = vmax.f32 %v4082, 0.0
        %v4134 = vmax.f32 %v4086, 0.0
        %v4135 = vmax.f32 %v4088, 0.0
        %v4136 = vmax.f32 %v4090, 0.0
        %v4137 = vmax.f32 %v4092, 0.0
        %v4138 = vmax.f32 %v4096, 0.0
        %v4139 = vmax.f32 %v4098, 0.0
        %v4140 = vmax.f32 %v4100, 0.0
        %v4141 = vmax.f32 %v4102, 0.0
        %v4142 = vmax.f32 %v4106, 0.0
        %v4143 = vmax.f32 %v4108, 0.0
        %v4144 = vmax.f32 %v4110, 0.0
        %v4145 = vmax.f32 %v4112, 0.0
        %v4146 = vpack.c.bf16 %v4116, %v4114
        %v4147 = vpack.c.bf16 %v4117, %v4115
        %v4148 = vpack.c.bf16 %v4120, %v4118
        %v4149 = vpack.c.bf16 %v4121, %v4119
        %v4150 = vpack.c.bf16 %v4124, %v4122
        %v4151 = vpack.c.bf16 %v4125, %v4123
        %v4152 = vpack.c.bf16 %v4128, %v4126
        %v4153 = vpack.c.bf16 %v4129, %v4127
        %v4154 = vpack.c.bf16 %v4132, %v4130
        %v4155 = vpack.c.bf16 %v4133, %v4131
        %v4156 = vpack.c.bf16 %v4136, %v4134
        %v4157 = vpack.c.bf16 %v4137, %v4135
        %v4158 = vpack.c.bf16 %v4140, %v4138
        %v4159 = vpack.c.bf16 %v4141, %v4139
        %v4160 = vpack.c.bf16 %v4144, %v4142
        %v4161 = vpack.c.bf16 %v4145, %v4143
        %v4162 = vld [vmem:[#allocation8] sm:$0xf]
        %v4163 = vld [vmem:[#allocation8 + $0x4] sm:$0xf]
        %v4164 = vld [vmem:[#allocation8 + $0x8] sm:$0xf]
        %v4165 = vld [vmem:[#allocation8 + $0xc] sm:$0xf]
        %v4166 = vld [vmem:[#allocation8 + $0x10] sm:$0xf]
        %v4167 = vld [vmem:[#allocation8 + $0x14] sm:$0xf]
        %v4168 = vld [vmem:[#allocation8 + $0x18] sm:$0xf]
        %v4169 = vld [vmem:[#allocation8 + $0x1c] sm:$0xf]
        %v4170 = vld [vmem:[#allocation8 + $0x20] sm:$0xf]
        %v4171 = vld [vmem:[#allocation8 + $0x24] sm:$0xf]
        %v4172 = vld [vmem:[#allocation8 + $0x28] sm:$0xf]
        %v4173 = vld [vmem:[#allocation8 + $0x2c] sm:$0xf]
        %v4174 = vld [vmem:[#allocation8 + $0x30] sm:$0xf]
        %v4175 = vld [vmem:[#allocation8 + $0x34] sm:$0xf]
        %v4176 = vld [vmem:[#allocation8 + $0x38] sm:$0xf]
        %v4177 = vld [vmem:[#allocation8 + $0x3c] sm:$0xf]
        %v4178 = vld [vmem:[#allocation8 + $0x40] sm:$0xf]
        %v4179 = vld [vmem:[#allocation8 + $0x44] sm:$0xf]
        %v4180 = vld [vmem:[#allocation8 + $0x48] sm:$0xf]
        %v4181 = vld [vmem:[#allocation8 + $0x4c] sm:$0xf]
        %v4182 = vld [vmem:[#allocation8 + $0x50] sm:$0xf]
        %v4183 = vld [vmem:[#allocation8 + $0x54] sm:$0xf]
        %v4184 = vld [vmem:[#allocation8 + $0x58] sm:$0xf]
        %v4185 = vld [vmem:[#allocation8 + $0x5c] sm:$0xf]
        %v4186 = vld [vmem:[#allocation8 + $0x60] sm:$0xf]
        %v4187 = vld [vmem:[#allocation8 + $0x64] sm:$0xf]
        %v4188 = vld [vmem:[#allocation8 + $0x68] sm:$0xf]
        %v4189 = vld [vmem:[#allocation8 + $0x6c] sm:$0xf]
        %v4190 = vld [vmem:[#allocation8 + $0x70] sm:$0xf]
        %v4191 = vld [vmem:[#allocation8 + $0x74] sm:$0xf]
        %v4192 = vld [vmem:[#allocation8 + $0x78] sm:$0xf]
        %v4193 = vld [vmem:[#allocation8 + $0x7c] sm:$0xf]
        %v4194 = vld [vmem:[%s6] sm:$0x1]
        %v4196 = vlaneseq
        %v4197 = vshrl.u32 %v4196, 7
        %v4198 = vsub.s32 0, %v4197
        %v4199 = vrot.slane %v4194, %v4198
        %v4233 = vunpack.c.l.b16 %v4162
        %v4234 = vunpack.c.l.b16 %v4163
        %v4235 = vunpack.c.l.b16 %v4164
        %v4236 = vunpack.c.l.b16 %v4165
        %v4237 = vunpack.c.l.b16 %v4166
        %v4238 = vunpack.c.l.b16 %v4167
        %v4239 = vunpack.c.l.b16 %v4168
        %v4240 = vunpack.c.l.b16 %v4169
        %v4241 = vunpack.c.l.b16 %v4170
        %v4242 = vunpack.c.l.b16 %v4171
        %v4243 = vunpack.c.l.b16 %v4172
        %v4244 = vunpack.c.l.b16 %v4173
        %v4245 = vunpack.c.l.b16 %v4174
        %v4246 = vunpack.c.l.b16 %v4175
        %v4247 = vunpack.c.l.b16 %v4176
        %v4248 = vunpack.c.l.b16 %v4177
        %v4249 = vunpack.c.l.b16 %v4178
        %v4250 = vunpack.c.l.b16 %v4179
        %v4251 = vunpack.c.l.b16 %v4180
        %v4252 = vunpack.c.l.b16 %v4181
        %v4253 = vunpack.c.l.b16 %v4182
        %v4254 = vunpack.c.l.b16 %v4183
        %v4255 = vunpack.c.l.b16 %v4184
        %v4256 = vunpack.c.l.b16 %v4185
        %v4257 = vunpack.c.l.b16 %v4186
        %v4258 = vunpack.c.l.b16 %v4187
        %v4259 = vunpack.c.l.b16 %v4188
        %v4260 = vunpack.c.l.b16 %v4189
        %v4261 = vunpack.c.l.b16 %v4190
        %v4262 = vunpack.c.l.b16 %v4191
        %v4263 = vunpack.c.l.b16 %v4192
        %v4264 = vunpack.c.l.b16 %v4193
        %v4265 = vpack.c.b16 %v4234, %v4233
        %v4266 = vpack.c.b16 %v4236, %v4235
        %v4267 = vpack.c.b16 %v4238, %v4237
        %v4268 = vpack.c.b16 %v4240, %v4239
        %v4269 = vpack.c.b16 %v4242, %v4241
        %v4270 = vpack.c.b16 %v4244, %v4243
        %v4271 = vpack.c.b16 %v4246, %v4245
        %v4272 = vpack.c.b16 %v4248, %v4247
        %v4273 = vpack.c.b16 %v4250, %v4249
        %v4274 = vpack.c.b16 %v4252, %v4251
        %v4275 = vpack.c.b16 %v4254, %v4253
        %v4276 = vpack.c.b16 %v4256, %v4255
        %v4277 = vpack.c.b16 %v4258, %v4257
        %v4278 = vpack.c.b16 %v4260, %v4259
        %v4279 = vpack.c.b16 %v4262, %v4261
        %v4280 = vpack.c.b16 %v4264, %v4263
        %4297 = vmatprep.subr.bf16.mxu0 0
        %4298 = vmatpush1.bf16.msra.mxu0 %v4265
        %4299 = vmatprep.subr.bf16.mxu0 0
        %4300 = vmatpush1.bf16.msra.mxu0 %v4266
        %4301 = vmatprep.subr.bf16.mxu0 0
        %4302 = vmatpush1.bf16.msra.mxu0 %v4267
        %4303 = vmatprep.subr.bf16.mxu0 0
        %4304 = vmatpush1.bf16.msra.mxu0 %v4268
        %4305 = vmatprep.subr.bf16.mxu0 0
        %4306 = vmatpush1.bf16.msra.mxu0 %v4269
        %4307 = vmatprep.subr.bf16.mxu0 0
        %4308 = vmatpush1.bf16.msra.mxu0 %v4270
        %4309 = vmatprep.subr.bf16.mxu0 0
        %4310 = vmatpush1.bf16.msra.mxu0 %v4271
        %4311 = vmatprep.subr.bf16.mxu0 0
        %4312 = vmatpush1.bf16.msra.mxu0 %v4272
        %4313 = vmatprep.subr.bf16.mxu0 0
        %4314 = vmatpush1.bf16.msra.mxu0 %v4273
        %4315 = vmatprep.subr.bf16.mxu0 0
        %4316 = vmatpush1.bf16.msra.mxu0 %v4274
        %4317 = vmatprep.subr.bf16.mxu0 0
        %4318 = vmatpush1.bf16.msra.mxu0 %v4275
        %4319 = vmatprep.subr.bf16.mxu0 0
        %4320 = vmatpush1.bf16.msra.mxu0 %v4276
        %4321 = vmatprep.subr.bf16.mxu0 0
        %4322 = vmatpush1.bf16.msra.mxu0 %v4277
        %4323 = vmatprep.subr.bf16.mxu0 0
        %4324 = vmatpush1.bf16.msra.mxu0 %v4278
        %4325 = vmatprep.subr.bf16.mxu0 0
        %4326 = vmatpush1.bf16.msra.mxu0 %v4279
        %4327 = vmatprep.subr.bf16.mxu0 0
        %4328 = vmatpush1.bf16.msra.mxu0 %v4280
        %4329 = vmatprep.mubr.bf16.mxu0 %v4147
        %4330 = vmatmul.mubr.bf16.gmra.mrb[0].mxu0 %v4146
        %v4331 = vpop.f32.mrb[0].mxu0
        %v4332 = vadd.f32 %v4199, %v4331
        %v4333 = vpop.f32.mrb[0].mxu0
        %v4334 = vpop.f32.mrb[0].mxu0
        %v4335 = vadd.f32 %v4199, %v4334
        %v4336 = vpop.f32.mrb[0].mxu0
        %4337 = vmatprep.mubr.bf16.mxu0 %v4149
        %4338 = vmatmul.mubr.bf16.gmra.mrb[0].mxu0 %v4148
        %v4339 = vpop.f32.mrb[0].mxu0
        %v4340 = vadd.f32 %v4199, %v4339
        %v4341 = vpop.f32.mrb[0].mxu0
        %v4342 = vpop.f32.mrb[0].mxu0
        %v4343 = vadd.f32 %v4199, %v4342
        %v4344 = vpop.f32.mrb[0].mxu0
        %4345 = vmatprep.mubr.bf16.mxu0 %v4151
        %4346 = vmatmul.mubr.bf16.gmra.mrb[0].mxu0 %v4150
        %v4347 = vpop.f32.mrb[0].mxu0
        %v4348 = vadd.f32 %v4199, %v4347
        %v4349 = vpop.f32.mrb[0].mxu0
        %v4350 = vpop.f32.mrb[0].mxu0
        %v4351 = vadd.f32 %v4199, %v4350
        %v4352 = vpop.f32.mrb[0].mxu0
        %4353 = vmatprep.mubr.bf16.mxu0 %v4153
        %4354 = vmatmul.mubr.bf16.gmra.mrb[0].mxu0 %v4152
        %v4355 = vpop.f32.mrb[0].mxu0
        %v4356 = vadd.f32 %v4199, %v4355
        %v4357 = vpop.f32.mrb[0].mxu0
        %v4358 = vpop.f32.mrb[0].mxu0
        %v4359 = vadd.f32 %v4199, %v4358
        %v4360 = vpop.f32.mrb[0].mxu0
        %4361 = vmatprep.mubr.bf16.mxu0 %v4155
        %4362 = vmatmul.mubr.bf16.gmra.mrb[0].mxu0 %v4154
        %v4363 = vpop.f32.mrb[0].mxu0
        %v4364 = vadd.f32 %v4199, %v4363
        %v4365 = vpop.f32.mrb[0].mxu0
        %v4366 = vpop.f32.mrb[0].mxu0
        %v4367 = vadd.f32 %v4199, %v4366
        %v4368 = vpop.f32.mrb[0].mxu0
        %4369 = vmatprep.mubr.bf16.mxu0 %v4157
        %4370 = vmatmul.mubr.bf16.gmra.mrb[0].mxu0 %v4156
        %v4371 = vpop.f32.mrb[0].mxu0
        %v4372 = vadd.f32 %v4199, %v4371
        %v4373 = vpop.f32.mrb[0].mxu0
        %v4374 = vpop.f32.mrb[0].mxu0
        %v4375 = vadd.f32 %v4199, %v4374
        %v4376 = vpop.f32.mrb[0].mxu0
        %4377 = vmatprep.mubr.bf16.mxu0 %v4159
        %4378 = vmatmul.mubr.bf16.gmra.mrb[0].mxu0 %v4158
        %v4379 = vpop.f32.mrb[0].mxu0
        %v4380 = vadd.f32 %v4199, %v4379
        %v4381 = vpop.f32.mrb[0].mxu0
        %v4382 = vpop.f32.mrb[0].mxu0
        %v4383 = vadd.f32 %v4199, %v4382
        %v4384 = vpop.f32.mrb[0].mxu0
        %4385 = vmatprep.mubr.bf16.mxu0 %v4161
        %4386 = vmatmul.mubr.bf16.gmra.mrb[0].mxu0 %v4160
        %v4387 = vpop.f32.mrb[0].mxu0
        %v4388 = vadd.f32 %v4199, %v4387
        %v4389 = vpop.f32.mrb[0].mxu0
        %v4390 = vpop.f32.mrb[0].mxu0
        %v4391 = vadd.f32 %v4199, %v4390
        %v4392 = vpop.f32.mrb[0].mxu0
        %4393 = vdwg.mxu0
        %v4394 = vmax.f32 %v4332, 0.0
        %v4395 = vmax.f32 %v4335, 0.0
        %v4396 = vmax.f32 %v4340, 0.0
        %v4397 = vmax.f32 %v4343, 0.0
        %v4398 = vmax.f32 %v4348, 0.0
        %v4399 = vmax.f32 %v4351, 0.0
        %v4400 = vmax.f32 %v4356, 0.0
        %v4401 = vmax.f32 %v4359, 0.0
        %v4402 = vmax.f32 %v4364, 0.0
        %v4403 = vmax.f32 %v4367, 0.0
        %v4404 = vmax.f32 %v4372, 0.0
        %v4405 = vmax.f32 %v4375, 0.0
        %v4406 = vmax.f32 %v4380, 0.0
        %v4407 = vmax.f32 %v4383, 0.0
        %v4408 = vmax.f32 %v4388, 0.0
        %v4409 = vmax.f32 %v4391, 0.0
        %v4410 = vpack.c.bf16 %v4395, %v4394
        %v4411 = vpack.c.bf16 %v4397, %v4396
        %v4412 = vpack.c.bf16 %v4399, %v4398
        %v4413 = vpack.c.bf16 %v4401, %v4400
        %v4414 = vpack.c.bf16 %v4403, %v4402
        %v4415 = vpack.c.bf16 %v4405, %v4404
        %v4416 = vpack.c.bf16 %v4407, %v4406
        %v4417 = vpack.c.bf16 %v4409, %v4408
        %v4418 = vld [vmem:[#allocation10] sm:$0xf]
        %v4419 = vld [vmem:[#allocation10 + $0x4] sm:$0xf]
        %v4420 = vld [vmem:[#allocation10 + $0x8] sm:$0xf]
        %v4421 = vld [vmem:[#allocation10 + $0xc] sm:$0xf]
        %v4422 = vld [vmem:[#allocation10 + $0x10] sm:$0xf]
        %v4423 = vld [vmem:[#allocation10 + $0x14] sm:$0xf]
        %v4424 = vld [vmem:[#allocation10 + $0x18] sm:$0xf]
        %v4425 = vld [vmem:[#allocation10 + $0x1c] sm:$0xf]
        %v4426 = vld [vmem:[#allocation10 + $0x20] sm:$0xf]
        %v4427 = vld [vmem:[#allocation10 + $0x24] sm:$0xf]
        %v4428 = vld [vmem:[#allocation10 + $0x28] sm:$0xf]
        %v4429 = vld [vmem:[#allocation10 + $0x2c] sm:$0xf]
        %v4430 = vld [vmem:[#allocation10 + $0x30] sm:$0xf]
        %v4431 = vld [vmem:[#allocation10 + $0x34] sm:$0xf]
        %v4432 = vld [vmem:[#allocation10 + $0x38] sm:$0xf]
        %v4433 = vld [vmem:[#allocation10 + $0x3c] sm:$0xf]
        %v4434 = vld [vmem:[%s8] sm:$0x1]
        %v4436 = vlaneseq
        %v4437 = vshrl.u32 %v4436, 7
        %v4438 = vsub.s32 0, %v4437
        %v4439 = vrot.slane %v4434, %v4438
        %v4457 = vunpack.c.l.b16 %v4418
        %v4458 = vunpack.c.l.b16 %v4419
        %v4459 = vunpack.c.l.b16 %v4420
        %v4460 = vunpack.c.l.b16 %v4421
        %v4461 = vunpack.c.l.b16 %v4422
        %v4462 = vunpack.c.l.b16 %v4423
        %v4463 = vunpack.c.l.b16 %v4424
        %v4464 = vunpack.c.l.b16 %v4425
        %v4465 = vunpack.c.l.b16 %v4426
        %v4466 = vunpack.c.l.b16 %v4427
        %v4467 = vunpack.c.l.b16 %v4428
        %v4468 = vunpack.c.l.b16 %v4429
        %v4469 = vunpack.c.l.b16 %v4430
        %v4470 = vunpack.c.l.b16 %v4431
        %v4471 = vunpack.c.l.b16 %v4432
        %v4472 = vunpack.c.l.b16 %v4433
        %v4473 = vpack.c.b16 %v4458, %v4457
        %v4474 = vpack.c.b16 %v4460, %v4459
        %v4475 = vpack.c.b16 %v4462, %v4461
        %v4476 = vpack.c.b16 %v4464, %v4463
        %v4477 = vpack.c.b16 %v4466, %v4465
        %v4478 = vpack.c.b16 %v4468, %v4467
        %v4479 = vpack.c.b16 %v4470, %v4469
        %v4480 = vpack.c.b16 %v4472, %v4471
        %4489 = vmatprep.subr.bf16.mxu0 0
        %4490 = vmatpush1.bf16.msra.mxu0 %v4473
        %4491 = vmatprep.subr.bf16.mxu0 0
        %4492 = vmatpush1.bf16.msra.mxu0 %v4474
        %4493 = vmatprep.subr.bf16.mxu0 0
        %4494 = vmatpush1.bf16.msra.mxu0 %v4475
        %4495 = vmatprep.subr.bf16.mxu0 0
        %4496 = vmatpush1.bf16.msra.mxu0 %v4476
        %4497 = vmatprep.subr.bf16.mxu0 0
        %4498 = vmatpush1.bf16.msra.mxu0 %v4477
        %4499 = vmatprep.subr.bf16.mxu0 0
        %4500 = vmatpush1.bf16.msra.mxu0 %v4478
        %4501 = vmatprep.subr.bf16.mxu0 0
        %4502 = vmatpush1.bf16.msra.mxu0 %v4479
        %4503 = vmatprep.subr.bf16.mxu0 0
        %4504 = vmatpush1.bf16.msra.mxu0 %v4480
        %4505 = vmatprep.subr.bf16.mxu0 0
        %4506 = vmatpush1.bf16.msra.mxu0 0
        %4507 = vmatprep.subr.bf16.mxu0 0
        %4508 = vmatpush1.bf16.msra.mxu0 0
        %4509 = vmatprep.subr.bf16.mxu0 0
        %4510 = vmatpush1.bf16.msra.mxu0 0
        %4511 = vmatprep.subr.bf16.mxu0 0
        %4512 = vmatpush1.bf16.msra.mxu0 0
        %4513 = vmatprep.subr.bf16.mxu0 0
        %4514 = vmatpush1.bf16.msra.mxu0 0
        %4515 = vmatprep.subr.bf16.mxu0 0
        %4516 = vmatpush1.bf16.msra.mxu0 0
        %4517 = vmatprep.subr.bf16.mxu0 0
        %4518 = vmatpush1.bf16.msra.mxu0 0
        %4519 = vmatprep.subr.bf16.mxu0 0
        %4520 = vmatpush1.bf16.msra.mxu0 0
        %4521 = vmatprep.mubr.bf16.mxu0 0
        %4522 = vmatmul.mubr.bf16.gmra.mrb[0].mxu0 %v4410
        %v4523 = vpop.f32.mrb[0].mxu0
        %v4524 = vadd.f32 %v4439, %v4523
        %v4525 = vpop.f32.mrb[0].mxu0
        %v4526 = vpop.f32.mrb[0].mxu0
        %v4527 = vadd.f32 %v4439, %v4526
        %v4528 = vpop.f32.mrb[0].mxu0
        %4529 = vmatprep.mubr.bf16.mxu0 0
        %4530 = vmatmul.mubr.bf16.gmra.mrb[0].mxu0 %v4411
        %v4531 = vpop.f32.mrb[0].mxu0
        %v4532 = vadd.f32 %v4439, %v4531
        %v4533 = vpop.f32.mrb[0].mxu0
        %v4534 = vpop.f32.mrb[0].mxu0
        %v4535 = vadd.f32 %v4439, %v4534
        %v4536 = vpop.f32.mrb[0].mxu0
        %4537 = vmatprep.mubr.bf16.mxu0 0
        %4538 = vmatmul.mubr.bf16.gmra.mrb[0].mxu0 %v4412
        %v4539 = vpop.f32.mrb[0].mxu0
        %v4540 = vadd.f32 %v4439, %v4539
        %v4541 = vpop.f32.mrb[0].mxu0
        %v4542 = vpop.f32.mrb[0].mxu0
        %v4543 = vadd.f32 %v4439, %v4542
        %v4544 = vpop.f32.mrb[0].mxu0
        %4545 = vmatprep.mubr.bf16.mxu0 0
        %4546 = vmatmul.mubr.bf16.gmra.mrb[0].mxu0 %v4413
        %v4547 = vpop.f32.mrb[0].mxu0
        %v4548 = vadd.f32 %v4439, %v4547
        %v4549 = vpop.f32.mrb[0].mxu0
        %v4550 = vpop.f32.mrb[0].mxu0
        %v4551 = vadd.f32 %v4439, %v4550
        %v4552 = vpop.f32.mrb[0].mxu0
        %4553 = vmatprep.mubr.bf16.mxu0 0
        %4554 = vmatmul.mubr.bf16.gmra.mrb[0].mxu0 %v4414
        %v4555 = vpop.f32.mrb[0].mxu0
        %v4556 = vadd.f32 %v4439, %v4555
        %v4557 = vpop.f32.mrb[0].mxu0
        %v4558 = vpop.f32.mrb[0].mxu0
        %v4559 = vadd.f32 %v4439, %v4558
        %v4560 = vpop.f32.mrb[0].mxu0
        %4561 = vmatprep.mubr.bf16.mxu0 0
        %4562 = vmatmul.mubr.bf16.gmra.mrb[0].mxu0 %v4415
        %v4563 = vpop.f32.mrb[0].mxu0
        %v4564 = vadd.f32 %v4439, %v4563
        %v4565 = vpop.f32.mrb[0].mxu0
        %v4566 = vpop.f32.mrb[0].mxu0
        %v4567 = vadd.f32 %v4439, %v4566
        %v4568 = vpop.f32.mrb[0].mxu0
        %4569 = vmatprep.mubr.bf16.mxu0 0
        %4570 = vmatmul.mubr.bf16.gmra.mrb[0].mxu0 %v4416
        %v4571 = vpop.f32.mrb[0].mxu0
        %v4572 = vadd.f32 %v4439, %v4571
        %v4573 = vpop.f32.mrb[0].mxu0
        %v4574 = vpop.f32.mrb[0].mxu0
        %v4575 = vadd.f32 %v4439, %v4574
        %v4576 = vpop.f32.mrb[0].mxu0
        %4577 = vmatprep.mubr.bf16.mxu0 0
        %4578 = vmatmul.mubr.bf16.gmra.mrb[0].mxu0 %v4417
        %v4579 = vpop.f32.mrb[0].mxu0
        %v4580 = vadd.f32 %v4439, %v4579
        %v4581 = vpop.f32.mrb[0].mxu0
        %v4582 = vpop.f32.mrb[0].mxu0
        %v4583 = vadd.f32 %v4439, %v4582
        %v4584 = vpop.f32.mrb[0].mxu0
        %4585 = vdwg.mxu0
        %v4586 = vmax.f32 %v4524, 0.0
        %v4587 = vmax.f32 %v4527, 0.0
        %v4588 = vmax.f32 %v4532, 0.0
        %v4589 = vmax.f32 %v4535, 0.0
        %v4590 = vmax.f32 %v4540, 0.0
        %v4591 = vmax.f32 %v4543, 0.0
        %v4592 = vmax.f32 %v4548, 0.0
        %v4593 = vmax.f32 %v4551, 0.0
        %v4594 = vmax.f32 %v4556, 0.0
        %v4595 = vmax.f32 %v4559, 0.0
        %v4596 = vmax.f32 %v4564, 0.0
        %v4597 = vmax.f32 %v4567, 0.0
        %v4598 = vmax.f32 %v4572, 0.0
        %v4599 = vmax.f32 %v4575, 0.0
        %v4600 = vmax.f32 %v4580, 0.0
        %v4601 = vmax.f32 %v4583, 0.0
        %v4602 = vpack.c.bf16 %v4587, %v4586
        %v4603 = vpack.c.bf16 %v4589, %v4588
        %v4604 = vpack.c.bf16 %v4591, %v4590
        %v4605 = vpack.c.bf16 %v4593, %v4592
        %v4606 = vpack.c.bf16 %v4595, %v4594
        %v4607 = vpack.c.bf16 %v4597, %v4596
        %v4608 = vpack.c.bf16 %v4599, %v4598
        %v4609 = vpack.c.bf16 %v4601, %v4600
        %v4610 = vld [vmem:[#allocation11] sm:$0xf]
        %v4611 = vld [vmem:[#allocation11 + $0x4] sm:$0xf]
        %v4612 = vld [vmem:[#allocation11 + $0x8] sm:$0xf]
        %v4613 = vld [vmem:[#allocation11 + $0xc] sm:$0xf]
        %v4614 = vld [vmem:[#allocation11 + $0x10] sm:$0xf]
        %v4615 = vld [vmem:[#allocation11 + $0x14] sm:$0xf]
        %v4616 = vld [vmem:[#allocation11 + $0x18] sm:$0xf]
        %v4617 = vld [vmem:[#allocation11 + $0x1c] sm:$0xf]
        %v4618 = vld [vmem:[#allocation11 + $0x20] sm:$0xf]
        %v4619 = vld [vmem:[#allocation11 + $0x24] sm:$0xf]
        %v4620 = vld [vmem:[#allocation11 + $0x28] sm:$0xf]
        %v4621 = vld [vmem:[#allocation11 + $0x2c] sm:$0xf]
        %v4622 = vld [vmem:[#allocation11 + $0x30] sm:$0xf]
        %v4623 = vld [vmem:[#allocation11 + $0x34] sm:$0xf]
        %v4624 = vld [vmem:[#allocation11 + $0x38] sm:$0xf]
        %v4625 = vld [vmem:[#allocation11 + $0x3c] sm:$0xf]
        %v4626 = vld [vmem:[%s10] sm:$0x1]
        %v4628 = vlaneseq
        %v4629 = vshrl.u32 %v4628, 7
        %v4630 = vsub.s32 0, %v4629
        %v4631 = vrot.slane %v4626, %v4630
        %v4649 = vunpack.c.l.b16 %v4610
        %v4650 = vunpack.c.l.b16 %v4611
        %v4651 = vunpack.c.l.b16 %v4612
        %v4652 = vunpack.c.l.b16 %v4613
        %v4653 = vunpack.c.l.b16 %v4614
        %v4654 = vunpack.c.l.b16 %v4615
        %v4655 = vunpack.c.l.b16 %v4616
        %v4656 = vunpack.c.l.b16 %v4617
        %v4657 = vunpack.c.l.b16 %v4618
        %v4658 = vunpack.c.l.b16 %v4619
        %v4659 = vunpack.c.l.b16 %v4620
        %v4660 = vunpack.c.l.b16 %v4621
        %v4661 = vunpack.c.l.b16 %v4622
        %v4662 = vunpack.c.l.b16 %v4623
        %v4663 = vunpack.c.l.b16 %v4624
        %v4664 = vunpack.c.l.b16 %v4625
        %v4665 = vpack.c.b16 %v4650, %v4649
        %v4666 = vpack.c.b16 %v4652, %v4651
        %v4667 = vpack.c.b16 %v4654, %v4653
        %v4668 = vpack.c.b16 %v4656, %v4655
        %v4669 = vpack.c.b16 %v4658, %v4657
        %v4670 = vpack.c.b16 %v4660, %v4659
        %v4671 = vpack.c.b16 %v4662, %v4661
        %v4672 = vpack.c.b16 %v4664, %v4663
        %4681 = vmatprep.subr.bf16.mxu0 0
        %4682 = vmatpush1.bf16.msra.mxu0 %v4665
        %4683 = vmatprep.subr.bf16.mxu0 0
        %4684 = vmatpush1.bf16.msra.mxu0 %v4666
        %4685 = vmatprep.subr.bf16.mxu0 0
        %4686 = vmatpush1.bf16.msra.mxu0 %v4667
        %4687 = vmatprep.subr.bf16.mxu0 0
        %4688 = vmatpush1.bf16.msra.mxu0 %v4668
        %4689 = vmatprep.subr.bf16.mxu0 0
        %4690 = vmatpush1.bf16.msra.mxu0 %v4669
        %4691 = vmatprep.subr.bf16.mxu0 0
        %4692 = vmatpush1.bf16.msra.mxu0 %v4670
        %4693 = vmatprep.subr.bf16.mxu0 0
        %4694 = vmatpush1.bf16.msra.mxu0 %v4671
        %4695 = vmatprep.subr.bf16.mxu0 0
        %4696 = vmatpush1.bf16.msra.mxu0 %v4672
        %4697 = vmatprep.subr.bf16.mxu0 0
        %4698 = vmatpush1.bf16.msra.mxu0 0
        %4699 = vmatprep.subr.bf16.mxu0 0
        %4700 = vmatpush1.bf16.msra.mxu0 0
        %4701 = vmatprep.subr.bf16.mxu0 0
        %4702 = vmatpush1.bf16.msra.mxu0 0
        %4703 = vmatprep.subr.bf16.mxu0 0
        %4704 = vmatpush1.bf16.msra.mxu0 0
        %4705 = vmatprep.subr.bf16.mxu0 0
        %4706 = vmatpush1.bf16.msra.mxu0 0
        %4707 = vmatprep.subr.bf16.mxu0 0
        %4708 = vmatpush1.bf16.msra.mxu0 0
        %4709 = vmatprep.subr.bf16.mxu0 0
        %4710 = vmatpush1.bf16.msra.mxu0 0
        %4711 = vmatprep.subr.bf16.mxu0 0
        %4712 = vmatpush1.bf16.msra.mxu0 0
        %4713 = vmatprep.mubr.bf16.mxu0 0
        %4714 = vmatmul.mubr.bf16.gmra.mrb[0].mxu0 %v4602
        %v4715 = vpop.f32.mrb[0].mxu0
        %v4716 = vadd.f32 %v4631, %v4715
        %v4717 = vpop.f32.mrb[0].mxu0
        %v4718 = vpop.f32.mrb[0].mxu0
        %v4719 = vadd.f32 %v4631, %v4718
        %v4720 = vpop.f32.mrb[0].mxu0
        %4721 = vmatprep.mubr.bf16.mxu0 0
        %4722 = vmatmul.mubr.bf16.gmra.mrb[0].mxu0 %v4603
        %v4723 = vpop.f32.mrb[0].mxu0
        %v4724 = vadd.f32 %v4631, %v4723
        %v4725 = vpop.f32.mrb[0].mxu0
        %v4726 = vpop.f32.mrb[0].mxu0
        %v4727 = vadd.f32 %v4631, %v4726
        %v4728 = vpop.f32.mrb[0].mxu0
        %4729 = vmatprep.mubr.bf16.mxu0 0
        %4730 = vmatmul.mubr.bf16.gmra.mrb[0].mxu0 %v4604
        %v4731 = vpop.f32.mrb[0].mxu0
        %v4732 = vadd.f32 %v4631, %v4731
        %v4733 = vpop.f32.mrb[0].mxu0
        %v4734 = vpop.f32.mrb[0].mxu0
        %v4735 = vadd.f32 %v4631, %v4734
        %v4736 = vpop.f32.mrb[0].mxu0
        %4737 = vmatprep.mubr.bf16.mxu0 0
        %4738 = vmatmul.mubr.bf16.gmra.mrb[0].mxu0 %v4605
        %v4739 = vpop.f32.mrb[0].mxu0
        %v4740 = vadd.f32 %v4631, %v4739
        %v4741 = vpop.f32.mrb[0].mxu0
        %v4742 = vpop.f32.mrb[0].mxu0
        %v4743 = vadd.f32 %v4631, %v4742
        %v4744 = vpop.f32.mrb[0].mxu0
        %4745 = vmatprep.mubr.bf16.mxu0 0
        %4746 = vmatmul.mubr.bf16.gmra.mrb[0].mxu0 %v4606
        %v4747 = vpop.f32.mrb[0].mxu0
        %v4748 = vadd.f32 %v4631, %v4747
        %v4749 = vpop.f32.mrb[0].mxu0
        %v4750 = vpop.f32.mrb[0].mxu0
        %v4751 = vadd.f32 %v4631, %v4750
        %v4752 = vpop.f32.mrb[0].mxu0
        %4753 = vmatprep.mubr.bf16.mxu0 0
        %4754 = vmatmul.mubr.bf16.gmra.mrb[0].mxu0 %v4607
        %v4755 = vpop.f32.mrb[0].mxu0
        %v4756 = vadd.f32 %v4631, %v4755
        %v4757 = vpop.f32.mrb[0].mxu0
        %v4758 = vpop.f32.mrb[0].mxu0
        %v4759 = vadd.f32 %v4631, %v4758
        %v4760 = vpop.f32.mrb[0].mxu0
        %4761 = vmatprep.mubr.bf16.mxu0 0
        %4762 = vmatmul.mubr.bf16.gmra.mrb[0].mxu0 %v4608
        %v4763 = vpop.f32.mrb[0].mxu0
        %v4764 = vadd.f32 %v4631, %v4763
        %v4765 = vpop.f32.mrb[0].mxu0
        %v4766 = vpop.f32.mrb[0].mxu0
        %v4767 = vadd.f32 %v4631, %v4766
        %v4768 = vpop.f32.mrb[0].mxu0
        %4769 = vmatprep.mubr.bf16.mxu0 0
        %4770 = vmatmul.mubr.bf16.gmra.mrb[0].mxu0 %v4609
        %v4771 = vpop.f32.mrb[0].mxu0
        %v4772 = vadd.f32 %v4631, %v4771
        %v4773 = vpop.f32.mrb[0].mxu0
        %v4774 = vpop.f32.mrb[0].mxu0
        %v4775 = vadd.f32 %v4631, %v4774
        %v4776 = vpop.f32.mrb[0].mxu0
        %4777 = vdwg.mxu0
        %v4778 = vmax.f32 %v4716, 0.0
        %v4779 = vmax.f32 %v4719, 0.0
        %v4780 = vmax.f32 %v4724, 0.0
        %v4781 = vmax.f32 %v4727, 0.0
        %v4782 = vmax.f32 %v4732, 0.0
        %v4783 = vmax.f32 %v4735, 0.0
        %v4784 = vmax.f32 %v4740, 0.0
        %v4785 = vmax.f32 %v4743, 0.0
        %v4786 = vmax.f32 %v4748, 0.0
        %v4787 = vmax.f32 %v4751, 0.0
        %v4788 = vmax.f32 %v4756, 0.0
        %v4789 = vmax.f32 %v4759, 0.0
        %v4790 = vmax.f32 %v4764, 0.0
        %v4791 = vmax.f32 %v4767, 0.0
        %v4792 = vmax.f32 %v4772, 0.0
        %v4793 = vmax.f32 %v4775, 0.0
        %v4794 = vpack.c.bf16 %v4779, %v4778
        %v4795 = vpack.c.bf16 %v4781, %v4780
        %v4796 = vpack.c.bf16 %v4783, %v4782
        %v4797 = vpack.c.bf16 %v4785, %v4784
        %v4798 = vpack.c.bf16 %v4787, %v4786
        %v4799 = vpack.c.bf16 %v4789, %v4788
        %v4800 = vpack.c.bf16 %v4791, %v4790
        %v4801 = vpack.c.bf16 %v4793, %v4792
        %v4802 = vld [vmem:[#allocation13] sm:$0xf]
        %v4803 = vld [vmem:[#allocation13 + $0x4] sm:$0xf]
        %v4804 = vld [vmem:[#allocation13 + $0x8] sm:$0xf]
        %v4805 = vld [vmem:[#allocation13 + $0xc] sm:$0xf]
        %v4806 = vld [vmem:[#allocation13 + $0x10] sm:$0xf]
        %v4807 = vld [vmem:[#allocation13 + $0x14] sm:$0xf]
        %v4808 = vld [vmem:[#allocation13 + $0x18] sm:$0xf]
        %v4809 = vld [vmem:[#allocation13 + $0x1c] sm:$0xf]
        %v4810 = vld [vmem:[#allocation13 + $0x20] sm:$0xf]
        %v4811 = vld [vmem:[#allocation13 + $0x24] sm:$0xf]
        %v4812 = vld [vmem:[#allocation13 + $0x28] sm:$0xf]
        %v4813 = vld [vmem:[#allocation13 + $0x2c] sm:$0xf]
        %v4814 = vld [vmem:[#allocation13 + $0x30] sm:$0xf]
        %v4815 = vld [vmem:[#allocation13 + $0x34] sm:$0xf]
        %v4816 = vld [vmem:[#allocation13 + $0x38] sm:$0xf]
        %v4817 = vld [vmem:[#allocation13 + $0x3c] sm:$0xf]
        %v4818 = vld [vmem:[%s12] sm:$0x1]
        %v4820 = vlaneseq
        %v4821 = vshrl.u32 %v4820, 7
        %v4822 = vsub.s32 0, %v4821
        %v4823 = vrot.slane %v4818, %v4822
        %v4841 = vunpack.c.l.b16 %v4802
        %v4842 = vunpack.c.l.b16 %v4803
        %v4843 = vunpack.c.l.b16 %v4804
        %v4844 = vunpack.c.l.b16 %v4805
        %v4845 = vunpack.c.l.b16 %v4806
        %v4846 = vunpack.c.l.b16 %v4807
        %v4847 = vunpack.c.l.b16 %v4808
        %v4848 = vunpack.c.l.b16 %v4809
        %v4849 = vunpack.c.l.b16 %v4810
        %v4850 = vunpack.c.l.b16 %v4811
        %v4851 = vunpack.c.l.b16 %v4812
        %v4852 = vunpack.c.l.b16 %v4813
        %v4853 = vunpack.c.l.b16 %v4814
        %v4854 = vunpack.c.l.b16 %v4815
        %v4855 = vunpack.c.l.b16 %v4816
        %v4856 = vunpack.c.l.b16 %v4817
        %v4857 = vpack.c.b16 %v4842, %v4841
        %v4858 = vpack.c.b16 %v4844, %v4843
        %v4859 = vpack.c.b16 %v4846, %v4845
        %v4860 = vpack.c.b16 %v4848, %v4847
        %v4861 = vpack.c.b16 %v4850, %v4849
        %v4862 = vpack.c.b16 %v4852, %v4851
        %v4863 = vpack.c.b16 %v4854, %v4853
        %v4864 = vpack.c.b16 %v4856, %v4855
        %4873 = vmatprep.subr.bf16.mxu0 0
        %4874 = vmatpush1.bf16.msra.mxu0 %v4857
        %4875 = vmatprep.subr.bf16.mxu0 0
        %4876 = vmatpush1.bf16.msra.mxu0 %v4858
        %4877 = vmatprep.subr.bf16.mxu0 0
        %4878 = vmatpush1.bf16.msra.mxu0 %v4859
        %4879 = vmatprep.subr.bf16.mxu0 0
        %4880 = vmatpush1.bf16.msra.mxu0 %v4860
        %4881 = vmatprep.subr.bf16.mxu0 0
        %4882 = vmatpush1.bf16.msra.mxu0 %v4861
        %4883 = vmatprep.subr.bf16.mxu0 0
        %4884 = vmatpush1.bf16.msra.mxu0 %v4862
        %4885 = vmatprep.subr.bf16.mxu0 0
        %4886 = vmatpush1.bf16.msra.mxu0 %v4863
        %4887 = vmatprep.subr.bf16.mxu0 0
        %4888 = vmatpush1.bf16.msra.mxu0 %v4864
        %4889 = vmatprep.subr.bf16.mxu0 0
        %4890 = vmatpush1.bf16.msra.mxu0 0
        %4891 = vmatprep.subr.bf16.mxu0 0
        %4892 = vmatpush1.bf16.msra.mxu0 0
        %4893 = vmatprep.subr.bf16.mxu0 0
        %4894 = vmatpush1.bf16.msra.mxu0 0
        %4895 = vmatprep.subr.bf16.mxu0 0
        %4896 = vmatpush1.bf16.msra.mxu0 0
        %4897 = vmatprep.subr.bf16.mxu0 0
        %4898 = vmatpush1.bf16.msra.mxu0 0
        %4899 = vmatprep.subr.bf16.mxu0 0
        %4900 = vmatpush1.bf16.msra.mxu0 0
        %4901 = vmatprep.subr.bf16.mxu0 0
        %4902 = vmatpush1.bf16.msra.mxu0 0
        %4903 = vmatprep.subr.bf16.mxu0 0
        %4904 = vmatpush1.bf16.msra.mxu0 0
        %4905 = vmatprep.mubr.bf16.mxu0 0
        %4906 = vmatmul.mubr.bf16.gmra.mrb[0].mxu0 %v4794
        %v4907 = vpop.f32.mrb[0].mxu0
        %v4908 = vadd.f32 %v4823, %v4907
        %v4909 = vpop.f32.mrb[0].mxu0
        %v4910 = vpop.f32.mrb[0].mxu0
        %v4911 = vadd.f32 %v4823, %v4910
        %v4912 = vpop.f32.mrb[0].mxu0
        %4913 = vmatprep.mubr.bf16.mxu0 0
        %4914 = vmatmul.mubr.bf16.gmra.mrb[0].mxu0 %v4795
        %v4915 = vpop.f32.mrb[0].mxu0
        %v4916 = vadd.f32 %v4823, %v4915
        %v4917 = vpop.f32.mrb[0].mxu0
        %v4918 = vpop.f32.mrb[0].mxu0
        %v4919 = vadd.f32 %v4823, %v4918
        %v4920 = vpop.f32.mrb[0].mxu0
        %4921 = vmatprep.mubr.bf16.mxu0 0
        %4922 = vmatmul.mubr.bf16.gmra.mrb[0].mxu0 %v4796
        %v4923 = vpop.f32.mrb[0].mxu0
        %v4924 = vadd.f32 %v4823, %v4923
        %v4925 = vpop.f32.mrb[0].mxu0
        %v4926 = vpop.f32.mrb[0].mxu0
        %v4927 = vadd.f32 %v4823, %v4926
        %v4928 = vpop.f32.mrb[0].mxu0
        %4929 = vmatprep.mubr.bf16.mxu0 0
        %4930 = vmatmul.mubr.bf16.gmra.mrb[0].mxu0 %v4797
        %v4931 = vpop.f32.mrb[0].mxu0
        %v4932 = vadd.f32 %v4823, %v4931
        %v4933 = vpop.f32.mrb[0].mxu0
        %v4934 = vpop.f32.mrb[0].mxu0
        %v4935 = vadd.f32 %v4823, %v4934
        %v4936 = vpop.f32.mrb[0].mxu0
        %4937 = vmatprep.mubr.bf16.mxu0 0
        %4938 = vmatmul.mubr.bf16.gmra.mrb[0].mxu0 %v4798
        %v4939 = vpop.f32.mrb[0].mxu0
        %v4940 = vadd.f32 %v4823, %v4939
        %v4941 = vpop.f32.mrb[0].mxu0
        %v4942 = vpop.f32.mrb[0].mxu0
        %v4943 = vadd.f32 %v4823, %v4942
        %v4944 = vpop.f32.mrb[0].mxu0
        %4945 = vmatprep.mubr.bf16.mxu0 0
        %4946 = vmatmul.mubr.bf16.gmra.mrb[0].mxu0 %v4799
        %v4947 = vpop.f32.mrb[0].mxu0
        %v4948 = vadd.f32 %v4823, %v4947
        %v4949 = vpop.f32.mrb[0].mxu0
        %v4950 = vpop.f32.mrb[0].mxu0
        %v4951 = vadd.f32 %v4823, %v4950
        %v4952 = vpop.f32.mrb[0].mxu0
        %4953 = vmatprep.mubr.bf16.mxu0 0
        %4954 = vmatmul.mubr.bf16.gmra.mrb[0].mxu0 %v4800
        %v4955 = vpop.f32.mrb[0].mxu0
        %v4956 = vadd.f32 %v4823, %v4955
        %v4957 = vpop.f32.mrb[0].mxu0
        %v4958 = vpop.f32.mrb[0].mxu0
        %v4959 = vadd.f32 %v4823, %v4958
        %v4960 = vpop.f32.mrb[0].mxu0
        %4961 = vmatprep.mubr.bf16.mxu0 0
        %4962 = vmatmul.mubr.bf16.gmra.mrb[0].mxu0 %v4801
        %v4963 = vpop.f32.mrb[0].mxu0
        %v4964 = vadd.f32 %v4823, %v4963
        %v4965 = vpop.f32.mrb[0].mxu0
        %v4966 = vpop.f32.mrb[0].mxu0
        %v4967 = vadd.f32 %v4823, %v4966
        %v4968 = vpop.f32.mrb[0].mxu0
        %4969 = vdwg.mxu0
        %v4970 = vpack.c.bf16 %v4911, %v4908
        %v4971 = vpack.c.bf16 %v4919, %v4916
        %v4972 = vpack.c.bf16 %v4927, %v4924
        %v4973 = vpack.c.bf16 %v4935, %v4932
        %v4974 = vpack.c.bf16 %v4943, %v4940
        %v4975 = vpack.c.bf16 %v4951, %v4948
        %v4976 = vpack.c.bf16 %v4959, %v4956
        %v4977 = vpack.c.bf16 %v4967, %v4964
        %v4986 = vunpack.c.l.b16 %v4970
        %v4987 = vunpack.c.h.b16 %v4970
        %v4988 = vunpack.c.l.b16 %v4971
        %v4989 = vunpack.c.h.b16 %v4971
        %v4990 = vunpack.c.l.b16 %v4972
        %v4991 = vunpack.c.h.b16 %v4972
        %v4992 = vunpack.c.l.b16 %v4973
        %v4993 = vunpack.c.h.b16 %v4973
        %v4994 = vunpack.c.l.b16 %v4974
        %v4995 = vunpack.c.h.b16 %v4974
        %v4996 = vunpack.c.l.b16 %v4975
        %v4997 = vunpack.c.h.b16 %v4975
        %v4998 = vunpack.c.l.b16 %v4976
        %v4999 = vunpack.c.h.b16 %v4976
        %v5000 = vunpack.c.l.b16 %v4977
        %v5001 = vunpack.c.h.b16 %v4977
        %v5002 = vpack.c.b16 %v4986, %v4986
        %v5003 = vpack.c.b16 %v4987, %v4987
        %v5004 = vpack.c.b16 %v4988, %v4988
        %v5005 = vpack.c.b16 %v4989, %v4989
        %v5006 = vpack.c.b16 %v4990, %v4990
        %v5007 = vpack.c.b16 %v4991, %v4991
        %v5008 = vpack.c.b16 %v4992, %v4992
        %v5009 = vpack.c.b16 %v4993, %v4993
        %v5010 = vpack.c.b16 %v4994, %v4994
        %v5011 = vpack.c.b16 %v4995, %v4995
        %v5012 = vpack.c.b16 %v4996, %v4996
        %v5013 = vpack.c.b16 %v4997, %v4997
        %v5014 = vpack.c.b16 %v4998, %v4998
        %v5015 = vpack.c.b16 %v4999, %v4999
        %v5016 = vpack.c.b16 %v5000, %v5000
        %v5017 = vpack.c.b16 %v5001, %v5001
        %5034 = vst [vmem:[%s546] sm:$0xf] %v5002
        %5035 = vst [vmem:[%s546 + $0x4] sm:$0xf] %v5003
        %5036 = vst [vmem:[%s546 + $0x8] sm:$0xf] %v5004
        %5037 = vst [vmem:[%s546 + $0xc] sm:$0xf] %v5005
        %5038 = vst [vmem:[%s546 + $0x10] sm:$0xf] %v5006
        %5039 = vst [vmem:[%s546 + $0x14] sm:$0xf] %v5007
        %5040 = vst [vmem:[%s546 + $0x18] sm:$0xf] %v5008
        %5041 = vst [vmem:[%s546 + $0x1c] sm:$0xf] %v5009
        %5042 = vst [vmem:[%s546 + $0x20] sm:$0xf] %v5010
        %5043 = vst [vmem:[%s546 + $0x24] sm:$0xf] %v5011
        %5044 = vst [vmem:[%s546 + $0x28] sm:$0xf] %v5012
        %5045 = vst [vmem:[%s546 + $0x2c] sm:$0xf] %v5013
        %5046 = vst [vmem:[%s546 + $0x30] sm:$0xf] %v5014
        %5047 = vst [vmem:[%s546 + $0x34] sm:$0xf] %v5015
        %5048 = vst [vmem:[%s546 + $0x38] sm:$0xf] %v5016
        %5049 = vst [vmem:[%s546 + $0x3c] sm:$0xf] %v5017
        %s5050 = sand.u32 %s319, 1
        %s5051 = scalar_lea.sflag [#allocation4], %s5050
        %s5052 = sand.u32 %s319, 1
        %s5053 = smul.addr %s5052, 64
        %s5054 = scalar_lea.vmem [#allocation14], %s5053
        // Predicated region
        $region101: #{tpu_custom_call.1} parent=71 // pred_check
          %p5055 = pneg %p329
        $region102: #{tpu_custom_call.1} parent=71 // pred_check_branch
          %5057 = sbr.rel (%p5055) target = $region104
        $region103: #{tpu_custom_call.1} parent=71 // pred_region
          %s5058 = smul.u32 16, %s33
          %s5060 = ssub.s32 1024, 1024
          %5061 = vsyncadd %s5051, %s5060
          %s5062 = smul.addr %s5058, 64
          %s5063 = scalar_lea.hbm %s13, %s5062
          %s5064 = sshll.u32 %s5054, 4
          %s5065 = int_to_ptr.vmem [resolvable:$true] %s5064
          %5070 = dma.vmem_to_hbm [thread:$0]  %s5065, 1024, %s5063, %s5051, 64, 64, 4
        $region104: #{tpu_custom_call.1} parent=71 // pred_fallthru
          _
      $region72: #{tpu_custom_call.1} parent=5 // pred_fallthru
        _
      %p5071 = scmp.le.s32.totalorder 2, %s28
      // Predicated region
      $region105: #{tpu_custom_call.1} parent=5 // pred_check
        %p5072 = pneg %p5071
      $region106: #{tpu_custom_call.1} parent=5 // pred_check_branch
        %5074 = sbr.rel (%p5072) target = $region108
      $region107: #{tpu_custom_call.1} parent=5 // pred_region
        %s5075 = ssub.s32 %s28, 2
        // Predicated region
        $region109: #{tpu_custom_call.1} parent=107 // pred_check
          %p5076 = pneg %p335
        $region110: #{tpu_custom_call.1} parent=107 // pred_check_branch
          %5078 = sbr.rel (%p5076) target = $region112
        $region111: #{tpu_custom_call.1} parent=107 // pred_region
          %s5079 = sand.u32 %s320, 1
          %s5080 = scalar_lea.sflag [#allocation4], %s5079
          %s5081 = sand.u32 %s320, 1
          %s5082 = smul.addr %s5081, 64
          %s5083 = scalar_lea.vmem [#allocation14], %s5082
          %5084 = dma.done %s5080, 1024
        $region112: #{tpu_custom_call.1} parent=107 // pred_fallthru
          _
      $region108: #{tpu_custom_call.1} parent=5 // pred_fallthru
        _
    $region6: #{tpu_custom_call.1} parent=1 // loop_footer
      %s32 = sadd.s32 1, %s28
    $region7: #{tpu_custom_call.1} parent=1 // loop_footer_branch
      %27 = sbr.rel target = $region3
    $region8: #{tpu_custom_call.1} parent=1 // loop_exit
      _
    %5085 = vsyncpa [#allocation3], 1
    %s5086 = scalar_lea.sflag [#allocation3], 1
    %5087 = vsyncpa %s5086, 1
    %5088 = vsyncpa [#allocation6], 1
    %5089 = vsyncpa [#allocation9], 1
    %5090 = vsyncpa [#allocation12], 1
    %5091 = vsyncpa [#allocation4], 1
    %s5092 = scalar_lea.sflag [#allocation4], 1
    %5093 = vsyncpa %s5092, 1

</llo_original>
